<compile_context>
chip_gen: v6e
topology: v6e:2x2x1
jax: 0.10.0
libtpu: 0.0.40
codegen_flags: <defaults>
</compile_context>

<pallas_src>
import jax
import jax.numpy as jnp
from jax import lax
from jax.experimental import pallas as pl
from jax.experimental.pallas import tpu as pltpu

_DMA_CHUNK = 8  # max in-flight embedding-row DMAs


def gru_encoder_kernel(tokens_smem,   # (S,)    int32, SMEM
                       emb_hbm,       # (V, H)  HBM (pl.ANY) - only S rows are ever DMA'd
                       h0_ref,        # (1, H)  f32 VMEM
                       wih_t_ref,     # (H, 3H) VMEM (f32 or bf16) - input projection
                       whh_t_ref,     # (H, 3H) f32 VMEM - recurrent weights (stay f32)
                       b_ih_ref,      # (1, 3H) f32
                       b_hh_ref,      # (1, 3H) f32
                       out_ref,       # (S, H)  f32 - written once as a dense slab
                       x_slab,        # (S, H)  VMEM scratch (embedding dtype)
                       gi_slab,       # (S, 3H) f32 VMEM scratch (batched input proj)
                       dma_sems):     # (_DMA_CHUNK,) DMA semaphores
    S, H = out_ref.shape

    # ---- (1) DMA-level embedding gather: one (1, H) row per token, HBM -> VMEM. ----
    # Issued in chunks so at most _DMA_CHUNK copies are in flight.
    def row_copy(i, slot):
        return pltpu.make_async_copy(
            emb_hbm.at[pl.ds(tokens_smem[i], 1), :],   # dynamic row from SMEM token id
            x_slab.at[pl.ds(i, 1), :],
            dma_sems.at[slot])

    for c0 in range(0, S, _DMA_CHUNK):
        c1 = min(S, c0 + _DMA_CHUNK)
        for i in range(c0, c1):
            row_copy(i, i - c0).start()
        for i in range(c0, c1):
            row_copy(i, i - c0).wait()

    # ---- (2) Batched input projection, hoisted off the recurrence. ----
    # (S, H) @ (H, 3H) in one MXU matmul, f32 accumulation; stored in a VMEM slab so the
    # serial loop only reads one (1, 3H) row per step.
    x = x_slab[...].astype(wih_t_ref.dtype)
    gi_slab[...] = (
        jnp.dot(x, wih_t_ref[...], preferred_element_type=jnp.float32)
        + b_ih_ref[...])

    # ---- (3) Sequential GRU recurrence: only gh = h @ W_hh^T on the serial path. ----
    def step(i, h):
        gh = (jnp.dot(h, whh_t_ref[...], preferred_element_type=jnp.float32)
              + b_hh_ref[...])
        gi = gi_slab[pl.ds(i, 1), :]
        # PyTorch GRU cell, gate order [r | z | n]:
        #   r = sigmoid(gi_r + gh_r); z = sigmoid(gi_z + gh_z)
        #   n = tanh(gi_n + r * gh_n); h' = (1 - z) * n + z * h
        r = jax.nn.sigmoid(gi[:, 0:H] + gh[:, 0:H])
        z = jax.nn.sigmoid(gi[:, H:2 * H] + gh[:, H:2 * H])
        n = jnp.tanh(gi[:, 2 * H:3 * H] + r * gh[:, 2 * H:3 * H])
        h_new = (1.0 - z) * n + z * h
        out_ref[pl.ds(i, 1), :] = h_new.astype(out_ref.dtype)
        return h_new

    lax.fori_loop(0, S, step, h0_ref[...].astype(jnp.float32), unroll=True)


def prepare_params(params, *, input_dtype=None):
    """One-time layout prep (done at init, NOT per forward call).

    input_dtype: optional dtype (e.g. jnp.bfloat16 on v6e/v7x) for the embedding table
    and W_ih^T (input projection only). The recurrent weight W_hh, biases and the carried
    hidden state always stay f32. Pass None to keep the stored embedding dtype untouched
    (no O(V*H) cast).
    """
    H = params["weight_hh"].shape[1]
    emb = jnp.asarray(params["embedding"])
    wih_t = jnp.asarray(params["weight_ih"]).T          # (H, 3H)
    if input_dtype is not None:
        emb = emb.astype(input_dtype)
        wih_t = wih_t.astype(input_dtype)
    return {
        "embedding": emb,                                            # (V, H)
        "wih_t": wih_t,                                              # (H, 3H)
        "whh_t": jnp.asarray(params["weight_hh"]).astype(jnp.float32).T,   # (H, 3H) f32
        "b_ih": jnp.asarray(params["bias_ih"]).astype(jnp.float32).reshape(1, 3 * H),
        "b_hh": jnp.asarray(params["bias_hh"]).astype(jnp.float32).reshape(1, 3 * H),
    }


def encoder_forward_seq(tokens, hidden, prep):
    """Run the encoder over a token sequence in one fused pallas_call.

    tokens: (S,) int32 (static length); hidden: (1, 1, H)
    Returns (outputs (S, 1, H) f32, final hidden (1, 1, H) f32).
    """
    emb = prep["embedding"]
    V, H = emb.shape
    tokens = jnp.asarray(tokens, dtype=jnp.int32).reshape(-1)
    S = int(tokens.shape[0])          # NOTE: requires a statically-shaped token array
    h0 = jnp.reshape(hidden, (1, H)).astype(jnp.float32)

    outputs = pl.pallas_call(
        gru_encoder_kernel,
        out_shape=jax.ShapeDtypeStruct((S, H), jnp.float32),
        in_specs=[
            pl.BlockSpec(memory_space=pltpu.MemorySpace.SMEM),   # token ids
            pl.BlockSpec(memory_space=pl.ANY),                   # embedding table (HBM)
            pl.BlockSpec(memory_space=pltpu.MemorySpace.VMEM),   # h0
            pl.BlockSpec(memory_space=pltpu.MemorySpace.VMEM),   # W_ih^T
            pl.BlockSpec(memory_space=pltpu.MemorySpace.VMEM),   # W_hh^T
            pl.BlockSpec(memory_space=pltpu.MemorySpace.VMEM),   # b_ih
            pl.BlockSpec(memory_space=pltpu.MemorySpace.VMEM),   # b_hh
        ],
        out_specs=pl.BlockSpec(memory_space=pltpu.MemorySpace.VMEM),
        scratch_shapes=[
            pltpu.VMEM((S, H), emb.dtype),          # gathered embedding rows
            pltpu.VMEM((S, 3 * H), jnp.float32),    # batched input projection
            pltpu.SemaphoreType.DMA((_DMA_CHUNK,)),
        ],
    )(tokens, emb, h0, prep["wih_t"], prep["whh_t"], prep["b_ih"], prep["b_hh"])

    # GRU output at each step IS the hidden state; final hidden = last output row.
    return outputs.reshape(S, 1, H), outputs[-1].reshape(1, 1, H)


def encoder_forward(token, hidden, prep):
    """Single-step forward matching Encoder.forward(input, hidden) -> (output, hidden)."""
    out_seq, h_new = encoder_forward_seq(jnp.reshape(token, (1,)), hidden, prep)
    return out_seq.reshape(1, 1, -1), h_new


def encoder_forward_seq_ref(tokens, hidden, prep):
    """Pure-JAX reference mirroring nn.Embedding + nn.GRU semantics (f32 math)."""
    emb = prep["embedding"].astype(jnp.float32)
    wih_t = prep["wih_t"].astype(jnp.float32)
    whh_t = prep["whh_t"].astype(jnp.float32)
    b_ih, b_hh = prep["b_ih"], prep["b_hh"]
    H = emb.shape[1]
    tokens = jnp.asarray(tokens, jnp.int32).reshape(-1)
    h = hidden.reshape(1, H).astype(jnp.float32)
    outs = []
    for t in range(int(tokens.shape[0])):
        x = emb[tokens[t]].reshape(1, H)
        gi = x @ wih_t + b_ih
        gh = h @ whh_t + b_hh
        r = jax.nn.sigmoid(gi[:, :H] + gh[:, :H])
        z = jax.nn.sigmoid(gi[:, H:2 * H] + gh[:, H:2 * H])
        n = jnp.tanh(gi[:, 2 * H:] + r * gh[:, 2 * H:])
        h = (1.0 - z) * n + z * h
        outs.append(h)
    return jnp.stack(outs, axis=0), h.reshape(1, 1, H)


def init_params(key, input_size, hidden_size):
    """Deterministic synthetic init matching nn.Embedding / nn.GRU parameter shapes."""
    k_emb, k_wih, k_whh, k_bih, k_bhh = jax.random.split(key, 5)
    bound = 1.0 / jnp.sqrt(hidden_size)
    return {
        # nn.Embedding(input_size, hidden_size): N(0, 1)
        "embedding": jax.random.normal(k_emb, (input_size, hidden_size), jnp.float32),
        # nn.GRU(hidden_size, hidden_size): U(-1/sqrt(H), 1/sqrt(H))
        "weight_ih": jax.random.uniform(k_wih, (3 * hidden_size, hidden_size),
                                        jnp.float32, -bound, bound),
        "weight_hh": jax.random.uniform(k_whh, (3 * hidden_size, hidden_size),
                                        jnp.float32, -bound, bound),
        "bias_ih": jax.random.uniform(k_bih, (3 * hidden_size,), jnp.float32, -bound, bound),
        "bias_hh": jax.random.uniform(k_bhh, (3 * hidden_size,), jnp.float32, -bound, bound),
    }


if __name__ == "__main__":
    input_size = 2       # len(word_to_index) = {'SOS', 'EOS'}
    hidden_size = 256    # matches the module's hidden_size
    seq_len = 6

    key = jax.random.PRNGKey(0)
    params = init_params(key, input_size, hidden_size)

    tokens = jnp.array([0, 1, 0, 0, 1, 1], dtype=jnp.int32)        # SOS/EOS token ids
    hidden0 = jnp.zeros((1, 1, hidden_size), dtype=jnp.float32)    # initHidden()

    # --- fused sequence encoder, f32 weights ---
    prep = prepare_params(params)                                  # one-time layout prep
    out, h_new = encoder_forward_seq(tokens, hidden0, prep)
    jax.block_until_ready((out, h_new))
    out_ref, h_ref = encoder_forward_seq_ref(tokens, hidden0, prep)
    assert out.shape == (seq_len, 1, hidden_size) and h_new.shape == (1, 1, hidden_size)
    assert jnp.allclose(out, out_ref, atol=1e-4, rtol=1e-4)
    assert jnp.allclose(h_new, h_ref, atol=1e-4, rtol=1e-4)

    # --- single-step forward (same call signature as Encoder.forward) ---
    out1, h1 = encoder_forward(jnp.array(1, dtype=jnp.int32), hidden0, prep)
    jax.block_until_ready((out1, h1))
    out1_ref, h1_ref = encoder_forward_seq_ref(jnp.array([1], jnp.int32), hidden0, prep)
    assert out1.shape == (1, 1, hidden_size) and h1.shape == (1, 1, hidden_size)
    assert jnp.allclose(out1, out1_ref.reshape(1, 1, hidden_size), atol=1e-4, rtol=1e-4)
    assert jnp.allclose(h1, h1_ref, atol=1e-4, rtol=1e-4)

    # --- bf16 embedding + W_ih (input projection only); W_hh / hidden stay f32 ---
    prep_bf16 = prepare_params(params, input_dtype=jnp.bfloat16)
    out_bf, h_bf = encoder_forward_seq(tokens, hidden0, prep_bf16)
    jax.block_until_ready((out_bf, h_bf))
    out_bf_ref, h_bf_ref = encoder_forward_seq_ref(tokens, hidden0, prep_bf16)
    assert jnp.allclose(out_bf, out_bf_ref, atol=1e-3, rtol=1e-3)
    assert jnp.allclose(h_bf, h_bf_ref, atol=1e-3, rtol=1e-3)

    print("KERNEL_OK")
</pallas_src>

<mosaic_0001>
module attributes {stable_mosaic.version = 11 : i64} {
  func.func @gru_encoder_kernel(%arg0: memref<6xi32, #tpu.memory_space<smem>>, %arg1: memref<2x256xf32, #tpu.memory_space<any>>, %arg2: memref<1x256xf32, #tpu.memory_space<vmem>>, %arg3: memref<256x768xf32, #tpu.memory_space<vmem>>, %arg4: memref<256x768xf32, #tpu.memory_space<vmem>>, %arg5: memref<1x768xf32, #tpu.memory_space<vmem>>, %arg6: memref<1x768xf32, #tpu.memory_space<vmem>>, %arg7: memref<6x256xf32, #tpu.memory_space<vmem>>, %arg8: memref<6x256xf32, #tpu.memory_space<vmem>>, %arg9: memref<6x768xf32, #tpu.memory_space<vmem>>, %arg10: memref<8x!tpu.dma_semaphore, #tpu.memory_space<semaphore_mem>>) attributes {dimension_semantics = [], scalar_prefetch = 0 : i64, scratch_operands = 3 : i64, tpu.core_type = #tpu.core_type<tc>} {
    %c0 = arith.constant 0 : index
    %0 = memref.load %arg0[%c0] : memref<6xi32, #tpu.memory_space<smem>>
    %c0_i32 = arith.constant 0 : i32
    %c0_i32_0 = arith.constant 0 : i32
    %1 = tpu.memref_slice %arg1[%0, %c0_i32_0] : memref<2x256xf32, #tpu.memory_space<any>> -> memref<1x256xf32, #tpu.memory_space<any>>
    %c0_i32_1 = arith.constant 0 : i32
    %c0_i32_2 = arith.constant 0 : i32
    %2 = tpu.memref_slice %arg8[%c0_i32_1, %c0_i32_2] : memref<6x256xf32, #tpu.memory_space<vmem>> -> memref<1x256xf32, #tpu.memory_space<vmem>>
    %3 = tpu.memref_slice %arg10[%c0_i32] : memref<8x!tpu.dma_semaphore, #tpu.memory_space<semaphore_mem>> -> memref<1x!tpu.dma_semaphore, #tpu.memory_space<semaphore_mem>>
    %4 = tpu.memref_squeeze %3 : memref<1x!tpu.dma_semaphore, #tpu.memory_space<semaphore_mem>> -> memref<!tpu.dma_semaphore, #tpu.memory_space<semaphore_mem>>
    tpu.enqueue_dma source(%1 : memref<1x256xf32, #tpu.memory_space<any>>) target(%2 : memref<1x256xf32, #tpu.memory_space<vmem>>) target_semaphore(%4 : memref<!tpu.dma_semaphore, #tpu.memory_space<semaphore_mem>>)
    %c1 = arith.constant 1 : index
    %5 = memref.load %arg0[%c1] : memref<6xi32, #tpu.memory_space<smem>>
    %c1_i32 = arith.constant 1 : i32
    %c0_i32_3 = arith.constant 0 : i32
    %6 = tpu.memref_slice %arg1[%5, %c0_i32_3] : memref<2x256xf32, #tpu.memory_space<any>> -> memref<1x256xf32, #tpu.memory_space<any>>
    %c1_i32_4 = arith.constant 1 : i32
    %c0_i32_5 = arith.constant 0 : i32
    %7 = tpu.memref_slice %arg8[%c1_i32_4, %c0_i32_5] : memref<6x256xf32, #tpu.memory_space<vmem>> -> memref<1x256xf32, #tpu.memory_space<vmem>>
    %8 = tpu.memref_slice %arg10[%c1_i32] : memref<8x!tpu.dma_semaphore, #tpu.memory_space<semaphore_mem>> -> memref<1x!tpu.dma_semaphore, #tpu.memory_space<semaphore_mem>>
    %9 = tpu.memref_squeeze %8 : memref<1x!tpu.dma_semaphore, #tpu.memory_space<semaphore_mem>> -> memref<!tpu.dma_semaphore, #tpu.memory_space<semaphore_mem>>
    tpu.enqueue_dma source(%6 : memref<1x256xf32, #tpu.memory_space<any>>) target(%7 : memref<1x256xf32, #tpu.memory_space<vmem>>) target_semaphore(%9 : memref<!tpu.dma_semaphore, #tpu.memory_space<semaphore_mem>>)
    %c2 = arith.constant 2 : index
    %10 = memref.load %arg0[%c2] : memref<6xi32, #tpu.memory_space<smem>>
    %c2_i32 = arith.constant 2 : i32
    %c0_i32_6 = arith.constant 0 : i32
    %11 = tpu.memref_slice %arg1[%10, %c0_i32_6] : memref<2x256xf32, #tpu.memory_space<any>> -> memref<1x256xf32, #tpu.memory_space<any>>
    %c2_i32_7 = arith.constant 2 : i32
    %c0_i32_8 = arith.constant 0 : i32
    %12 = tpu.memref_slice %arg8[%c2_i32_7, %c0_i32_8] : memref<6x256xf32, #tpu.memory_space<vmem>> -> memref<1x256xf32, #tpu.memory_space<vmem>>
    %13 = tpu.memref_slice %arg10[%c2_i32] : memref<8x!tpu.dma_semaphore, #tpu.memory_space<semaphore_mem>> -> memref<1x!tpu.dma_semaphore, #tpu.memory_space<semaphore_mem>>
    %14 = tpu.memref_squeeze %13 : memref<1x!tpu.dma_semaphore, #tpu.memory_space<semaphore_mem>> -> memref<!tpu.dma_semaphore, #tpu.memory_space<semaphore_mem>>
    tpu.enqueue_dma source(%11 : memref<1x256xf32, #tpu.memory_space<any>>) target(%12 : memref<1x256xf32, #tpu.memory_space<vmem>>) target_semaphore(%14 : memref<!tpu.dma_semaphore, #tpu.memory_space<semaphore_mem>>)
    %c3 = arith.constant 3 : index
    %15 = memref.load %arg0[%c3] : memref<6xi32, #tpu.memory_space<smem>>
    %c3_i32 = arith.constant 3 : i32
    %c0_i32_9 = arith.constant 0 : i32
    %16 = tpu.memref_slice %arg1[%15, %c0_i32_9] : memref<2x256xf32, #tpu.memory_space<any>> -> memref<1x256xf32, #tpu.memory_space<any>>
    %c3_i32_10 = arith.constant 3 : i32
    %c0_i32_11 = arith.constant 0 : i32
    %17 = tpu.memref_slice %arg8[%c3_i32_10, %c0_i32_11] : memref<6x256xf32, #tpu.memory_space<vmem>> -> memref<1x256xf32, #tpu.memory_space<vmem>>
    %18 = tpu.memref_slice %arg10[%c3_i32] : memref<8x!tpu.dma_semaphore, #tpu.memory_space<semaphore_mem>> -> memref<1x!tpu.dma_semaphore, #tpu.memory_space<semaphore_mem>>
    %19 = tpu.memref_squeeze %18 : memref<1x!tpu.dma_semaphore, #tpu.memory_space<semaphore_mem>> -> memref<!tpu.dma_semaphore, #tpu.memory_space<semaphore_mem>>
    tpu.enqueue_dma source(%16 : memref<1x256xf32, #tpu.memory_space<any>>) target(%17 : memref<1x256xf32, #tpu.memory_space<vmem>>) target_semaphore(%19 : memref<!tpu.dma_semaphore, #tpu.memory_space<semaphore_mem>>)
    %c4 = arith.constant 4 : index
    %20 = memref.load %arg0[%c4] : memref<6xi32, #tpu.memory_space<smem>>
    %c4_i32 = arith.constant 4 : i32
    %c0_i32_12 = arith.constant 0 : i32
    %21 = tpu.memref_slice %arg1[%20, %c0_i32_12] : memref<2x256xf32, #tpu.memory_space<any>> -> memref<1x256xf32, #tpu.memory_space<any>>
    %c4_i32_13 = arith.constant 4 : i32
    %c0_i32_14 = arith.constant 0 : i32
    %22 = tpu.memref_slice %arg8[%c4_i32_13, %c0_i32_14] : memref<6x256xf32, #tpu.memory_space<vmem>> -> memref<1x256xf32, #tpu.memory_space<vmem>>
    %23 = tpu.memref_slice %arg10[%c4_i32] : memref<8x!tpu.dma_semaphore, #tpu.memory_space<semaphore_mem>> -> memref<1x!tpu.dma_semaphore, #tpu.memory_space<semaphore_mem>>
    %24 = tpu.memref_squeeze %23 : memref<1x!tpu.dma_semaphore, #tpu.memory_space<semaphore_mem>> -> memref<!tpu.dma_semaphore, #tpu.memory_space<semaphore_mem>>
    tpu.enqueue_dma source(%21 : memref<1x256xf32, #tpu.memory_space<any>>) target(%22 : memref<1x256xf32, #tpu.memory_space<vmem>>) target_semaphore(%24 : memref<!tpu.dma_semaphore, #tpu.memory_space<semaphore_mem>>)
    %c5 = arith.constant 5 : index
    %25 = memref.load %arg0[%c5] : memref<6xi32, #tpu.memory_space<smem>>
    %c5_i32 = arith.constant 5 : i32
    %c0_i32_15 = arith.constant 0 : i32
    %26 = tpu.memref_slice %arg1[%25, %c0_i32_15] : memref<2x256xf32, #tpu.memory_space<any>> -> memref<1x256xf32, #tpu.memory_space<any>>
    %c5_i32_16 = arith.constant 5 : i32
    %c0_i32_17 = arith.constant 0 : i32
    %27 = tpu.memref_slice %arg8[%c5_i32_16, %c0_i32_17] : memref<6x256xf32, #tpu.memory_space<vmem>> -> memref<1x256xf32, #tpu.memory_space<vmem>>
    %28 = tpu.memref_slice %arg10[%c5_i32] : memref<8x!tpu.dma_semaphore, #tpu.memory_space<semaphore_mem>> -> memref<1x!tpu.dma_semaphore, #tpu.memory_space<semaphore_mem>>
    %29 = tpu.memref_squeeze %28 : memref<1x!tpu.dma_semaphore, #tpu.memory_space<semaphore_mem>> -> memref<!tpu.dma_semaphore, #tpu.memory_space<semaphore_mem>>
    tpu.enqueue_dma source(%26 : memref<1x256xf32, #tpu.memory_space<any>>) target(%27 : memref<1x256xf32, #tpu.memory_space<vmem>>) target_semaphore(%29 : memref<!tpu.dma_semaphore, #tpu.memory_space<semaphore_mem>>)
    %c0_18 = arith.constant 0 : index
    %30 = memref.load %arg0[%c0_18] : memref<6xi32, #tpu.memory_space<smem>>
    %c0_i32_19 = arith.constant 0 : i32
    %c0_i32_20 = arith.constant 0 : i32
    %31 = tpu.memref_slice %arg1[%30, %c0_i32_20] : memref<2x256xf32, #tpu.memory_space<any>> -> memref<1x256xf32, #tpu.memory_space<any>>
    %c0_i32_21 = arith.constant 0 : i32
    %c0_i32_22 = arith.constant 0 : i32
    %32 = tpu.memref_slice %arg8[%c0_i32_21, %c0_i32_22] : memref<6x256xf32, #tpu.memory_space<vmem>> -> memref<1x256xf32, #tpu.memory_space<vmem>>
    %33 = tpu.memref_slice %arg10[%c0_i32_19] : memref<8x!tpu.dma_semaphore, #tpu.memory_space<semaphore_mem>> -> memref<1x!tpu.dma_semaphore, #tpu.memory_space<semaphore_mem>>
    %34 = tpu.memref_squeeze %33 : memref<1x!tpu.dma_semaphore, #tpu.memory_space<semaphore_mem>> -> memref<!tpu.dma_semaphore, #tpu.memory_space<semaphore_mem>>
    tpu.wait_dma2 semaphore(%34 : memref<!tpu.dma_semaphore, #tpu.memory_space<semaphore_mem>>) src(%31 : memref<1x256xf32, #tpu.memory_space<any>>) dst(%32 : memref<1x256xf32, #tpu.memory_space<vmem>>)
    %c1_23 = arith.constant 1 : index
    %35 = memref.load %arg0[%c1_23] : memref<6xi32, #tpu.memory_space<smem>>
    %c1_i32_24 = arith.constant 1 : i32
    %c0_i32_25 = arith.constant 0 : i32
    %36 = tpu.memref_slice %arg1[%35, %c0_i32_25] : memref<2x256xf32, #tpu.memory_space<any>> -> memref<1x256xf32, #tpu.memory_space<any>>
    %c1_i32_26 = arith.constant 1 : i32
    %c0_i32_27 = arith.constant 0 : i32
    %37 = tpu.memref_slice %arg8[%c1_i32_26, %c0_i32_27] : memref<6x256xf32, #tpu.memory_space<vmem>> -> memref<1x256xf32, #tpu.memory_space<vmem>>
    %38 = tpu.memref_slice %arg10[%c1_i32_24] : memref<8x!tpu.dma_semaphore, #tpu.memory_space<semaphore_mem>> -> memref<1x!tpu.dma_semaphore, #tpu.memory_space<semaphore_mem>>
    %39 = tpu.memref_squeeze %38 : memref<1x!tpu.dma_semaphore, #tpu.memory_space<semaphore_mem>> -> memref<!tpu.dma_semaphore, #tpu.memory_space<semaphore_mem>>
    tpu.wait_dma2 semaphore(%39 : memref<!tpu.dma_semaphore, #tpu.memory_space<semaphore_mem>>) src(%36 : memref<1x256xf32, #tpu.memory_space<any>>) dst(%37 : memref<1x256xf32, #tpu.memory_space<vmem>>)
    %c2_28 = arith.constant 2 : index
    %40 = memref.load %arg0[%c2_28] : memref<6xi32, #tpu.memory_space<smem>>
    %c2_i32_29 = arith.constant 2 : i32
    %c0_i32_30 = arith.constant 0 : i32
    %41 = tpu.memref_slice %arg1[%40, %c0_i32_30] : memref<2x256xf32, #tpu.memory_space<any>> -> memref<1x256xf32, #tpu.memory_space<any>>
    %c2_i32_31 = arith.constant 2 : i32
    %c0_i32_32 = arith.constant 0 : i32
    %42 = tpu.memref_slice %arg8[%c2_i32_31, %c0_i32_32] : memref<6x256xf32, #tpu.memory_space<vmem>> -> memref<1x256xf32, #tpu.memory_space<vmem>>
    %43 = tpu.memref_slice %arg10[%c2_i32_29] : memref<8x!tpu.dma_semaphore, #tpu.memory_space<semaphore_mem>> -> memref<1x!tpu.dma_semaphore, #tpu.memory_space<semaphore_mem>>
    %44 = tpu.memref_squeeze %43 : memref<1x!tpu.dma_semaphore, #tpu.memory_space<semaphore_mem>> -> memref<!tpu.dma_semaphore, #tpu.memory_space<semaphore_mem>>
    tpu.wait_dma2 semaphore(%44 : memref<!tpu.dma_semaphore, #tpu.memory_space<semaphore_mem>>) src(%41 : memref<1x256xf32, #tpu.memory_space<any>>) dst(%42 : memref<1x256xf32, #tpu.memory_space<vmem>>)
    %c3_33 = arith.constant 3 : index
    %45 = memref.load %arg0[%c3_33] : memref<6xi32, #tpu.memory_space<smem>>
    %c3_i32_34 = arith.constant 3 : i32
    %c0_i32_35 = arith.constant 0 : i32
    %46 = tpu.memref_slice %arg1[%45, %c0_i32_35] : memref<2x256xf32, #tpu.memory_space<any>> -> memref<1x256xf32, #tpu.memory_space<any>>
    %c3_i32_36 = arith.constant 3 : i32
    %c0_i32_37 = arith.constant 0 : i32
    %47 = tpu.memref_slice %arg8[%c3_i32_36, %c0_i32_37] : memref<6x256xf32, #tpu.memory_space<vmem>> -> memref<1x256xf32, #tpu.memory_space<vmem>>
    %48 = tpu.memref_slice %arg10[%c3_i32_34] : memref<8x!tpu.dma_semaphore, #tpu.memory_space<semaphore_mem>> -> memref<1x!tpu.dma_semaphore, #tpu.memory_space<semaphore_mem>>
    %49 = tpu.memref_squeeze %48 : memref<1x!tpu.dma_semaphore, #tpu.memory_space<semaphore_mem>> -> memref<!tpu.dma_semaphore, #tpu.memory_space<semaphore_mem>>
    tpu.wait_dma2 semaphore(%49 : memref<!tpu.dma_semaphore, #tpu.memory_space<semaphore_mem>>) src(%46 : memref<1x256xf32, #tpu.memory_space<any>>) dst(%47 : memref<1x256xf32, #tpu.memory_space<vmem>>)
    %c4_38 = arith.constant 4 : index
    %50 = memref.load %arg0[%c4_38] : memref<6xi32, #tpu.memory_space<smem>>
    %c4_i32_39 = arith.constant 4 : i32
    %c0_i32_40 = arith.constant 0 : i32
    %51 = tpu.memref_slice %arg1[%50, %c0_i32_40] : memref<2x256xf32, #tpu.memory_space<any>> -> memref<1x256xf32, #tpu.memory_space<any>>
    %c4_i32_41 = arith.constant 4 : i32
    %c0_i32_42 = arith.constant 0 : i32
    %52 = tpu.memref_slice %arg8[%c4_i32_41, %c0_i32_42] : memref<6x256xf32, #tpu.memory_space<vmem>> -> memref<1x256xf32, #tpu.memory_space<vmem>>
    %53 = tpu.memref_slice %arg10[%c4_i32_39] : memref<8x!tpu.dma_semaphore, #tpu.memory_space<semaphore_mem>> -> memref<1x!tpu.dma_semaphore, #tpu.memory_space<semaphore_mem>>
    %54 = tpu.memref_squeeze %53 : memref<1x!tpu.dma_semaphore, #tpu.memory_space<semaphore_mem>> -> memref<!tpu.dma_semaphore, #tpu.memory_space<semaphore_mem>>
    tpu.wait_dma2 semaphore(%54 : memref<!tpu.dma_semaphore, #tpu.memory_space<semaphore_mem>>) src(%51 : memref<1x256xf32, #tpu.memory_space<any>>) dst(%52 : memref<1x256xf32, #tpu.memory_space<vmem>>)
    %c5_43 = arith.constant 5 : index
    %55 = memref.load %arg0[%c5_43] : memref<6xi32, #tpu.memory_space<smem>>
    %c5_i32_44 = arith.constant 5 : i32
    %c0_i32_45 = arith.constant 0 : i32
    %56 = tpu.memref_slice %arg1[%55, %c0_i32_45] : memref<2x256xf32, #tpu.memory_space<any>> -> memref<1x256xf32, #tpu.memory_space<any>>
    %c5_i32_46 = arith.constant 5 : i32
    %c0_i32_47 = arith.constant 0 : i32
    %57 = tpu.memref_slice %arg8[%c5_i32_46, %c0_i32_47] : memref<6x256xf32, #tpu.memory_space<vmem>> -> memref<1x256xf32, #tpu.memory_space<vmem>>
    %58 = tpu.memref_slice %arg10[%c5_i32_44] : memref<8x!tpu.dma_semaphore, #tpu.memory_space<semaphore_mem>> -> memref<1x!tpu.dma_semaphore, #tpu.memory_space<semaphore_mem>>
    %59 = tpu.memref_squeeze %58 : memref<1x!tpu.dma_semaphore, #tpu.memory_space<semaphore_mem>> -> memref<!tpu.dma_semaphore, #tpu.memory_space<semaphore_mem>>
    tpu.wait_dma2 semaphore(%59 : memref<!tpu.dma_semaphore, #tpu.memory_space<semaphore_mem>>) src(%56 : memref<1x256xf32, #tpu.memory_space<any>>) dst(%57 : memref<1x256xf32, #tpu.memory_space<vmem>>)
    %c0_48 = arith.constant 0 : index
    %c0_49 = arith.constant 0 : index
    %60 = vector.load %arg8[%c0_48, %c0_49] : memref<6x256xf32, #tpu.memory_space<vmem>>, vector<6x256xf32>
    %c0_50 = arith.constant 0 : index
    %c0_51 = arith.constant 0 : index
    %61 = vector.load %arg3[%c0_50, %c0_51] : memref<256x768xf32, #tpu.memory_space<vmem>>, vector<256x768xf32>
    %cst = arith.constant dense<0.000000e+00> : vector<6x768xf32>
    %62 = tpu.matmul %60, %61, %cst {dimension_numbers = #tpu.dot_dimension_numbers<[1], [0], [0], [1], [0, 0, 1, 1], [], []>} : vector<6x256xf32>, vector<256x768xf32>, vector<6x768xf32> -> vector<6x768xf32>
    %c0_52 = arith.constant 0 : index
    %c0_53 = arith.constant 0 : index
    %63 = vector.load %arg5[%c0_52, %c0_53] : memref<1x768xf32, #tpu.memory_space<vmem>>, vector<1x768xf32>
    %64 = vector.broadcast %63 : vector<1x768xf32> to vector<6x768xf32>
    %65 = arith.addf %62, %64 : vector<6x768xf32>
    %c0_54 = arith.constant 0 : index
    %c0_55 = arith.constant 0 : index
    %66 = vector.load %arg9[%c0_54, %c0_55] : memref<6x768xf32, #tpu.memory_space<vmem>>, vector<6x768xf32>
    tpu.vector_store %arg9[%c0_54, %c0_55], %65 {strides = array<i32>} : memref<6x768xf32, #tpu.memory_space<vmem>>, vector<6x768xf32>,
    %c0_56 = arith.constant 0 : index
    %c0_57 = arith.constant 0 : index
    %67 = vector.load %arg2[%c0_56, %c0_57] : memref<1x256xf32, #tpu.memory_space<vmem>>, vector<1x256xf32>
    %c0_i32_58 = arith.constant 0 : i32
    %c0_59 = arith.constant 0 : index
    %c0_60 = arith.constant 0 : index
    %68 = vector.load %arg4[%c0_59, %c0_60] : memref<256x768xf32, #tpu.memory_space<vmem>>, vector<256x768xf32>
    %cst_61 = arith.constant dense<0.000000e+00> : vector<1x768xf32>
    %69 = tpu.matmul %67, %68, %cst_61 {dimension_numbers = #tpu.dot_dimension_numbers<[1], [0], [0], [1], [0, 0, 1, 1], [], []>} : vector<1x256xf32>, vector<256x768xf32>, vector<1x768xf32> -> vector<1x768xf32>
    %c0_62 = arith.constant 0 : index
    %c0_63 = arith.constant 0 : index
    %70 = vector.load %arg6[%c0_62, %c0_63] : memref<1x768xf32, #tpu.memory_space<vmem>>, vector<1x768xf32>
    %71 = arith.addf %69, %70 : vector<1x768xf32>
    %72 = arith.index_cast %c0_i32_58 : i32 to index
    %c0_64 = arith.constant 0 : index
    %73 = vector.load %arg9[%72, %c0_64] : memref<6x768xf32, #tpu.memory_space<vmem>>, vector<1x768xf32>
    %74 = vector.extract_strided_slice %73 {offsets = [0, 0], sizes = [1, 256], strides = [1, 1]} : vector<1x768xf32> to vector<1x256xf32>
    %75 = vector.extract_strided_slice %71 {offsets = [0, 0], sizes = [1, 256], strides = [1, 1]} : vector<1x768xf32> to vector<1x256xf32>
    %76 = arith.addf %74, %75 : vector<1x256xf32>
    %77 = arith.negf %76 : vector<1x256xf32>
    %78 = math.exp %77 : vector<1x256xf32>
    %cst_65 = arith.constant 1.000000e+00 : f32
    %79 = vector.broadcast %cst_65 : f32 to vector<1x256xf32>
    %80 = arith.addf %79, %78 : vector<1x256xf32>
    %81 = arith.divf %79, %80 : vector<1x256xf32>
    %82 = vector.extract_strided_slice %73 {offsets = [0, 256], sizes = [1, 256], strides = [1, 1]} : vector<1x768xf32> to vector<1x256xf32>
    %83 = vector.extract_strided_slice %71 {offsets = [0, 256], sizes = [1, 256], strides = [1, 1]} : vector<1x768xf32> to vector<1x256xf32>
    %84 = arith.addf %82, %83 : vector<1x256xf32>
    %85 = arith.negf %84 : vector<1x256xf32>
    %86 = math.exp %85 : vector<1x256xf32>
    %cst_66 = arith.constant 1.000000e+00 : f32
    %87 = vector.broadcast %cst_66 : f32 to vector<1x256xf32>
    %88 = arith.addf %87, %86 : vector<1x256xf32>
    %89 = arith.divf %87, %88 : vector<1x256xf32>
    %90 = vector.extract_strided_slice %73 {offsets = [0, 512], sizes = [1, 256], strides = [1, 1]} : vector<1x768xf32> to vector<1x256xf32>
    %91 = vector.extract_strided_slice %71 {offsets = [0, 512], sizes = [1, 256], strides = [1, 1]} : vector<1x768xf32> to vector<1x256xf32>
    %92 = arith.mulf %81, %91 : vector<1x256xf32>
    %93 = arith.addf %90, %92 : vector<1x256xf32>
    %94 = math.tanh %93 : vector<1x256xf32>
    %cst_67 = arith.constant 1.000000e+00 : f32
    %95 = vector.broadcast %cst_67 : f32 to vector<1x256xf32>
    %96 = arith.subf %95, %89 : vector<1x256xf32>
    %97 = arith.mulf %96, %94 : vector<1x256xf32>
    %98 = arith.mulf %89, %67 : vector<1x256xf32>
    %99 = arith.addf %97, %98 : vector<1x256xf32>
    %100 = arith.index_cast %c0_i32_58 : i32 to index
    %c0_68 = arith.constant 0 : index
    %101 = vector.load %arg7[%100, %c0_68] : memref<6x256xf32, #tpu.memory_space<vmem>>, vector<1x256xf32>
    tpu.vector_store %arg7[%100, %c0_68], %99 {strides = array<i32>} : memref<6x256xf32, #tpu.memory_space<vmem>>, vector<1x256xf32>,
    %c1_i32_69 = arith.constant 1 : i32
    %c0_70 = arith.constant 0 : index
    %c0_71 = arith.constant 0 : index
    %102 = vector.load %arg4[%c0_70, %c0_71] : memref<256x768xf32, #tpu.memory_space<vmem>>, vector<256x768xf32>
    %cst_72 = arith.constant dense<0.000000e+00> : vector<1x768xf32>
    %103 = tpu.matmul %99, %102, %cst_72 {dimension_numbers = #tpu.dot_dimension_numbers<[1], [0], [0], [1], [0, 0, 1, 1], [], []>} : vector<1x256xf32>, vector<256x768xf32>, vector<1x768xf32> -> vector<1x768xf32>
    %c0_73 = arith.constant 0 : index
    %c0_74 = arith.constant 0 : index
    %104 = vector.load %arg6[%c0_73, %c0_74] : memref<1x768xf32, #tpu.memory_space<vmem>>, vector<1x768xf32>
    %105 = arith.addf %103, %104 : vector<1x768xf32>
    %106 = arith.index_cast %c1_i32_69 : i32 to index
    %c0_75 = arith.constant 0 : index
    %107 = vector.load %arg9[%106, %c0_75] : memref<6x768xf32, #tpu.memory_space<vmem>>, vector<1x768xf32>
    %108 = vector.extract_strided_slice %107 {offsets = [0, 0], sizes = [1, 256], strides = [1, 1]} : vector<1x768xf32> to vector<1x256xf32>
    %109 = vector.extract_strided_slice %105 {offsets = [0, 0], sizes = [1, 256], strides = [1, 1]} : vector<1x768xf32> to vector<1x256xf32>
    %110 = arith.addf %108, %109 : vector<1x256xf32>
    %111 = arith.negf %110 : vector<1x256xf32>
    %112 = math.exp %111 : vector<1x256xf32>
    %cst_76 = arith.constant 1.000000e+00 : f32
    %113 = vector.broadcast %cst_76 : f32 to vector<1x256xf32>
    %114 = arith.addf %113, %112 : vector<1x256xf32>
    %115 = arith.divf %113, %114 : vector<1x256xf32>
    %116 = vector.extract_strided_slice %107 {offsets = [0, 256], sizes = [1, 256], strides = [1, 1]} : vector<1x768xf32> to vector<1x256xf32>
    %117 = vector.extract_strided_slice %105 {offsets = [0, 256], sizes = [1, 256], strides = [1, 1]} : vector<1x768xf32> to vector<1x256xf32>
    %118 = arith.addf %116, %117 : vector<1x256xf32>
    %119 = arith.negf %118 : vector<1x256xf32>
    %120 = math.exp %119 : vector<1x256xf32>
    %cst_77 = arith.constant 1.000000e+00 : f32
    %121 = vector.broadcast %cst_77 : f32 to vector<1x256xf32>
    %122 = arith.addf %121, %120 : vector<1x256xf32>
    %123 = arith.divf %121, %122 : vector<1x256xf32>
    %124 = vector.extract_strided_slice %107 {offsets = [0, 512], sizes = [1, 256], strides = [1, 1]} : vector<1x768xf32> to vector<1x256xf32>
    %125 = vector.extract_strided_slice %105 {offsets = [0, 512], sizes = [1, 256], strides = [1, 1]} : vector<1x768xf32> to vector<1x256xf32>
    %126 = arith.mulf %115, %125 : vector<1x256xf32>
    %127 = arith.addf %124, %126 : vector<1x256xf32>
    %128 = math.tanh %127 : vector<1x256xf32>
    %cst_78 = arith.constant 1.000000e+00 : f32
    %129 = vector.broadcast %cst_78 : f32 to vector<1x256xf32>
    %130 = arith.subf %129, %123 : vector<1x256xf32>
    %131 = arith.mulf %130, %128 : vector<1x256xf32>
    %132 = arith.mulf %123, %99 : vector<1x256xf32>
    %133 = arith.addf %131, %132 : vector<1x256xf32>
    %134 = arith.index_cast %c1_i32_69 : i32 to index
    %c0_79 = arith.constant 0 : index
    %135 = vector.load %arg7[%134, %c0_79] : memref<6x256xf32, #tpu.memory_space<vmem>>, vector<1x256xf32>
    tpu.vector_store %arg7[%134, %c0_79], %133 {strides = array<i32>} : memref<6x256xf32, #tpu.memory_space<vmem>>, vector<1x256xf32>,
    %c2_i32_80 = arith.constant 2 : i32
    %c0_81 = arith.constant 0 : index
    %c0_82 = arith.constant 0 : index
    %136 = vector.load %arg4[%c0_81, %c0_82] : memref<256x768xf32, #tpu.memory_space<vmem>>, vector<256x768xf32>
    %cst_83 = arith.constant dense<0.000000e+00> : vector<1x768xf32>
    %137 = tpu.matmul %133, %136, %cst_83 {dimension_numbers = #tpu.dot_dimension_numbers<[1], [0], [0], [1], [0, 0, 1, 1], [], []>} : vector<1x256xf32>, vector<256x768xf32>, vector<1x768xf32> -> vector<1x768xf32>
    %c0_84 = arith.constant 0 : index
    %c0_85 = arith.constant 0 : index
    %138 = vector.load %arg6[%c0_84, %c0_85] : memref<1x768xf32, #tpu.memory_space<vmem>>, vector<1x768xf32>
    %139 = arith.addf %137, %138 : vector<1x768xf32>
    %140 = arith.index_cast %c2_i32_80 : i32 to index
    %c0_86 = arith.constant 0 : index
    %141 = vector.load %arg9[%140, %c0_86] : memref<6x768xf32, #tpu.memory_space<vmem>>, vector<1x768xf32>
    %142 = vector.extract_strided_slice %141 {offsets = [0, 0], sizes = [1, 256], strides = [1, 1]} : vector<1x768xf32> to vector<1x256xf32>
    %143 = vector.extract_strided_slice %139 {offsets = [0, 0], sizes = [1, 256], strides = [1, 1]} : vector<1x768xf32> to vector<1x256xf32>
    %144 = arith.addf %142, %143 : vector<1x256xf32>
    %145 = arith.negf %144 : vector<1x256xf32>
    %146 = math.exp %145 : vector<1x256xf32>
    %cst_87 = arith.constant 1.000000e+00 : f32
    %147 = vector.broadcast %cst_87 : f32 to vector<1x256xf32>
    %148 = arith.addf %147, %146 : vector<1x256xf32>
    %149 = arith.divf %147, %148 : vector<1x256xf32>
    %150 = vector.extract_strided_slice %141 {offsets = [0, 256], sizes = [1, 256], strides = [1, 1]} : vector<1x768xf32> to vector<1x256xf32>
    %151 = vector.extract_strided_slice %139 {offsets = [0, 256], sizes = [1, 256], strides = [1, 1]} : vector<1x768xf32> to vector<1x256xf32>
    %152 = arith.addf %150, %151 : vector<1x256xf32>
    %153 = arith.negf %152 : vector<1x256xf32>
    %154 = math.exp %153 : vector<1x256xf32>
    %cst_88 = arith.constant 1.000000e+00 : f32
    %155 = vector.broadcast %cst_88 : f32 to vector<1x256xf32>
    %156 = arith.addf %155, %154 : vector<1x256xf32>
    %157 = arith.divf %155, %156 : vector<1x256xf32>
    %158 = vector.extract_strided_slice %141 {offsets = [0, 512], sizes = [1, 256], strides = [1, 1]} : vector<1x768xf32> to vector<1x256xf32>
    %159 = vector.extract_strided_slice %139 {offsets = [0, 512], sizes = [1, 256], strides = [1, 1]} : vector<1x768xf32> to vector<1x256xf32>
    %160 = arith.mulf %149, %159 : vector<1x256xf32>
    %161 = arith.addf %158, %160 : vector<1x256xf32>
    %162 = math.tanh %161 : vector<1x256xf32>
    %cst_89 = arith.constant 1.000000e+00 : f32
    %163 = vector.broadcast %cst_89 : f32 to vector<1x256xf32>
    %164 = arith.subf %163, %157 : vector<1x256xf32>
    %165 = arith.mulf %164, %162 : vector<1x256xf32>
    %166 = arith.mulf %157, %133 : vector<1x256xf32>
    %167 = arith.addf %165, %166 : vector<1x256xf32>
    %168 = arith.index_cast %c2_i32_80 : i32 to index
    %c0_90 = arith.constant 0 : index
    %169 = vector.load %arg7[%168, %c0_90] : memref<6x256xf32, #tpu.memory_space<vmem>>, vector<1x256xf32>
    tpu.vector_store %arg7[%168, %c0_90], %167 {strides = array<i32>} : memref<6x256xf32, #tpu.memory_space<vmem>>, vector<1x256xf32>,
    %c3_i32_91 = arith.constant 3 : i32
    %c0_92 = arith.constant 0 : index
    %c0_93 = arith.constant 0 : index
    %170 = vector.load %arg4[%c0_92, %c0_93] : memref<256x768xf32, #tpu.memory_space<vmem>>, vector<256x768xf32>
    %cst_94 = arith.constant dense<0.000000e+00> : vector<1x768xf32>
    %171 = tpu.matmul %167, %170, %cst_94 {dimension_numbers = #tpu.dot_dimension_numbers<[1], [0], [0], [1], [0, 0, 1, 1], [], []>} : vector<1x256xf32>, vector<256x768xf32>, vector<1x768xf32> -> vector<1x768xf32>
    %c0_95 = arith.constant 0 : index
    %c0_96 = arith.constant 0 : index
    %172 = vector.load %arg6[%c0_95, %c0_96] : memref<1x768xf32, #tpu.memory_space<vmem>>, vector<1x768xf32>
    %173 = arith.addf %171, %172 : vector<1x768xf32>
    %174 = arith.index_cast %c3_i32_91 : i32 to index
    %c0_97 = arith.constant 0 : index
    %175 = vector.load %arg9[%174, %c0_97] : memref<6x768xf32, #tpu.memory_space<vmem>>, vector<1x768xf32>
    %176 = vector.extract_strided_slice %175 {offsets = [0, 0], sizes = [1, 256], strides = [1, 1]} : vector<1x768xf32> to vector<1x256xf32>
    %177 = vector.extract_strided_slice %173 {offsets = [0, 0], sizes = [1, 256], strides = [1, 1]} : vector<1x768xf32> to vector<1x256xf32>
    %178 = arith.addf %176, %177 : vector<1x256xf32>
    %179 = arith.negf %178 : vector<1x256xf32>
    %180 = math.exp %179 : vector<1x256xf32>
    %cst_98 = arith.constant 1.000000e+00 : f32
    %181 = vector.broadcast %cst_98 : f32 to vector<1x256xf32>
    %182 = arith.addf %181, %180 : vector<1x256xf32>
    %183 = arith.divf %181, %182 : vector<1x256xf32>
    %184 = vector.extract_strided_slice %175 {offsets = [0, 256], sizes = [1, 256], strides = [1, 1]} : vector<1x768xf32> to vector<1x256xf32>
    %185 = vector.extract_strided_slice %173 {offsets = [0, 256], sizes = [1, 256], strides = [1, 1]} : vector<1x768xf32> to vector<1x256xf32>
    %186 = arith.addf %184, %185 : vector<1x256xf32>
    %187 = arith.negf %186 : vector<1x256xf32>
    %188 = math.exp %187 : vector<1x256xf32>
    %cst_99 = arith.constant 1.000000e+00 : f32
    %189 = vector.broadcast %cst_99 : f32 to vector<1x256xf32>
    %190 = arith.addf %189, %188 : vector<1x256xf32>
    %191 = arith.divf %189, %190 : vector<1x256xf32>
    %192 = vector.extract_strided_slice %175 {offsets = [0, 512], sizes = [1, 256], strides = [1, 1]} : vector<1x768xf32> to vector<1x256xf32>
    %193 = vector.extract_strided_slice %173 {offsets = [0, 512], sizes = [1, 256], strides = [1, 1]} : vector<1x768xf32> to vector<1x256xf32>
    %194 = arith.mulf %183, %193 : vector<1x256xf32>
    %195 = arith.addf %192, %194 : vector<1x256xf32>
    %196 = math.tanh %195 : vector<1x256xf32>
    %cst_100 = arith.constant 1.000000e+00 : f32
    %197 = vector.broadcast %cst_100 : f32 to vector<1x256xf32>
    %198 = arith.subf %197, %191 : vector<1x256xf32>
    %199 = arith.mulf %198, %196 : vector<1x256xf32>
    %200 = arith.mulf %191, %167 : vector<1x256xf32>
    %201 = arith.addf %199, %200 : vector<1x256xf32>
    %202 = arith.index_cast %c3_i32_91 : i32 to index
    %c0_101 = arith.constant 0 : index
    %203 = vector.load %arg7[%202, %c0_101] : memref<6x256xf32, #tpu.memory_space<vmem>>, vector<1x256xf32>
    tpu.vector_store %arg7[%202, %c0_101], %201 {strides = array<i32>} : memref<6x256xf32, #tpu.memory_space<vmem>>, vector<1x256xf32>,
    %c4_i32_102 = arith.constant 4 : i32
    %c0_103 = arith.constant 0 : index
    %c0_104 = arith.constant 0 : index
    %204 = vector.load %arg4[%c0_103, %c0_104] : memref<256x768xf32, #tpu.memory_space<vmem>>, vector<256x768xf32>
    %cst_105 = arith.constant dense<0.000000e+00> : vector<1x768xf32>
    %205 = tpu.matmul %201, %204, %cst_105 {dimension_numbers = #tpu.dot_dimension_numbers<[1], [0], [0], [1], [0, 0, 1, 1], [], []>} : vector<1x256xf32>, vector<256x768xf32>, vector<1x768xf32> -> vector<1x768xf32>
    %c0_106 = arith.constant 0 : index
    %c0_107 = arith.constant 0 : index
    %206 = vector.load %arg6[%c0_106, %c0_107] : memref<1x768xf32, #tpu.memory_space<vmem>>, vector<1x768xf32>
    %207 = arith.addf %205, %206 : vector<1x768xf32>
    %208 = arith.index_cast %c4_i32_102 : i32 to index
    %c0_108 = arith.constant 0 : index
    %209 = vector.load %arg9[%208, %c0_108] : memref<6x768xf32, #tpu.memory_space<vmem>>, vector<1x768xf32>
    %210 = vector.extract_strided_slice %209 {offsets = [0, 0], sizes = [1, 256], strides = [1, 1]} : vector<1x768xf32> to vector<1x256xf32>
    %211 = vector.extract_strided_slice %207 {offsets = [0, 0], sizes = [1, 256], strides = [1, 1]} : vector<1x768xf32> to vector<1x256xf32>
    %212 = arith.addf %210, %211 : vector<1x256xf32>
    %213 = arith.negf %212 : vector<1x256xf32>
    %214 = math.exp %213 : vector<1x256xf32>
    %cst_109 = arith.constant 1.000000e+00 : f32
    %215 = vector.broadcast %cst_109 : f32 to vector<1x256xf32>
    %216 = arith.addf %215, %214 : vector<1x256xf32>
    %217 = arith.divf %215, %216 : vector<1x256xf32>
    %218 = vector.extract_strided_slice %209 {offsets = [0, 256], sizes = [1, 256], strides = [1, 1]} : vector<1x768xf32> to vector<1x256xf32>
    %219 = vector.extract_strided_slice %207 {offsets = [0, 256], sizes = [1, 256], strides = [1, 1]} : vector<1x768xf32> to vector<1x256xf32>
    %220 = arith.addf %218, %219 : vector<1x256xf32>
    %221 = arith.negf %220 : vector<1x256xf32>
    %222 = math.exp %221 : vector<1x256xf32>
    %cst_110 = arith.constant 1.000000e+00 : f32
    %223 = vector.broadcast %cst_110 : f32 to vector<1x256xf32>
    %224 = arith.addf %223, %222 : vector<1x256xf32>
    %225 = arith.divf %223, %224 : vector<1x256xf32>
    %226 = vector.extract_strided_slice %209 {offsets = [0, 512], sizes = [1, 256], strides = [1, 1]} : vector<1x768xf32> to vector<1x256xf32>
    %227 = vector.extract_strided_slice %207 {offsets = [0, 512], sizes = [1, 256], strides = [1, 1]} : vector<1x768xf32> to vector<1x256xf32>
    %228 = arith.mulf %217, %227 : vector<1x256xf32>
    %229 = arith.addf %226, %228 : vector<1x256xf32>
    %230 = math.tanh %229 : vector<1x256xf32>
    %cst_111 = arith.constant 1.000000e+00 : f32
    %231 = vector.broadcast %cst_111 : f32 to vector<1x256xf32>
    %232 = arith.subf %231, %225 : vector<1x256xf32>
    %233 = arith.mulf %232, %230 : vector<1x256xf32>
    %234 = arith.mulf %225, %201 : vector<1x256xf32>
    %235 = arith.addf %233, %234 : vector<1x256xf32>
    %236 = arith.index_cast %c4_i32_102 : i32 to index
    %c0_112 = arith.constant 0 : index
    %237 = vector.load %arg7[%236, %c0_112] : memref<6x256xf32, #tpu.memory_space<vmem>>, vector<1x256xf32>
    tpu.vector_store %arg7[%236, %c0_112], %235 {strides = array<i32>} : memref<6x256xf32, #tpu.memory_space<vmem>>, vector<1x256xf32>,
    %c5_i32_113 = arith.constant 5 : i32
    %c0_114 = arith.constant 0 : index
    %c0_115 = arith.constant 0 : index
    %238 = vector.load %arg4[%c0_114, %c0_115] : memref<256x768xf32, #tpu.memory_space<vmem>>, vector<256x768xf32>
    %cst_116 = arith.constant dense<0.000000e+00> : vector<1x768xf32>
    %239 = tpu.matmul %235, %238, %cst_116 {dimension_numbers = #tpu.dot_dimension_numbers<[1], [0], [0], [1], [0, 0, 1, 1], [], []>} : vector<1x256xf32>, vector<256x768xf32>, vector<1x768xf32> -> vector<1x768xf32>
    %c0_117 = arith.constant 0 : index
    %c0_118 = arith.constant 0 : index
    %240 = vector.load %arg6[%c0_117, %c0_118] : memref<1x768xf32, #tpu.memory_space<vmem>>, vector<1x768xf32>
    %241 = arith.addf %239, %240 : vector<1x768xf32>
    %242 = arith.index_cast %c5_i32_113 : i32 to index
    %c0_119 = arith.constant 0 : index
    %243 = vector.load %arg9[%242, %c0_119] : memref<6x768xf32, #tpu.memory_space<vmem>>, vector<1x768xf32>
    %244 = vector.extract_strided_slice %243 {offsets = [0, 0], sizes = [1, 256], strides = [1, 1]} : vector<1x768xf32> to vector<1x256xf32>
    %245 = vector.extract_strided_slice %241 {offsets = [0, 0], sizes = [1, 256], strides = [1, 1]} : vector<1x768xf32> to vector<1x256xf32>
    %246 = arith.addf %244, %245 : vector<1x256xf32>
    %247 = arith.negf %246 : vector<1x256xf32>
    %248 = math.exp %247 : vector<1x256xf32>
    %cst_120 = arith.constant 1.000000e+00 : f32
    %249 = vector.broadcast %cst_120 : f32 to vector<1x256xf32>
    %250 = arith.addf %249, %248 : vector<1x256xf32>
    %251 = arith.divf %249, %250 : vector<1x256xf32>
    %252 = vector.extract_strided_slice %243 {offsets = [0, 256], sizes = [1, 256], strides = [1, 1]} : vector<1x768xf32> to vector<1x256xf32>
    %253 = vector.extract_strided_slice %241 {offsets = [0, 256], sizes = [1, 256], strides = [1, 1]} : vector<1x768xf32> to vector<1x256xf32>
    %254 = arith.addf %252, %253 : vector<1x256xf32>
    %255 = arith.negf %254 : vector<1x256xf32>
    %256 = math.exp %255 : vector<1x256xf32>
    %cst_121 = arith.constant 1.000000e+00 : f32
    %257 = vector.broadcast %cst_121 : f32 to vector<1x256xf32>
    %258 = arith.addf %257, %256 : vector<1x256xf32>
    %259 = arith.divf %257, %258 : vector<1x256xf32>
    %260 = vector.extract_strided_slice %243 {offsets = [0, 512], sizes = [1, 256], strides = [1, 1]} : vector<1x768xf32> to vector<1x256xf32>
    %261 = vector.extract_strided_slice %241 {offsets = [0, 512], sizes = [1, 256], strides = [1, 1]} : vector<1x768xf32> to vector<1x256xf32>
    %262 = arith.mulf %251, %261 : vector<1x256xf32>
    %263 = arith.addf %260, %262 : vector<1x256xf32>
    %264 = math.tanh %263 : vector<1x256xf32>
    %cst_122 = arith.constant 1.000000e+00 : f32
    %265 = vector.broadcast %cst_122 : f32 to vector<1x256xf32>
    %266 = arith.subf %265, %259 : vector<1x256xf32>
    %267 = arith.mulf %266, %264 : vector<1x256xf32>
    %268 = arith.mulf %259, %235 : vector<1x256xf32>
    %269 = arith.addf %267, %268 : vector<1x256xf32>
    %270 = arith.index_cast %c5_i32_113 : i32 to index
    %c0_123 = arith.constant 0 : index
    %271 = vector.load %arg7[%270, %c0_123] : memref<6x256xf32, #tpu.memory_space<vmem>>, vector<1x256xf32>
    tpu.vector_store %arg7[%270, %c0_123], %269 {strides = array<i32>} : memref<6x256xf32, #tpu.memory_space<vmem>>, vector<1x256xf32>,
    %c6_i32 = arith.constant 6 : i32
    return
  }
}

</mosaic_0001>

<llo_original>
// kernel: tpu_custom_call.1
$region0: #{tpu_custom_call.1}
  #allocation0 [shape = 'u32[]', space=smem, size = 0x4, offset = 0x4, fixed_abs, tag = 'smem constant byte address 0x4 - core index']
  #allocation1 [shape = 'u32[144,128]{1,0:T(1,128)}', space=vmem, size = 0x12000, scoped, tag = 'internal scratch']
  #allocation2 [shape = 'f32[6,256]{1,0:T(8,128)}', space=vmem, size = 0x2000, scoped, tag = 'scratch operand']
  #allocation3 [shape = 'f32[6,768]{1,0:T(8,128)}', space=vmem, size = 0x6000, scoped, tag = 'scratch operand']
  #allocation4 [shape = 's32[8]{0}', space=sflag, size = 0x20, scoped, tag = 'scratch operand']
  #allocation14 [shape = 's32[]', space=sflag, size = 0x4, offset = 0, fixed_abs, tag = 'sflag constant byte address 0x0 - dummy sync flag']
  #allocation15 [shape = 's32[]', space=sflag, size = 0x4, offset = 0, fixed_abs, tag = 'sflag constant byte address 0x0 - dummy sync flag']
  #allocation16 [shape = 's32[]', space=sflag, size = 0x4, offset = 0, fixed_abs, tag = 'sflag constant byte address 0x0 - dummy sync flag']
  #allocation17 [shape = 's32[]', space=sflag, size = 0x4, offset = 0, fixed_abs, tag = 'sflag constant byte address 0x0 - dummy sync flag']
  #allocation18 [shape = 's32[]', space=sflag, size = 0x4, offset = 0, fixed_abs, tag = 'sflag constant byte address 0x0 - dummy sync flag']
  #allocation19 [shape = 's32[]', space=sflag, size = 0x4, offset = 0, fixed_abs, tag = 'sflag constant byte address 0x0 - dummy sync flag']
  %s0 = inlined_call_operand.hbm [shape: s32[6], index: 0, kind: input, shape index: {}]
  %s1 = inlined_call_operand.hbm [shape: f32[2,256], index: 1, kind: input, shape index: {}]
  %s2 = inlined_call_operand.vmem [shape: f32[1,256], index: 2, kind: input, shape index: {}]
  %s3 = inlined_call_operand.hbm [shape: f32[256,768], index: 3, kind: input, shape index: {}]
  %s4 = inlined_call_operand.hbm [shape: f32[256,768], index: 4, kind: input, shape index: {}]
  %s5 = inlined_call_operand.vmem [shape: f32[1,768], index: 5, kind: input, shape index: {}]
  %s6 = inlined_call_operand.hbm [shape: f32[1,768], index: 6, kind: input, shape index: {}]
  %s7 = inlined_call_operand.hbm [shape: f32[6,256], index: 7, kind: output, shape index: {}]
  %s8 = sld [smem:[#allocation0]]
  $region50: #{tpu_custom_call.1} parent=0
    _
  %s10 = ssub.s32 1, %s8
  %s11 = scalar_select 0, %s10, %s8
  $region1: #{tpu_custom_call.1} parent=0
    #allocation5 [shape = 'u8[512]{0}', space=smem, size = 0x200, scoped, tag = 'input window, operand 0, single buffered']
    #allocation6 [shape = 's32[1]{0}', space=sflag, size = 0x4, scoped, tag = 'scoped memory for tpu_custom_call.1']
    #allocation7 [shape = 's32[1]{0}', space=sflag, size = 0x4, scoped, tag = 'scoped memory for tpu_custom_call.1']
    #allocation8 [shape = 's32[1]{0}', space=sflag, size = 0x4, scoped, tag = 'scoped memory for tpu_custom_call.1']
    #allocation9 [shape = 'u8[786432]{0}', space=vmem, size = 0xc0000, scoped, tag = 'input window, operand 3, single buffered']
    #allocation10 [shape = 'u8[786432]{0}', space=vmem, size = 0xc0000, scoped, tag = 'input window, operand 4, single buffered']
    #allocation11 [shape = 's32[1]{0}', space=sflag, size = 0x4, scoped, tag = 'scoped memory for tpu_custom_call.1']
    #allocation12 [shape = 'u8[3072]{0}', space=vmem, size = 0xc00, scoped, tag = 'input window, operand 6, single buffered']
    #allocation13 [shape = 'u8[8192]{0}', space=vmem, size = 0x2000, scoped, tag = 'output window, operand 0, single buffered']
    %12 = vsyncpa [#allocation8], 0
    %13 = vsyncpa [#allocation6], 0
    %14 = vsyncpa [#allocation11], 0
    %15 = vsyncpa [#allocation7], 0
    // Predicated region
    $region2: #{tpu_custom_call.1} parent=1 // pred_check
      _
    $region3: #{tpu_custom_call.1} parent=1 // pred_check_branch
      %17 = sbr.rel (0) target = $region5
    $region4: #{tpu_custom_call.1} parent=1 // pred_region
      %s19 = ssub.s32 16, 16
      %20 = vsyncadd [#allocation8], %s19
      %23 = dma.hbm_to_smem %s0, 16, [#allocation5], [#allocation8]
    $region5: #{tpu_custom_call.1} parent=1 // pred_fallthru
      _
    // Predicated region
    $region6: #{tpu_custom_call.1} parent=1 // pred_check
      _
    $region7: #{tpu_custom_call.1} parent=1 // pred_check_branch
      %25 = sbr.rel (0) target = $region9
    $region8: #{tpu_custom_call.1} parent=1 // pred_region
      _
    $region9: #{tpu_custom_call.1} parent=1 // pred_fallthru
      _
    // Predicated region
    $region10: #{tpu_custom_call.1} parent=1 // pred_check
      _
    $region11: #{tpu_custom_call.1} parent=1 // pred_check_branch
      %27 = sbr.rel (0) target = $region13
    $region12: #{tpu_custom_call.1} parent=1 // pred_region
      %s29 = ssub.s32 24576, 24576
      %30 = vsyncadd [#allocation6], %s29
      %s31 = sshll.u32 [#allocation9], 4
      %s32 = int_to_ptr.vmem [resolvable:$true] %s31
      %37 = dma.hbm_to_vmem [thread:$0]  %s3, 24576, %s32, [#allocation6], 768, 768, 48
    $region13: #{tpu_custom_call.1} parent=1 // pred_fallthru
      _
    // Predicated region
    $region14: #{tpu_custom_call.1} parent=1 // pred_check
      _
    $region15: #{tpu_custom_call.1} parent=1 // pred_check_branch
      %39 = sbr.rel (0) target = $region17
    $region16: #{tpu_custom_call.1} parent=1 // pred_region
      %s41 = ssub.s32 24576, 24576
      %42 = vsyncadd [#allocation11], %s41
      %s43 = sshll.u32 [#allocation10], 4
      %s44 = int_to_ptr.vmem [resolvable:$true] %s43
      %49 = dma.hbm_to_vmem [thread:$0]  %s4, 24576, %s44, [#allocation11], 768, 768, 48
    $region17: #{tpu_custom_call.1} parent=1 // pred_fallthru
      _
    // Predicated region
    $region18: #{tpu_custom_call.1} parent=1 // pred_check
      _
    $region19: #{tpu_custom_call.1} parent=1 // pred_check_branch
      %51 = sbr.rel (0) target = $region21
    $region20: #{tpu_custom_call.1} parent=1 // pred_region
      _
    $region21: #{tpu_custom_call.1} parent=1 // pred_fallthru
      _
    // Predicated region
    $region22: #{tpu_custom_call.1} parent=1 // pred_check
      _
    $region23: #{tpu_custom_call.1} parent=1 // pred_check_branch
      %53 = sbr.rel (0) target = $region25
    $region24: #{tpu_custom_call.1} parent=1 // pred_region
      %s55 = ssub.s32 96, 96
      %56 = vsyncadd [#allocation11], %s55
      %s58 = sshll.u32 [#allocation12], 4
      %s59 = int_to_ptr.vmem [resolvable:$true] %s58
      %61 = dma.hbm_to_vmem [thread:$0]  %s6, 96, %s59, [#allocation11]
    $region25: #{tpu_custom_call.1} parent=1 // pred_fallthru
      _
    // Predicated region
    $region26: #{tpu_custom_call.1} parent=1 // pred_check
      _
    $region27: #{tpu_custom_call.1} parent=1 // pred_check_branch
      %63 = sbr.rel (0) target = $region29
    $region28: #{tpu_custom_call.1} parent=1 // pred_region
      %64 = dma.done [#allocation8], 16
    $region29: #{tpu_custom_call.1} parent=1 // pred_fallthru
      _
    // Predicated region
    $region30: #{tpu_custom_call.1} parent=1 // pred_check
      _
    $region31: #{tpu_custom_call.1} parent=1 // pred_check_branch
      %66 = sbr.rel (0) target = $region33
    $region32: #{tpu_custom_call.1} parent=1 // pred_region
      %67 = dma.done [#allocation6], 24576
    $region33: #{tpu_custom_call.1} parent=1 // pred_fallthru
      _
    // Predicated region
    $region34: #{tpu_custom_call.1} parent=1 // pred_check
      _
    $region35: #{tpu_custom_call.1} parent=1 // pred_check_branch
      %69 = sbr.rel (0) target = $region37
    $region36: #{tpu_custom_call.1} parent=1 // pred_region
      %70 = dma.done [#allocation11], 24576
    $region37: #{tpu_custom_call.1} parent=1 // pred_fallthru
      _
    // Predicated region
    $region38: #{tpu_custom_call.1} parent=1 // pred_check
      _
    $region39: #{tpu_custom_call.1} parent=1 // pred_check_branch
      %72 = sbr.rel (0) target = $region41
    $region40: #{tpu_custom_call.1} parent=1 // pred_region
      %73 = dma.done [#allocation11], 96
    $region41: #{tpu_custom_call.1} parent=1 // pred_fallthru
      _
    %74 = sfence
    %s75 = sld [smem:[#allocation5]]
    %s76 = sshrl.u32 %s75, 1
    %s77 = sand.u32 %s75, 1
    %s78 = smul.u32 %s76, 4
    %s79 = sadd.s32 %s77, %s78
    %s80 = smul.addr %s79, 16
    %s81 = scalar_lea.hbm %s1, %s80
    %s83 = sshll.u32 [#allocation2], 4
    %s84 = int_to_ptr.vmem [resolvable:$true] %s83
    %86 = dma.hbm_to_vmem [thread:$0]  %s81, 32, %s84, [#allocation4], 32, 128, 1
    %s87 = sld [smem:[#allocation5 + $0x1]]
    %s88 = sshrl.u32 %s87, 1
    %s89 = sand.u32 %s87, 1
    %s90 = smul.u32 %s88, 4
    %s91 = sadd.s32 %s89, %s90
    %s92 = smul.addr %s91, 16
    %s93 = scalar_lea.hbm %s1, %s92
    %s94 = scalar_lea.vmem [#allocation2], 1
    %s95 = scalar_lea.sflag [#allocation4], 1
    %s97 = sshll.u32 %s94, 4
    %s98 = int_to_ptr.vmem [resolvable:$true] %s97
    %100 = dma.hbm_to_vmem [thread:$0]  %s93, 32, %s98, %s95, 32, 128, 1
    %s101 = sld [smem:[#allocation5 + $0x2]]
    %s102 = sshrl.u32 %s101, 1
    %s103 = sand.u32 %s101, 1
    %s104 = smul.u32 %s102, 4
    %s105 = sadd.s32 %s103, %s104
    %s106 = smul.addr %s105, 16
    %s107 = scalar_lea.hbm %s1, %s106
    %s108 = scalar_lea.vmem [#allocation2], 2
    %s109 = scalar_lea.sflag [#allocation4], 2
    %s111 = sshll.u32 %s108, 4
    %s112 = int_to_ptr.vmem [resolvable:$true] %s111
    %114 = dma.hbm_to_vmem [thread:$0]  %s107, 32, %s112, %s109, 32, 128, 1
    %s115 = sld [smem:[#allocation5 + $0x3]]
    %s116 = sshrl.u32 %s115, 1
    %s117 = sand.u32 %s115, 1
    %s118 = smul.u32 %s116, 4
    %s119 = sadd.s32 %s117, %s118
    %s120 = smul.addr %s119, 16
    %s121 = scalar_lea.hbm %s1, %s120
    %s122 = scalar_lea.vmem [#allocation2], 3
    %s123 = scalar_lea.sflag [#allocation4], 3
    %s125 = sshll.u32 %s122, 4
    %s126 = int_to_ptr.vmem [resolvable:$true] %s125
    %128 = dma.hbm_to_vmem [thread:$0]  %s121, 32, %s126, %s123, 32, 128, 1
    %s129 = sld [smem:[#allocation5 + $0x4]]
    %s130 = sshrl.u32 %s129, 1
    %s131 = sand.u32 %s129, 1
    %s132 = smul.u32 %s130, 4
    %s133 = sadd.s32 %s131, %s132
    %s134 = smul.addr %s133, 16
    %s135 = scalar_lea.hbm %s1, %s134
    %s136 = scalar_lea.vmem [#allocation2], 4
    %s137 = scalar_lea.sflag [#allocation4], 4
    %s139 = sshll.u32 %s136, 4
    %s140 = int_to_ptr.vmem [resolvable:$true] %s139
    %142 = dma.hbm_to_vmem [thread:$0]  %s135, 32, %s140, %s137, 32, 128, 1
    %s143 = sld [smem:[#allocation5 + $0x5]]
    %s144 = sshrl.u32 %s143, 1
    %s145 = sand.u32 %s143, 1
    %s146 = smul.u32 %s144, 4
    %s147 = sadd.s32 %s145, %s146
    %s148 = smul.addr %s147, 16
    %s149 = scalar_lea.hbm %s1, %s148
    %s150 = scalar_lea.vmem [#allocation2], 5
    %s151 = scalar_lea.sflag [#allocation4], 5
    %s153 = sshll.u32 %s150, 4
    %s154 = int_to_ptr.vmem [resolvable:$true] %s153
    %156 = dma.hbm_to_vmem [thread:$0]  %s149, 32, %s154, %s151, 32, 128, 1
    %s157 = sld [smem:[#allocation5]]
    %s158 = smul.u32 1, 2
    %s159 = sshll.u32 %s158, 4
    %160 = dma.done [#allocation4], %s159
    %s161 = sld [smem:[#allocation5 + $0x1]]
    %s162 = sshll.u32 %s158, 4
    %163 = dma.done %s95, %s162
    %s164 = sld [smem:[#allocation5 + $0x2]]
    %s165 = sshll.u32 %s158, 4
    %166 = dma.done %s109, %s165
    %s167 = sld [smem:[#allocation5 + $0x3]]
    %s168 = sshll.u32 %s158, 4
    %169 = dma.done %s123, %s168
    %s170 = sld [smem:[#allocation5 + $0x4]]
    %s171 = sshll.u32 %s158, 4
    %172 = dma.done %s137, %s171
    %s173 = sld [smem:[#allocation5 + $0x5]]
    %s174 = sshll.u32 %s158, 4
    %175 = dma.done %s151, %s174
    %v176 = vld [vmem:[#allocation2] sm:$0x3f]
    %v177 = vld [vmem:[#allocation2 + $0x8] sm:$0x3f]
    %v178 = vld [vmem:[#allocation9] sm:$0xff]
    %v179 = vld [vmem:[#allocation9 + $0x8] sm:$0xff]
    %v180 = vld [vmem:[#allocation9 + $0x10] sm:$0xff]
    %v181 = vld [vmem:[#allocation9 + $0x18] sm:$0xff]
    %v182 = vld [vmem:[#allocation9 + $0x20] sm:$0xff]
    %v183 = vld [vmem:[#allocation9 + $0x28] sm:$0xff]
    %v184 = vld [vmem:[#allocation9 + $0x30] sm:$0xff]
    %v185 = vld [vmem:[#allocation9 + $0x38] sm:$0xff]
    %v186 = vld [vmem:[#allocation9 + $0x40] sm:$0xff]
    %v187 = vld [vmem:[#allocation9 + $0x48] sm:$0xff]
    %v188 = vld [vmem:[#allocation9 + $0x50] sm:$0xff]
    %v189 = vld [vmem:[#allocation9 + $0x58] sm:$0xff]
    %v190 = vld [vmem:[#allocation9 + $0x60] sm:$0xff]
    %v191 = vld [vmem:[#allocation9 + $0x68] sm:$0xff]
    %v192 = vld [vmem:[#allocation9 + $0x70] sm:$0xff]
    %v193 = vld [vmem:[#allocation9 + $0x78] sm:$0xff]
    %v194 = vld [vmem:[#allocation9 + $0x80] sm:$0xff]
    %v195 = vld [vmem:[#allocation9 + $0x88] sm:$0xff]
    %v196 = vld [vmem:[#allocation9 + $0x90] sm:$0xff]
    %v197 = vld [vmem:[#allocation9 + $0x98] sm:$0xff]
    %v198 = vld [vmem:[#allocation9 + $0xa0] sm:$0xff]
    %v199 = vld [vmem:[#allocation9 + $0xa8] sm:$0xff]
    %v200 = vld [vmem:[#allocation9 + $0xb0] sm:$0xff]
    %v201 = vld [vmem:[#allocation9 + $0xb8] sm:$0xff]
    %v202 = vld [vmem:[#allocation9 + $0xc0] sm:$0xff]
    %v203 = vld [vmem:[#allocation9 + $0xc8] sm:$0xff]
    %v204 = vld [vmem:[#allocation9 + $0xd0] sm:$0xff]
    %v205 = vld [vmem:[#allocation9 + $0xd8] sm:$0xff]
    %v206 = vld [vmem:[#allocation9 + $0xe0] sm:$0xff]
    %v207 = vld [vmem:[#allocation9 + $0xe8] sm:$0xff]
    %v208 = vld [vmem:[#allocation9 + $0xf0] sm:$0xff]
    %v209 = vld [vmem:[#allocation9 + $0xf8] sm:$0xff]
    %v210 = vld [vmem:[#allocation9 + $0x100] sm:$0xff]
    %v211 = vld [vmem:[#allocation9 + $0x108] sm:$0xff]
    %v212 = vld [vmem:[#allocation9 + $0x110] sm:$0xff]
    %v213 = vld [vmem:[#allocation9 + $0x118] sm:$0xff]
    %v214 = vld [vmem:[#allocation9 + $0x120] sm:$0xff]
    %v215 = vld [vmem:[#allocation9 + $0x128] sm:$0xff]
    %v216 = vld [vmem:[#allocation9 + $0x130] sm:$0xff]
    %v217 = vld [vmem:[#allocation9 + $0x138] sm:$0xff]
    %v218 = vld [vmem:[#allocation9 + $0x140] sm:$0xff]
    %v219 = vld [vmem:[#allocation9 + $0x148] sm:$0xff]
    %v220 = vld [vmem:[#allocation9 + $0x150] sm:$0xff]
    %v221 = vld [vmem:[#allocation9 + $0x158] sm:$0xff]
    %v222 = vld [vmem:[#allocation9 + $0x160] sm:$0xff]
    %v223 = vld [vmem:[#allocation9 + $0x168] sm:$0xff]
    %v224 = vld [vmem:[#allocation9 + $0x170] sm:$0xff]
    %v225 = vld [vmem:[#allocation9 + $0x178] sm:$0xff]
    %v226 = vld [vmem:[#allocation9 + $0x180] sm:$0xff]
    %v227 = vld [vmem:[#allocation9 + $0x188] sm:$0xff]
    %v228 = vld [vmem:[#allocation9 + $0x190] sm:$0xff]
    %v229 = vld [vmem:[#allocation9 + $0x198] sm:$0xff]
    %v230 = vld [vmem:[#allocation9 + $0x1a0] sm:$0xff]
    %v231 = vld [vmem:[#allocation9 + $0x1a8] sm:$0xff]
    %v232 = vld [vmem:[#allocation9 + $0x1b0] sm:$0xff]
    %v233 = vld [vmem:[#allocation9 + $0x1b8] sm:$0xff]
    %v234 = vld [vmem:[#allocation9 + $0x1c0] sm:$0xff]
    %v235 = vld [vmem:[#allocation9 + $0x1c8] sm:$0xff]
    %v236 = vld [vmem:[#allocation9 + $0x1d0] sm:$0xff]
    %v237 = vld [vmem:[#allocation9 + $0x1d8] sm:$0xff]
    %v238 = vld [vmem:[#allocation9 + $0x1e0] sm:$0xff]
    %v239 = vld [vmem:[#allocation9 + $0x1e8] sm:$0xff]
    %v240 = vld [vmem:[#allocation9 + $0x1f0] sm:$0xff]
    %v241 = vld [vmem:[#allocation9 + $0x1f8] sm:$0xff]
    %v242 = vld [vmem:[#allocation9 + $0x200] sm:$0xff]
    %v243 = vld [vmem:[#allocation9 + $0x208] sm:$0xff]
    %v244 = vld [vmem:[#allocation9 + $0x210] sm:$0xff]
    %v245 = vld [vmem:[#allocation9 + $0x218] sm:$0xff]
    %v246 = vld [vmem:[#allocation9 + $0x220] sm:$0xff]
    %v247 = vld [vmem:[#allocation9 + $0x228] sm:$0xff]
    %v248 = vld [vmem:[#allocation9 + $0x230] sm:$0xff]
    %v249 = vld [vmem:[#allocation9 + $0x238] sm:$0xff]
    %v250 = vld [vmem:[#allocation9 + $0x240] sm:$0xff]
    %v251 = vld [vmem:[#allocation9 + $0x248] sm:$0xff]
    %v252 = vld [vmem:[#allocation9 + $0x250] sm:$0xff]
    %v253 = vld [vmem:[#allocation9 + $0x258] sm:$0xff]
    %v254 = vld [vmem:[#allocation9 + $0x260] sm:$0xff]
    %v255 = vld [vmem:[#allocation9 + $0x268] sm:$0xff]
    %v256 = vld [vmem:[#allocation9 + $0x270] sm:$0xff]
    %v257 = vld [vmem:[#allocation9 + $0x278] sm:$0xff]
    %v258 = vld [vmem:[#allocation9 + $0x280] sm:$0xff]
    %v259 = vld [vmem:[#allocation9 + $0x288] sm:$0xff]
    %v260 = vld [vmem:[#allocation9 + $0x290] sm:$0xff]
    %v261 = vld [vmem:[#allocation9 + $0x298] sm:$0xff]
    %v262 = vld [vmem:[#allocation9 + $0x2a0] sm:$0xff]
    %v263 = vld [vmem:[#allocation9 + $0x2a8] sm:$0xff]
    %v264 = vld [vmem:[#allocation9 + $0x2b0] sm:$0xff]
    %v265 = vld [vmem:[#allocation9 + $0x2b8] sm:$0xff]
    %v266 = vld [vmem:[#allocation9 + $0x2c0] sm:$0xff]
    %v267 = vld [vmem:[#allocation9 + $0x2c8] sm:$0xff]
    %v268 = vld [vmem:[#allocation9 + $0x2d0] sm:$0xff]
    %v269 = vld [vmem:[#allocation9 + $0x2d8] sm:$0xff]
    %v270 = vld [vmem:[#allocation9 + $0x2e0] sm:$0xff]
    %v271 = vld [vmem:[#allocation9 + $0x2e8] sm:$0xff]
    %v272 = vld [vmem:[#allocation9 + $0x2f0] sm:$0xff]
    %v273 = vld [vmem:[#allocation9 + $0x2f8] sm:$0xff]
    %v274 = vld [vmem:[#allocation9 + $0x300] sm:$0xff]
    %v275 = vld [vmem:[#allocation9 + $0x308] sm:$0xff]
    %v276 = vld [vmem:[#allocation9 + $0x310] sm:$0xff]
    %v277 = vld [vmem:[#allocation9 + $0x318] sm:$0xff]
    %v278 = vld [vmem:[#allocation9 + $0x320] sm:$0xff]
    %v279 = vld [vmem:[#allocation9 + $0x328] sm:$0xff]
    %v280 = vld [vmem:[#allocation9 + $0x330] sm:$0xff]
    %v281 = vld [vmem:[#allocation9 + $0x338] sm:$0xff]
    %v282 = vld [vmem:[#allocation9 + $0x340] sm:$0xff]
    %v283 = vld [vmem:[#allocation9 + $0x348] sm:$0xff]
    %v284 = vld [vmem:[#allocation9 + $0x350] sm:$0xff]
    %v285 = vld [vmem:[#allocation9 + $0x358] sm:$0xff]
    %v286 = vld [vmem:[#allocation9 + $0x360] sm:$0xff]
    %v287 = vld [vmem:[#allocation9 + $0x368] sm:$0xff]
    %v288 = vld [vmem:[#allocation9 + $0x370] sm:$0xff]
    %v289 = vld [vmem:[#allocation9 + $0x378] sm:$0xff]
    %v290 = vld [vmem:[#allocation9 + $0x380] sm:$0xff]
    %v291 = vld [vmem:[#allocation9 + $0x388] sm:$0xff]
    %v292 = vld [vmem:[#allocation9 + $0x390] sm:$0xff]
    %v293 = vld [vmem:[#allocation9 + $0x398] sm:$0xff]
    %v294 = vld [vmem:[#allocation9 + $0x3a0] sm:$0xff]
    %v295 = vld [vmem:[#allocation9 + $0x3a8] sm:$0xff]
    %v296 = vld [vmem:[#allocation9 + $0x3b0] sm:$0xff]
    %v297 = vld [vmem:[#allocation9 + $0x3b8] sm:$0xff]
    %v298 = vld [vmem:[#allocation9 + $0x3c0] sm:$0xff]
    %v299 = vld [vmem:[#allocation9 + $0x3c8] sm:$0xff]
    %v300 = vld [vmem:[#allocation9 + $0x3d0] sm:$0xff]
    %v301 = vld [vmem:[#allocation9 + $0x3d8] sm:$0xff]
    %v302 = vld [vmem:[#allocation9 + $0x3e0] sm:$0xff]
    %v303 = vld [vmem:[#allocation9 + $0x3e8] sm:$0xff]
    %v304 = vld [vmem:[#allocation9 + $0x3f0] sm:$0xff]
    %v305 = vld [vmem:[#allocation9 + $0x3f8] sm:$0xff]
    %v306 = vld [vmem:[#allocation9 + $0x400] sm:$0xff]
    %v307 = vld [vmem:[#allocation9 + $0x408] sm:$0xff]
    %v308 = vld [vmem:[#allocation9 + $0x410] sm:$0xff]
    %v309 = vld [vmem:[#allocation9 + $0x418] sm:$0xff]
    %v310 = vld [vmem:[#allocation9 + $0x420] sm:$0xff]
    %v311 = vld [vmem:[#allocation9 + $0x428] sm:$0xff]
    %v312 = vld [vmem:[#allocation9 + $0x430] sm:$0xff]
    %v313 = vld [vmem:[#allocation9 + $0x438] sm:$0xff]
    %v314 = vld [vmem:[#allocation9 + $0x440] sm:$0xff]
    %v315 = vld [vmem:[#allocation9 + $0x448] sm:$0xff]
    %v316 = vld [vmem:[#allocation9 + $0x450] sm:$0xff]
    %v317 = vld [vmem:[#allocation9 + $0x458] sm:$0xff]
    %v318 = vld [vmem:[#allocation9 + $0x460] sm:$0xff]
    %v319 = vld [vmem:[#allocation9 + $0x468] sm:$0xff]
    %v320 = vld [vmem:[#allocation9 + $0x470] sm:$0xff]
    %v321 = vld [vmem:[#allocation9 + $0x478] sm:$0xff]
    %v322 = vld [vmem:[#allocation9 + $0x480] sm:$0xff]
    %v323 = vld [vmem:[#allocation9 + $0x488] sm:$0xff]
    %v324 = vld [vmem:[#allocation9 + $0x490] sm:$0xff]
    %v325 = vld [vmem:[#allocation9 + $0x498] sm:$0xff]
    %v326 = vld [vmem:[#allocation9 + $0x4a0] sm:$0xff]
    %v327 = vld [vmem:[#allocation9 + $0x4a8] sm:$0xff]
    %v328 = vld [vmem:[#allocation9 + $0x4b0] sm:$0xff]
    %v329 = vld [vmem:[#allocation9 + $0x4b8] sm:$0xff]
    %v330 = vld [vmem:[#allocation9 + $0x4c0] sm:$0xff]
    %v331 = vld [vmem:[#allocation9 + $0x4c8] sm:$0xff]
    %v332 = vld [vmem:[#allocation9 + $0x4d0] sm:$0xff]
    %v333 = vld [vmem:[#allocation9 + $0x4d8] sm:$0xff]
    %v334 = vld [vmem:[#allocation9 + $0x4e0] sm:$0xff]
    %v335 = vld [vmem:[#allocation9 + $0x4e8] sm:$0xff]
    %v336 = vld [vmem:[#allocation9 + $0x4f0] sm:$0xff]
    %v337 = vld [vmem:[#allocation9 + $0x4f8] sm:$0xff]
    %v338 = vld [vmem:[#allocation9 + $0x500] sm:$0xff]
    %v339 = vld [vmem:[#allocation9 + $0x508] sm:$0xff]
    %v340 = vld [vmem:[#allocation9 + $0x510] sm:$0xff]
    %v341 = vld [vmem:[#allocation9 + $0x518] sm:$0xff]
    %v342 = vld [vmem:[#allocation9 + $0x520] sm:$0xff]
    %v343 = vld [vmem:[#allocation9 + $0x528] sm:$0xff]
    %v344 = vld [vmem:[#allocation9 + $0x530] sm:$0xff]
    %v345 = vld [vmem:[#allocation9 + $0x538] sm:$0xff]
    %v346 = vld [vmem:[#allocation9 + $0x540] sm:$0xff]
    %v347 = vld [vmem:[#allocation9 + $0x548] sm:$0xff]
    %v348 = vld [vmem:[#allocation9 + $0x550] sm:$0xff]
    %v349 = vld [vmem:[#allocation9 + $0x558] sm:$0xff]
    %v350 = vld [vmem:[#allocation9 + $0x560] sm:$0xff]
    %v351 = vld [vmem:[#allocation9 + $0x568] sm:$0xff]
    %v352 = vld [vmem:[#allocation9 + $0x570] sm:$0xff]
    %v353 = vld [vmem:[#allocation9 + $0x578] sm:$0xff]
    %v354 = vld [vmem:[#allocation9 + $0x580] sm:$0xff]
    %v355 = vld [vmem:[#allocation9 + $0x588] sm:$0xff]
    %v356 = vld [vmem:[#allocation9 + $0x590] sm:$0xff]
    %v357 = vld [vmem:[#allocation9 + $0x598] sm:$0xff]
    %v358 = vld [vmem:[#allocation9 + $0x5a0] sm:$0xff]
    %v359 = vld [vmem:[#allocation9 + $0x5a8] sm:$0xff]
    %v360 = vld [vmem:[#allocation9 + $0x5b0] sm:$0xff]
    %v361 = vld [vmem:[#allocation9 + $0x5b8] sm:$0xff]
    %v362 = vld [vmem:[#allocation9 + $0x5c0] sm:$0xff]
    %v363 = vld [vmem:[#allocation9 + $0x5c8] sm:$0xff]
    %v364 = vld [vmem:[#allocation9 + $0x5d0] sm:$0xff]
    %v365 = vld [vmem:[#allocation9 + $0x5d8] sm:$0xff]
    %v366 = vld [vmem:[#allocation9 + $0x5e0] sm:$0xff]
    %v367 = vld [vmem:[#allocation9 + $0x5e8] sm:$0xff]
    %v368 = vld [vmem:[#allocation9 + $0x5f0] sm:$0xff]
    %v369 = vld [vmem:[#allocation9 + $0x5f8] sm:$0xff]
    %v370 = vld [vmem:[%s5] sm:$0x3f]
    %v372 = vlaneseq
    %v373 = vshrl.u32 %v372, 7
    %v374 = vsub.s32 0, %v373
    %v375 = vrot.slane %v370, %v374
    %v376 = vlaneseq
    %v377 = vshrl.u32 %v376, 7
    %v378 = vsub.s32 1, %v377
    %v379 = vrot.slane %v370, %v378
    %v380 = vlaneseq
    %v381 = vshrl.u32 %v380, 7
    %v382 = vsub.s32 2, %v381
    %v383 = vrot.slane %v370, %v382
    %v384 = vlaneseq
    %v385 = vshrl.u32 %v384, 7
    %v386 = vsub.s32 3, %v385
    %v387 = vrot.slane %v370, %v386
    %v388 = vlaneseq
    %v389 = vshrl.u32 %v388, 7
    %v390 = vsub.s32 4, %v389
    %v391 = vrot.slane %v370, %v390
    %v392 = vlaneseq
    %v393 = vshrl.u32 %v392, 7
    %v394 = vsub.s32 5, %v393
    %v395 = vrot.slane %v370, %v394
    %402 = vmatprep.subr.mxu0 %v269
    %403 = vmatpush1.msra.mxu0 %v268
    %404 = vmatprep.subr.mxu0 %v263
    %405 = vmatpush1.msra.mxu0 %v262
    %406 = vmatprep.subr.mxu0 %v257
    %407 = vmatpush1.msra.mxu0 %v256
    %408 = vmatprep.subr.mxu0 %v251
    %409 = vmatpush1.msra.mxu0 %v250
    %410 = vmatprep.subr.mxu0 %v245
    %411 = vmatpush1.msra.mxu0 %v244
    %412 = vmatprep.subr.mxu0 %v239
    %413 = vmatpush1.msra.mxu0 %v238
    %414 = vmatprep.subr.mxu0 %v233
    %415 = vmatpush1.msra.mxu0 %v232
    %416 = vmatprep.subr.mxu0 %v227
    %417 = vmatpush1.msra.mxu0 %v226
    %418 = vmatprep.subr.mxu0 %v221
    %419 = vmatpush1.msra.mxu0 %v220
    %420 = vmatprep.subr.mxu0 %v215
    %421 = vmatpush1.msra.mxu0 %v214
    %422 = vmatprep.subr.mxu0 %v209
    %423 = vmatpush1.msra.mxu0 %v208
    %424 = vmatprep.subr.mxu0 %v203
    %425 = vmatpush1.msra.mxu0 %v202
    %426 = vmatprep.subr.mxu0 %v197
    %427 = vmatpush1.msra.mxu0 %v196
    %428 = vmatprep.subr.mxu0 %v191
    %429 = vmatpush1.msra.mxu0 %v190
    %430 = vmatprep.subr.mxu0 %v185
    %431 = vmatpush1.msra.mxu0 %v184
    %432 = vmatprep.subr.mxu0 %v179
    %433 = vmatpush1.msra.mxu0 %v178
    %434 = vmatprep.subr.mxu0 %v365
    %435 = vmatpush2.msra.mxu0 %v364
    %436 = vmatprep.subr.mxu0 %v359
    %437 = vmatpush2.msra.mxu0 %v358
    %438 = vmatprep.subr.mxu0 %v353
    %439 = vmatpush2.msra.mxu0 %v352
    %440 = vmatprep.subr.mxu0 %v347
    %441 = vmatpush2.msra.mxu0 %v346
    %442 = vmatprep.subr.mxu0 %v341
    %443 = vmatpush2.msra.mxu0 %v340
    %444 = vmatprep.subr.mxu0 %v335
    %445 = vmatpush2.msra.mxu0 %v334
    %446 = vmatprep.subr.mxu0 %v329
    %447 = vmatpush2.msra.mxu0 %v328
    %448 = vmatprep.subr.mxu0 %v323
    %449 = vmatpush2.msra.mxu0 %v322
    %450 = vmatprep.subr.mxu0 %v317
    %451 = vmatpush2.msra.mxu0 %v316
    %452 = vmatprep.subr.mxu0 %v311
    %453 = vmatpush2.msra.mxu0 %v310
    %454 = vmatprep.subr.mxu0 %v305
    %455 = vmatpush2.msra.mxu0 %v304
    %456 = vmatprep.subr.mxu0 %v299
    %457 = vmatpush2.msra.mxu0 %v298
    %458 = vmatprep.subr.mxu0 %v293
    %459 = vmatpush2.msra.mxu0 %v292
    %460 = vmatprep.subr.mxu0 %v287
    %461 = vmatpush2.msra.mxu0 %v286
    %462 = vmatprep.subr.mxu0 %v281
    %463 = vmatpush2.msra.mxu0 %v280
    %464 = vmatprep.subr.mxu0 %v275
    %465 = vmatpush2.msra.mxu0 %v274
    %466 = vmatprep.mubr.f32.mxu0 %v177
    %467 = vmatmul.mubr.f32.gmra.mxu0 %v176
    %v468 = vpop.f32.mrf.mxu0
    %v469 = vadd.f32 %v375, %v468
    %v470 = vpop.f32.mrf.mxu0
    %v471 = vadd.f32 %v379, %v470
    %472 = vdwg.mxu0
    %473 = vmatprep.subr.mxu0 %v271
    %474 = vmatpush1.msra.mxu0 %v270
    %475 = vmatprep.subr.mxu0 %v265
    %476 = vmatpush1.msra.mxu0 %v264
    %477 = vmatprep.subr.mxu0 %v259
    %478 = vmatpush1.msra.mxu0 %v258
    %479 = vmatprep.subr.mxu0 %v253
    %480 = vmatpush1.msra.mxu0 %v252
    %481 = vmatprep.subr.mxu0 %v247
    %482 = vmatpush1.msra.mxu0 %v246
    %483 = vmatprep.subr.mxu0 %v241
    %484 = vmatpush1.msra.mxu0 %v240
    %485 = vmatprep.subr.mxu0 %v235
    %486 = vmatpush1.msra.mxu0 %v234
    %487 = vmatprep.subr.mxu0 %v229
    %488 = vmatpush1.msra.mxu0 %v228
    %489 = vmatprep.subr.mxu0 %v223
    %490 = vmatpush1.msra.mxu0 %v222
    %491 = vmatprep.subr.mxu0 %v217
    %492 = vmatpush1.msra.mxu0 %v216
    %493 = vmatprep.subr.mxu0 %v211
    %494 = vmatpush1.msra.mxu0 %v210
    %495 = vmatprep.subr.mxu0 %v205
    %496 = vmatpush1.msra.mxu0 %v204
    %497 = vmatprep.subr.mxu0 %v199
    %498 = vmatpush1.msra.mxu0 %v198
    %499 = vmatprep.subr.mxu0 %v193
    %500 = vmatpush1.msra.mxu0 %v192
    %501 = vmatprep.subr.mxu0 %v187
    %502 = vmatpush1.msra.mxu0 %v186
    %503 = vmatprep.subr.mxu0 %v181
    %504 = vmatpush1.msra.mxu0 %v180
    %505 = vmatprep.subr.mxu0 %v367
    %506 = vmatpush2.msra.mxu0 %v366
    %507 = vmatprep.subr.mxu0 %v361
    %508 = vmatpush2.msra.mxu0 %v360
    %509 = vmatprep.subr.mxu0 %v355
    %510 = vmatpush2.msra.mxu0 %v354
    %511 = vmatprep.subr.mxu0 %v349
    %512 = vmatpush2.msra.mxu0 %v348
    %513 = vmatprep.subr.mxu0 %v343
    %514 = vmatpush2.msra.mxu0 %v342
    %515 = vmatprep.subr.mxu0 %v337
    %516 = vmatpush2.msra.mxu0 %v336
    %517 = vmatprep.subr.mxu0 %v331
    %518 = vmatpush2.msra.mxu0 %v330
    %519 = vmatprep.subr.mxu0 %v325
    %520 = vmatpush2.msra.mxu0 %v324
    %521 = vmatprep.subr.mxu0 %v319
    %522 = vmatpush2.msra.mxu0 %v318
    %523 = vmatprep.subr.mxu0 %v313
    %524 = vmatpush2.msra.mxu0 %v312
    %525 = vmatprep.subr.mxu0 %v307
    %526 = vmatpush2.msra.mxu0 %v306
    %527 = vmatprep.subr.mxu0 %v301
    %528 = vmatpush2.msra.mxu0 %v300
    %529 = vmatprep.subr.mxu0 %v295
    %530 = vmatpush2.msra.mxu0 %v294
    %531 = vmatprep.subr.mxu0 %v289
    %532 = vmatpush2.msra.mxu0 %v288
    %533 = vmatprep.subr.mxu0 %v283
    %534 = vmatpush2.msra.mxu0 %v282
    %535 = vmatprep.subr.mxu0 %v277
    %536 = vmatpush2.msra.mxu0 %v276
    %537 = vmatprep.mubr.f32.mxu0 %v177
    %538 = vmatmul.mubr.f32.gmra.mxu0 %v176
    %v539 = vpop.f32.mrf.mxu0
    %v540 = vadd.f32 %v383, %v539
    %v541 = vpop.f32.mrf.mxu0
    %v542 = vadd.f32 %v387, %v541
    %543 = vdwg.mxu0
    %544 = vmatprep.subr.mxu0 %v273
    %545 = vmatpush1.msra.mxu0 %v272
    %546 = vmatprep.subr.mxu0 %v267
    %547 = vmatpush1.msra.mxu0 %v266
    %548 = vmatprep.subr.mxu0 %v261
    %549 = vmatpush1.msra.mxu0 %v260
    %550 = vmatprep.subr.mxu0 %v255
    %551 = vmatpush1.msra.mxu0 %v254
    %552 = vmatprep.subr.mxu0 %v249
    %553 = vmatpush1.msra.mxu0 %v248
    %554 = vmatprep.subr.mxu0 %v243
    %555 = vmatpush1.msra.mxu0 %v242
    %556 = vmatprep.subr.mxu0 %v237
    %557 = vmatpush1.msra.mxu0 %v236
    %558 = vmatprep.subr.mxu0 %v231
    %559 = vmatpush1.msra.mxu0 %v230
    %560 = vmatprep.subr.mxu0 %v225
    %561 = vmatpush1.msra.mxu0 %v224
    %562 = vmatprep.subr.mxu0 %v219
    %563 = vmatpush1.msra.mxu0 %v218
    %564 = vmatprep.subr.mxu0 %v213
    %565 = vmatpush1.msra.mxu0 %v212
    %566 = vmatprep.subr.mxu0 %v207
    %567 = vmatpush1.msra.mxu0 %v206
    %568 = vmatprep.subr.mxu0 %v201
    %569 = vmatpush1.msra.mxu0 %v200
    %570 = vmatprep.subr.mxu0 %v195
    %571 = vmatpush1.msra.mxu0 %v194
    %572 = vmatprep.subr.mxu0 %v189
    %573 = vmatpush1.msra.mxu0 %v188
    %574 = vmatprep.subr.mxu0 %v183
    %575 = vmatpush1.msra.mxu0 %v182
    %576 = vmatprep.subr.mxu0 %v369
    %577 = vmatpush2.msra.mxu0 %v368
    %578 = vmatprep.subr.mxu0 %v363
    %579 = vmatpush2.msra.mxu0 %v362
    %580 = vmatprep.subr.mxu0 %v357
    %581 = vmatpush2.msra.mxu0 %v356
    %582 = vmatprep.subr.mxu0 %v351
    %583 = vmatpush2.msra.mxu0 %v350
    %584 = vmatprep.subr.mxu0 %v345
    %585 = vmatpush2.msra.mxu0 %v344
    %586 = vmatprep.subr.mxu0 %v339
    %587 = vmatpush2.msra.mxu0 %v338
    %588 = vmatprep.subr.mxu0 %v333
    %589 = vmatpush2.msra.mxu0 %v332
    %590 = vmatprep.subr.mxu0 %v327
    %591 = vmatpush2.msra.mxu0 %v326
    %592 = vmatprep.subr.mxu0 %v321
    %593 = vmatpush2.msra.mxu0 %v320
    %594 = vmatprep.subr.mxu0 %v315
    %595 = vmatpush2.msra.mxu0 %v314
    %596 = vmatprep.subr.mxu0 %v309
    %597 = vmatpush2.msra.mxu0 %v308
    %598 = vmatprep.subr.mxu0 %v303
    %599 = vmatpush2.msra.mxu0 %v302
    %600 = vmatprep.subr.mxu0 %v297
    %601 = vmatpush2.msra.mxu0 %v296
    %602 = vmatprep.subr.mxu0 %v291
    %603 = vmatpush2.msra.mxu0 %v290
    %604 = vmatprep.subr.mxu0 %v285
    %605 = vmatpush2.msra.mxu0 %v284
    %606 = vmatprep.subr.mxu0 %v279
    %607 = vmatpush2.msra.mxu0 %v278
    %608 = vmatprep.mubr.f32.mxu0 %v177
    %609 = vmatmul.mubr.f32.gmra.mxu0 %v176
    %v610 = vpop.f32.mrf.mxu0
    %v611 = vadd.f32 %v391, %v610
    %v612 = vpop.f32.mrf.mxu0
    %v613 = vadd.f32 %v395, %v612
    %614 = vdwg.mxu0
    %615 = vst [vmem:[#allocation3] sm:$0x3f] %v469
    %616 = vst [vmem:[#allocation3 + $0x8] sm:$0x3f] %v471
    %617 = vst [vmem:[#allocation3 + $0x10] sm:$0x3f] %v540
    %618 = vst [vmem:[#allocation3 + $0x18] sm:$0x3f] %v542
    %619 = vst [vmem:[#allocation3 + $0x20] sm:$0x3f] %v611
    %620 = vst [vmem:[#allocation3 + $0x28] sm:$0x3f] %v613
    %v621 = vld [vmem:[%s2] sm:$0x3]
    %v622 = vld [vmem:[#allocation10] sm:$0xff]
    %v623 = vld [vmem:[#allocation10 + $0x8] sm:$0xff]
    %v624 = vld [vmem:[#allocation10 + $0x10] sm:$0xff]
    %v625 = vld [vmem:[#allocation10 + $0x18] sm:$0xff]
    %v626 = vld [vmem:[#allocation10 + $0x20] sm:$0xff]
    %v627 = vld [vmem:[#allocation10 + $0x28] sm:$0xff]
    %v628 = vld [vmem:[#allocation10 + $0x30] sm:$0xff]
    %v629 = vld [vmem:[#allocation10 + $0x38] sm:$0xff]
    %v630 = vld [vmem:[#allocation10 + $0x40] sm:$0xff]
    %v631 = vld [vmem:[#allocation10 + $0x48] sm:$0xff]
    %v632 = vld [vmem:[#allocation10 + $0x50] sm:$0xff]
    %v633 = vld [vmem:[#allocation10 + $0x58] sm:$0xff]
    %v634 = vld [vmem:[#allocation10 + $0x60] sm:$0xff]
    %v635 = vld [vmem:[#allocation10 + $0x68] sm:$0xff]
    %v636 = vld [vmem:[#allocation10 + $0x70] sm:$0xff]
    %v637 = vld [vmem:[#allocation10 + $0x78] sm:$0xff]
    %v638 = vld [vmem:[#allocation10 + $0x80] sm:$0xff]
    %v639 = vld [vmem:[#allocation10 + $0x88] sm:$0xff]
    %v640 = vld [vmem:[#allocation10 + $0x90] sm:$0xff]
    %v641 = vld [vmem:[#allocation10 + $0x98] sm:$0xff]
    %v642 = vld [vmem:[#allocation10 + $0xa0] sm:$0xff]
    %v643 = vld [vmem:[#allocation10 + $0xa8] sm:$0xff]
    %v644 = vld [vmem:[#allocation10 + $0xb0] sm:$0xff]
    %v645 = vld [vmem:[#allocation10 + $0xb8] sm:$0xff]
    %v646 = vld [vmem:[#allocation10 + $0xc0] sm:$0xff]
    %v647 = vld [vmem:[#allocation10 + $0xc8] sm:$0xff]
    %v648 = vld [vmem:[#allocation10 + $0xd0] sm:$0xff]
    %v649 = vld [vmem:[#allocation10 + $0xd8] sm:$0xff]
    %v650 = vld [vmem:[#allocation10 + $0xe0] sm:$0xff]
    %v651 = vld [vmem:[#allocation10 + $0xe8] sm:$0xff]
    %v652 = vld [vmem:[#allocation10 + $0xf0] sm:$0xff]
    %v653 = vld [vmem:[#allocation10 + $0xf8] sm:$0xff]
    %v654 = vld [vmem:[#allocation10 + $0x100] sm:$0xff]
    %v655 = vld [vmem:[#allocation10 + $0x108] sm:$0xff]
    %v656 = vld [vmem:[#allocation10 + $0x110] sm:$0xff]
    %v657 = vld [vmem:[#allocation10 + $0x118] sm:$0xff]
    %v658 = vld [vmem:[#allocation10 + $0x120] sm:$0xff]
    %v659 = vld [vmem:[#allocation10 + $0x128] sm:$0xff]
    %v660 = vld [vmem:[#allocation10 + $0x130] sm:$0xff]
    %v661 = vld [vmem:[#allocation10 + $0x138] sm:$0xff]
    %v662 = vld [vmem:[#allocation10 + $0x140] sm:$0xff]
    %v663 = vld [vmem:[#allocation10 + $0x148] sm:$0xff]
    %v664 = vld [vmem:[#allocation10 + $0x150] sm:$0xff]
    %v665 = vld [vmem:[#allocation10 + $0x158] sm:$0xff]
    %v666 = vld [vmem:[#allocation10 + $0x160] sm:$0xff]
    %v667 = vld [vmem:[#allocation10 + $0x168] sm:$0xff]
    %v668 = vld [vmem:[#allocation10 + $0x170] sm:$0xff]
    %v669 = vld [vmem:[#allocation10 + $0x178] sm:$0xff]
    %v670 = vld [vmem:[#allocation10 + $0x180] sm:$0xff]
    %v671 = vld [vmem:[#allocation10 + $0x188] sm:$0xff]
    %v672 = vld [vmem:[#allocation10 + $0x190] sm:$0xff]
    %v673 = vld [vmem:[#allocation10 + $0x198] sm:$0xff]
    %v674 = vld [vmem:[#allocation10 + $0x1a0] sm:$0xff]
    %v675 = vld [vmem:[#allocation10 + $0x1a8] sm:$0xff]
    %v676 = vld [vmem:[#allocation10 + $0x1b0] sm:$0xff]
    %v677 = vld [vmem:[#allocation10 + $0x1b8] sm:$0xff]
    %v678 = vld [vmem:[#allocation10 + $0x1c0] sm:$0xff]
    %v679 = vld [vmem:[#allocation10 + $0x1c8] sm:$0xff]
    %v680 = vld [vmem:[#allocation10 + $0x1d0] sm:$0xff]
    %v681 = vld [vmem:[#allocation10 + $0x1d8] sm:$0xff]
    %v682 = vld [vmem:[#allocation10 + $0x1e0] sm:$0xff]
    %v683 = vld [vmem:[#allocation10 + $0x1e8] sm:$0xff]
    %v684 = vld [vmem:[#allocation10 + $0x1f0] sm:$0xff]
    %v685 = vld [vmem:[#allocation10 + $0x1f8] sm:$0xff]
    %v686 = vld [vmem:[#allocation10 + $0x200] sm:$0xff]
    %v687 = vld [vmem:[#allocation10 + $0x208] sm:$0xff]
    %v688 = vld [vmem:[#allocation10 + $0x210] sm:$0xff]
    %v689 = vld [vmem:[#allocation10 + $0x218] sm:$0xff]
    %v690 = vld [vmem:[#allocation10 + $0x220] sm:$0xff]
    %v691 = vld [vmem:[#allocation10 + $0x228] sm:$0xff]
    %v692 = vld [vmem:[#allocation10 + $0x230] sm:$0xff]
    %v693 = vld [vmem:[#allocation10 + $0x238] sm:$0xff]
    %v694 = vld [vmem:[#allocation10 + $0x240] sm:$0xff]
    %v695 = vld [vmem:[#allocation10 + $0x248] sm:$0xff]
    %v696 = vld [vmem:[#allocation10 + $0x250] sm:$0xff]
    %v697 = vld [vmem:[#allocation10 + $0x258] sm:$0xff]
    %v698 = vld [vmem:[#allocation10 + $0x260] sm:$0xff]
    %v699 = vld [vmem:[#allocation10 + $0x268] sm:$0xff]
    %v700 = vld [vmem:[#allocation10 + $0x270] sm:$0xff]
    %v701 = vld [vmem:[#allocation10 + $0x278] sm:$0xff]
    %v702 = vld [vmem:[#allocation10 + $0x280] sm:$0xff]
    %v703 = vld [vmem:[#allocation10 + $0x288] sm:$0xff]
    %v704 = vld [vmem:[#allocation10 + $0x290] sm:$0xff]
    %v705 = vld [vmem:[#allocation10 + $0x298] sm:$0xff]
    %v706 = vld [vmem:[#allocation10 + $0x2a0] sm:$0xff]
    %v707 = vld [vmem:[#allocation10 + $0x2a8] sm:$0xff]
    %v708 = vld [vmem:[#allocation10 + $0x2b0] sm:$0xff]
    %v709 = vld [vmem:[#allocation10 + $0x2b8] sm:$0xff]
    %v710 = vld [vmem:[#allocation10 + $0x2c0] sm:$0xff]
    %v711 = vld [vmem:[#allocation10 + $0x2c8] sm:$0xff]
    %v712 = vld [vmem:[#allocation10 + $0x2d0] sm:$0xff]
    %v713 = vld [vmem:[#allocation10 + $0x2d8] sm:$0xff]
    %v714 = vld [vmem:[#allocation10 + $0x2e0] sm:$0xff]
    %v715 = vld [vmem:[#allocation10 + $0x2e8] sm:$0xff]
    %v716 = vld [vmem:[#allocation10 + $0x2f0] sm:$0xff]
    %v717 = vld [vmem:[#allocation10 + $0x2f8] sm:$0xff]
    %v718 = vld [vmem:[#allocation10 + $0x300] sm:$0xff]
    %v719 = vld [vmem:[#allocation10 + $0x308] sm:$0xff]
    %v720 = vld [vmem:[#allocation10 + $0x310] sm:$0xff]
    %v721 = vld [vmem:[#allocation10 + $0x318] sm:$0xff]
    %v722 = vld [vmem:[#allocation10 + $0x320] sm:$0xff]
    %v723 = vld [vmem:[#allocation10 + $0x328] sm:$0xff]
    %v724 = vld [vmem:[#allocation10 + $0x330] sm:$0xff]
    %v725 = vld [vmem:[#allocation10 + $0x338] sm:$0xff]
    %v726 = vld [vmem:[#allocation10 + $0x340] sm:$0xff]
    %v727 = vld [vmem:[#allocation10 + $0x348] sm:$0xff]
    %v728 = vld [vmem:[#allocation10 + $0x350] sm:$0xff]
    %v729 = vld [vmem:[#allocation10 + $0x358] sm:$0xff]
    %v730 = vld [vmem:[#allocation10 + $0x360] sm:$0xff]
    %v731 = vld [vmem:[#allocation10 + $0x368] sm:$0xff]
    %v732 = vld [vmem:[#allocation10 + $0x370] sm:$0xff]
    %v733 = vld [vmem:[#allocation10 + $0x378] sm:$0xff]
    %v734 = vld [vmem:[#allocation10 + $0x380] sm:$0xff]
    %v735 = vld [vmem:[#allocation10 + $0x388] sm:$0xff]
    %v736 = vld [vmem:[#allocation10 + $0x390] sm:$0xff]
    %v737 = vld [vmem:[#allocation10 + $0x398] sm:$0xff]
    %v738 = vld [vmem:[#allocation10 + $0x3a0] sm:$0xff]
    %v739 = vld [vmem:[#allocation10 + $0x3a8] sm:$0xff]
    %v740 = vld [vmem:[#allocation10 + $0x3b0] sm:$0xff]
    %v741 = vld [vmem:[#allocation10 + $0x3b8] sm:$0xff]
    %v742 = vld [vmem:[#allocation10 + $0x3c0] sm:$0xff]
    %v743 = vld [vmem:[#allocation10 + $0x3c8] sm:$0xff]
    %v744 = vld [vmem:[#allocation10 + $0x3d0] sm:$0xff]
    %v745 = vld [vmem:[#allocation10 + $0x3d8] sm:$0xff]
    %v746 = vld [vmem:[#allocation10 + $0x3e0] sm:$0xff]
    %v747 = vld [vmem:[#allocation10 + $0x3e8] sm:$0xff]
    %v748 = vld [vmem:[#allocation10 + $0x3f0] sm:$0xff]
    %v749 = vld [vmem:[#allocation10 + $0x3f8] sm:$0xff]
    %v750 = vld [vmem:[#allocation10 + $0x400] sm:$0xff]
    %v751 = vld [vmem:[#allocation10 + $0x408] sm:$0xff]
    %v752 = vld [vmem:[#allocation10 + $0x410] sm:$0xff]
    %v753 = vld [vmem:[#allocation10 + $0x418] sm:$0xff]
    %v754 = vld [vmem:[#allocation10 + $0x420] sm:$0xff]
    %v755 = vld [vmem:[#allocation10 + $0x428] sm:$0xff]
    %v756 = vld [vmem:[#allocation10 + $0x430] sm:$0xff]
    %v757 = vld [vmem:[#allocation10 + $0x438] sm:$0xff]
    %v758 = vld [vmem:[#allocation10 + $0x440] sm:$0xff]
    %v759 = vld [vmem:[#allocation10 + $0x448] sm:$0xff]
    %v760 = vld [vmem:[#allocation10 + $0x450] sm:$0xff]
    %v761 = vld [vmem:[#allocation10 + $0x458] sm:$0xff]
    %v762 = vld [vmem:[#allocation10 + $0x460] sm:$0xff]
    %v763 = vld [vmem:[#allocation10 + $0x468] sm:$0xff]
    %v764 = vld [vmem:[#allocation10 + $0x470] sm:$0xff]
    %v765 = vld [vmem:[#allocation10 + $0x478] sm:$0xff]
    %v766 = vld [vmem:[#allocation10 + $0x480] sm:$0xff]
    %v767 = vld [vmem:[#allocation10 + $0x488] sm:$0xff]
    %v768 = vld [vmem:[#allocation10 + $0x490] sm:$0xff]
    %v769 = vld [vmem:[#allocation10 + $0x498] sm:$0xff]
    %v770 = vld [vmem:[#allocation10 + $0x4a0] sm:$0xff]
    %v771 = vld [vmem:[#allocation10 + $0x4a8] sm:$0xff]
    %v772 = vld [vmem:[#allocation10 + $0x4b0] sm:$0xff]
    %v773 = vld [vmem:[#allocation10 + $0x4b8] sm:$0xff]
    %v774 = vld [vmem:[#allocation10 + $0x4c0] sm:$0xff]
    %v775 = vld [vmem:[#allocation10 + $0x4c8] sm:$0xff]
    %v776 = vld [vmem:[#allocation10 + $0x4d0] sm:$0xff]
    %v777 = vld [vmem:[#allocation10 + $0x4d8] sm:$0xff]
    %v778 = vld [vmem:[#allocation10 + $0x4e0] sm:$0xff]
    %v779 = vld [vmem:[#allocation10 + $0x4e8] sm:$0xff]
    %v780 = vld [vmem:[#allocation10 + $0x4f0] sm:$0xff]
    %v781 = vld [vmem:[#allocation10 + $0x4f8] sm:$0xff]
    %v782 = vld [vmem:[#allocation10 + $0x500] sm:$0xff]
    %v783 = vld [vmem:[#allocation10 + $0x508] sm:$0xff]
    %v784 = vld [vmem:[#allocation10 + $0x510] sm:$0xff]
    %v785 = vld [vmem:[#allocation10 + $0x518] sm:$0xff]
    %v786 = vld [vmem:[#allocation10 + $0x520] sm:$0xff]
    %v787 = vld [vmem:[#allocation10 + $0x528] sm:$0xff]
    %v788 = vld [vmem:[#allocation10 + $0x530] sm:$0xff]
    %v789 = vld [vmem:[#allocation10 + $0x538] sm:$0xff]
    %v790 = vld [vmem:[#allocation10 + $0x540] sm:$0xff]
    %v791 = vld [vmem:[#allocation10 + $0x548] sm:$0xff]
    %v792 = vld [vmem:[#allocation10 + $0x550] sm:$0xff]
    %v793 = vld [vmem:[#allocation10 + $0x558] sm:$0xff]
    %v794 = vld [vmem:[#allocation10 + $0x560] sm:$0xff]
    %v795 = vld [vmem:[#allocation10 + $0x568] sm:$0xff]
    %v796 = vld [vmem:[#allocation10 + $0x570] sm:$0xff]
    %v797 = vld [vmem:[#allocation10 + $0x578] sm:$0xff]
    %v798 = vld [vmem:[#allocation10 + $0x580] sm:$0xff]
    %v799 = vld [vmem:[#allocation10 + $0x588] sm:$0xff]
    %v800 = vld [vmem:[#allocation10 + $0x590] sm:$0xff]
    %v801 = vld [vmem:[#allocation10 + $0x598] sm:$0xff]
    %v802 = vld [vmem:[#allocation10 + $0x5a0] sm:$0xff]
    %v803 = vld [vmem:[#allocation10 + $0x5a8] sm:$0xff]
    %v804 = vld [vmem:[#allocation10 + $0x5b0] sm:$0xff]
    %v805 = vld [vmem:[#allocation10 + $0x5b8] sm:$0xff]
    %v806 = vld [vmem:[#allocation10 + $0x5c0] sm:$0xff]
    %v807 = vld [vmem:[#allocation10 + $0x5c8] sm:$0xff]
    %v808 = vld [vmem:[#allocation10 + $0x5d0] sm:$0xff]
    %v809 = vld [vmem:[#allocation10 + $0x5d8] sm:$0xff]
    %v810 = vld [vmem:[#allocation10 + $0x5e0] sm:$0xff]
    %v811 = vld [vmem:[#allocation10 + $0x5e8] sm:$0xff]
    %v812 = vld [vmem:[#allocation10 + $0x5f0] sm:$0xff]
    %v813 = vld [vmem:[#allocation10 + $0x5f8] sm:$0xff]
    %v814 = vld [vmem:[#allocation12] sm:$0x3f]
    %v816 = vlaneseq
    %v817 = vshrl.u32 %v816, 7
    %v818 = vsub.s32 0, %v817
    %v819 = vrot.slane %v621, %v818
    %v820 = vlaneseq
    %v821 = vshrl.u32 %v820, 7
    %v822 = vsub.s32 1, %v821
    %v823 = vrot.slane %v621, %v822
    %v827 = vlaneseq
    %v828 = vshrl.u32 %v827, 7
    %v829 = vsub.s32 0, %v828
    %v830 = vrot.slane %v814, %v829
    %v831 = vlaneseq
    %v832 = vshrl.u32 %v831, 7
    %v833 = vsub.s32 1, %v832
    %v834 = vrot.slane %v814, %v833
    %v835 = vlaneseq
    %v836 = vshrl.u32 %v835, 7
    %v837 = vsub.s32 2, %v836
    %v838 = vrot.slane %v814, %v837
    %v839 = vlaneseq
    %v840 = vshrl.u32 %v839, 7
    %v841 = vsub.s32 3, %v840
    %v842 = vrot.slane %v814, %v841
    %v843 = vlaneseq
    %v844 = vshrl.u32 %v843, 7
    %v845 = vsub.s32 4, %v844
    %v846 = vrot.slane %v814, %v845
    %v847 = vlaneseq
    %v848 = vshrl.u32 %v847, 7
    %v849 = vsub.s32 5, %v848
    %v850 = vrot.slane %v814, %v849
    %857 = vmatprep.subr.mxu0 %v713
    %858 = vmatpush1.msra.mxu0 %v712
    %859 = vmatprep.subr.mxu0 %v707
    %860 = vmatpush1.msra.mxu0 %v706
    %861 = vmatprep.subr.mxu0 %v701
    %862 = vmatpush1.msra.mxu0 %v700
    %863 = vmatprep.subr.mxu0 %v695
    %864 = vmatpush1.msra.mxu0 %v694
    %865 = vmatprep.subr.mxu0 %v689
    %866 = vmatpush1.msra.mxu0 %v688
    %867 = vmatprep.subr.mxu0 %v683
    %868 = vmatpush1.msra.mxu0 %v682
    %869 = vmatprep.subr.mxu0 %v677
    %870 = vmatpush1.msra.mxu0 %v676
    %871 = vmatprep.subr.mxu0 %v671
    %872 = vmatpush1.msra.mxu0 %v670
    %873 = vmatprep.subr.mxu0 %v665
    %874 = vmatpush1.msra.mxu0 %v664
    %875 = vmatprep.subr.mxu0 %v659
    %876 = vmatpush1.msra.mxu0 %v658
    %877 = vmatprep.subr.mxu0 %v653
    %878 = vmatpush1.msra.mxu0 %v652
    %879 = vmatprep.subr.mxu0 %v647
    %880 = vmatpush1.msra.mxu0 %v646
    %881 = vmatprep.subr.mxu0 %v641
    %882 = vmatpush1.msra.mxu0 %v640
    %883 = vmatprep.subr.mxu0 %v635
    %884 = vmatpush1.msra.mxu0 %v634
    %885 = vmatprep.subr.mxu0 %v629
    %886 = vmatpush1.msra.mxu0 %v628
    %887 = vmatprep.subr.mxu0 %v623
    %888 = vmatpush1.msra.mxu0 %v622
    %889 = vmatprep.subr.mxu0 %v809
    %890 = vmatpush2.msra.mxu0 %v808
    %891 = vmatprep.subr.mxu0 %v803
    %892 = vmatpush2.msra.mxu0 %v802
    %893 = vmatprep.subr.mxu0 %v797
    %894 = vmatpush2.msra.mxu0 %v796
    %895 = vmatprep.subr.mxu0 %v791
    %896 = vmatpush2.msra.mxu0 %v790
    %897 = vmatprep.subr.mxu0 %v785
    %898 = vmatpush2.msra.mxu0 %v784
    %899 = vmatprep.subr.mxu0 %v779
    %900 = vmatpush2.msra.mxu0 %v778
    %901 = vmatprep.subr.mxu0 %v773
    %902 = vmatpush2.msra.mxu0 %v772
    %903 = vmatprep.subr.mxu0 %v767
    %904 = vmatpush2.msra.mxu0 %v766
    %905 = vmatprep.subr.mxu0 %v761
    %906 = vmatpush2.msra.mxu0 %v760
    %907 = vmatprep.subr.mxu0 %v755
    %908 = vmatpush2.msra.mxu0 %v754
    %909 = vmatprep.subr.mxu0 %v749
    %910 = vmatpush2.msra.mxu0 %v748
    %911 = vmatprep.subr.mxu0 %v743
    %912 = vmatpush2.msra.mxu0 %v742
    %913 = vmatprep.subr.mxu0 %v737
    %914 = vmatpush2.msra.mxu0 %v736
    %915 = vmatprep.subr.mxu0 %v731
    %916 = vmatpush2.msra.mxu0 %v730
    %917 = vmatprep.subr.mxu0 %v725
    %918 = vmatpush2.msra.mxu0 %v724
    %919 = vmatprep.subr.mxu0 %v719
    %920 = vmatpush2.msra.mxu0 %v718
    %921 = vmatprep.mubr.f32.mxu0 %v823
    %922 = vmatmul.mubr.f32.gmra.mxu0 %v819
    %v923 = vpop.f32.mrf.mxu0
    %v924 = vadd.f32 %v830, %v923
    %v925 = vpop.f32.mrf.mxu0
    %v926 = vadd.f32 %v834, %v925
    %927 = vdwg.mxu0
    %928 = vmatprep.subr.mxu0 %v715
    %929 = vmatpush1.msra.mxu0 %v714
    %930 = vmatprep.subr.mxu0 %v709
    %931 = vmatpush1.msra.mxu0 %v708
    %932 = vmatprep.subr.mxu0 %v703
    %933 = vmatpush1.msra.mxu0 %v702
    %934 = vmatprep.subr.mxu0 %v697
    %935 = vmatpush1.msra.mxu0 %v696
    %936 = vmatprep.subr.mxu0 %v691
    %937 = vmatpush1.msra.mxu0 %v690
    %938 = vmatprep.subr.mxu0 %v685
    %939 = vmatpush1.msra.mxu0 %v684
    %940 = vmatprep.subr.mxu0 %v679
    %941 = vmatpush1.msra.mxu0 %v678
    %942 = vmatprep.subr.mxu0 %v673
    %943 = vmatpush1.msra.mxu0 %v672
    %944 = vmatprep.subr.mxu0 %v667
    %945 = vmatpush1.msra.mxu0 %v666
    %946 = vmatprep.subr.mxu0 %v661
    %947 = vmatpush1.msra.mxu0 %v660
    %948 = vmatprep.subr.mxu0 %v655
    %949 = vmatpush1.msra.mxu0 %v654
    %950 = vmatprep.subr.mxu0 %v649
    %951 = vmatpush1.msra.mxu0 %v648
    %952 = vmatprep.subr.mxu0 %v643
    %953 = vmatpush1.msra.mxu0 %v642
    %954 = vmatprep.subr.mxu0 %v637
    %955 = vmatpush1.msra.mxu0 %v636
    %956 = vmatprep.subr.mxu0 %v631
    %957 = vmatpush1.msra.mxu0 %v630
    %958 = vmatprep.subr.mxu0 %v625
    %959 = vmatpush1.msra.mxu0 %v624
    %960 = vmatprep.subr.mxu0 %v811
    %961 = vmatpush2.msra.mxu0 %v810
    %962 = vmatprep.subr.mxu0 %v805
    %963 = vmatpush2.msra.mxu0 %v804
    %964 = vmatprep.subr.mxu0 %v799
    %965 = vmatpush2.msra.mxu0 %v798
    %966 = vmatprep.subr.mxu0 %v793
    %967 = vmatpush2.msra.mxu0 %v792
    %968 = vmatprep.subr.mxu0 %v787
    %969 = vmatpush2.msra.mxu0 %v786
    %970 = vmatprep.subr.mxu0 %v781
    %971 = vmatpush2.msra.mxu0 %v780
    %972 = vmatprep.subr.mxu0 %v775
    %973 = vmatpush2.msra.mxu0 %v774
    %974 = vmatprep.subr.mxu0 %v769
    %975 = vmatpush2.msra.mxu0 %v768
    %976 = vmatprep.subr.mxu0 %v763
    %977 = vmatpush2.msra.mxu0 %v762
    %978 = vmatprep.subr.mxu0 %v757
    %979 = vmatpush2.msra.mxu0 %v756
    %980 = vmatprep.subr.mxu0 %v751
    %981 = vmatpush2.msra.mxu0 %v750
    %982 = vmatprep.subr.mxu0 %v745
    %983 = vmatpush2.msra.mxu0 %v744
    %984 = vmatprep.subr.mxu0 %v739
    %985 = vmatpush2.msra.mxu0 %v738
    %986 = vmatprep.subr.mxu0 %v733
    %987 = vmatpush2.msra.mxu0 %v732
    %988 = vmatprep.subr.mxu0 %v727
    %989 = vmatpush2.msra.mxu0 %v726
    %990 = vmatprep.subr.mxu0 %v721
    %991 = vmatpush2.msra.mxu0 %v720
    %992 = vmatprep.mubr.f32.mxu0 %v823
    %993 = vmatmul.mubr.f32.gmra.mxu0 %v819
    %v994 = vpop.f32.mrf.mxu0
    %v995 = vadd.f32 %v838, %v994
    %v996 = vpop.f32.mrf.mxu0
    %v997 = vadd.f32 %v842, %v996
    %998 = vdwg.mxu0
    %999 = vmatprep.subr.mxu0 %v717
    %1000 = vmatpush1.msra.mxu0 %v716
    %1001 = vmatprep.subr.mxu0 %v711
    %1002 = vmatpush1.msra.mxu0 %v710
    %1003 = vmatprep.subr.mxu0 %v705
    %1004 = vmatpush1.msra.mxu0 %v704
    %1005 = vmatprep.subr.mxu0 %v699
    %1006 = vmatpush1.msra.mxu0 %v698
    %1007 = vmatprep.subr.mxu0 %v693
    %1008 = vmatpush1.msra.mxu0 %v692
    %1009 = vmatprep.subr.mxu0 %v687
    %1010 = vmatpush1.msra.mxu0 %v686
    %1011 = vmatprep.subr.mxu0 %v681
    %1012 = vmatpush1.msra.mxu0 %v680
    %1013 = vmatprep.subr.mxu0 %v675
    %1014 = vmatpush1.msra.mxu0 %v674
    %1015 = vmatprep.subr.mxu0 %v669
    %1016 = vmatpush1.msra.mxu0 %v668
    %1017 = vmatprep.subr.mxu0 %v663
    %1018 = vmatpush1.msra.mxu0 %v662
    %1019 = vmatprep.subr.mxu0 %v657
    %1020 = vmatpush1.msra.mxu0 %v656
    %1021 = vmatprep.subr.mxu0 %v651
    %1022 = vmatpush1.msra.mxu0 %v650
    %1023 = vmatprep.subr.mxu0 %v645
    %1024 = vmatpush1.msra.mxu0 %v644
    %1025 = vmatprep.subr.mxu0 %v639
    %1026 = vmatpush1.msra.mxu0 %v638
    %1027 = vmatprep.subr.mxu0 %v633
    %1028 = vmatpush1.msra.mxu0 %v632
    %1029 = vmatprep.subr.mxu0 %v627
    %1030 = vmatpush1.msra.mxu0 %v626
    %1031 = vmatprep.subr.mxu0 %v813
    %1032 = vmatpush2.msra.mxu0 %v812
    %1033 = vmatprep.subr.mxu0 %v807
    %1034 = vmatpush2.msra.mxu0 %v806
    %1035 = vmatprep.subr.mxu0 %v801
    %1036 = vmatpush2.msra.mxu0 %v800
    %1037 = vmatprep.subr.mxu0 %v795
    %1038 = vmatpush2.msra.mxu0 %v794
    %1039 = vmatprep.subr.mxu0 %v789
    %1040 = vmatpush2.msra.mxu0 %v788
    %1041 = vmatprep.subr.mxu0 %v783
    %1042 = vmatpush2.msra.mxu0 %v782
    %1043 = vmatprep.subr.mxu0 %v777
    %1044 = vmatpush2.msra.mxu0 %v776
    %1045 = vmatprep.subr.mxu0 %v771
    %1046 = vmatpush2.msra.mxu0 %v770
    %1047 = vmatprep.subr.mxu0 %v765
    %1048 = vmatpush2.msra.mxu0 %v764
    %1049 = vmatprep.subr.mxu0 %v759
    %1050 = vmatpush2.msra.mxu0 %v758
    %1051 = vmatprep.subr.mxu0 %v753
    %1052 = vmatpush2.msra.mxu0 %v752
    %1053 = vmatprep.subr.mxu0 %v747
    %1054 = vmatpush2.msra.mxu0 %v746
    %1055 = vmatprep.subr.mxu0 %v741
    %1056 = vmatpush2.msra.mxu0 %v740
    %1057 = vmatprep.subr.mxu0 %v735
    %1058 = vmatpush2.msra.mxu0 %v734
    %1059 = vmatprep.subr.mxu0 %v729
    %1060 = vmatpush2.msra.mxu0 %v728
    %1061 = vmatprep.subr.mxu0 %v723
    %1062 = vmatpush2.msra.mxu0 %v722
    %1063 = vmatprep.mubr.f32.mxu0 %v823
    %1064 = vmatmul.mubr.f32.gmra.mxu0 %v819
    %v1065 = vpop.f32.mrf.mxu0
    %v1066 = vadd.f32 %v846, %v1065
    %v1067 = vpop.f32.mrf.mxu0
    %v1068 = vadd.f32 %v850, %v1067
    %1069 = vdwg.mxu0
    %v1070 = vld [vmem:[#allocation3] ss:$8 sm:$0xf]
    %v1071 = vld [vmem:[#allocation3] ss:$8 sm:$0x30]
    %v1072 = vor.u32 %v1070, %v1071
    %v1075 = vcombine.low %v924, %v926
    %v1077 = vunpack.c.l.s4 1966171168
    %v1078 = vunpack.c.0.s8 %v1077
    %v1079 = vlaneseq
    %v1080 = vshrl.u32 %v1079, 7
    %v1081 = vsub.s32 %v1078, %v1080
    %v1082 = vrot.slane %v1075, %v1081
    %v1084 = vunpack.c.l.s4 1966171168
    %v1085 = vunpack.c.0.s8 %v1084
    %v1086 = vlaneseq
    %v1087 = vshrl.u32 %v1086, 7
    %v1088 = vsub.s32 %v1085, %v1087
    %v1089 = vrot.slane %v1082, %v1088
    %v1091 = vadd.f32 %v1072, %v1089
    %v1092 = vxor.u32 %v1091, 2147483648
    %v1093 = vmul.f32 %v1092, 1.442695
    %v1094 = vpow.pop %v1093
    %v1095 = vadd.f32 %v1094, 1.0
    %v1096 = vrcp.pop %v1095
    %v1097 = vmul.f32 1.0, %v1096
    %v1099 = vrot.slane %v1072, 2
    %v1103 = vcombine.low %v995, %v997
    %v1105 = vunpack.c.l.s4 1966171168
    %v1106 = vunpack.c.0.s8 %v1105
    %v1107 = vlaneseq
    %v1108 = vshrl.u32 %v1107, 7
    %v1109 = vsub.s32 %v1106, %v1108
    %v1110 = vrot.slane %v1103, %v1109
    %v1112 = vunpack.c.l.s4 1966171168
    %v1113 = vunpack.c.0.s8 %v1112
    %v1114 = vlaneseq
    %v1115 = vshrl.u32 %v1114, 7
    %v1116 = vsub.s32 %v1113, %v1115
    %v1117 = vrot.slane %v1110, %v1116
    %v1119 = vadd.f32 %v1099, %v1117
    %v1120 = vxor.u32 %v1119, 2147483648
    %v1121 = vmul.f32 %v1120, 1.442695
    %v1122 = vpow.pop %v1121
    %v1123 = vadd.f32 %v1122, 1.0
    %v1124 = vrcp.pop %v1123
    %v1125 = vmul.f32 1.0, %v1124
    %v1128 = vcombine.low %v1066, %v1068
    %v1130 = vunpack.c.l.s4 1966171168
    %v1131 = vunpack.c.0.s8 %v1130
    %v1132 = vlaneseq
    %v1133 = vshrl.u32 %v1132, 7
    %v1134 = vsub.s32 %v1131, %v1133
    %v1135 = vrot.slane %v1128, %v1134
    %v1137 = vunpack.c.l.s4 1966171168
    %v1138 = vunpack.c.0.s8 %v1137
    %v1139 = vlaneseq
    %v1140 = vshrl.u32 %v1139, 7
    %v1141 = vsub.s32 %v1138, %v1140
    %v1142 = vrot.slane %v1135, %v1141
    %v1144 = vmul.f32 %v1097, %v1142
    %v1145 = vrot.slane %v1072, 4
    %v1147 = vadd.f32 %v1145, %v1144
    %v1148 = vtanh.pop %v1147
    %v1149 = vsub.f32 1.0, %v1125
    %v1150 = vmul.f32 %v1149, %v1148
    %v1151 = vmul.f32 %v1125, %v621
    %v1152 = vadd.f32 %v1150, %v1151
    %v1153 = vlaneseq
    %vm1154 = vcmp.ge.s32.totalorder %v1153, 0
    %vm1155 = vcmp.lt.s32.totalorder %v1153, 256
    %vm1156 = vmand %vm1154, %vm1155
    %1157 = vst.msk [vmem:[#allocation13] ss:$8 sm:$0x3] %vm1156, %v1152
    %1158 = vst.msk [vmem:[#allocation13] ss:$8 sm:$0x0] %vm1156, %v1152
    %v1159 = vld [vmem:[#allocation10] sm:$0xff]
    %v1160 = vld [vmem:[#allocation10 + $0x8] sm:$0xff]
    %v1161 = vld [vmem:[#allocation10 + $0x10] sm:$0xff]
    %v1162 = vld [vmem:[#allocation10 + $0x18] sm:$0xff]
    %v1163 = vld [vmem:[#allocation10 + $0x20] sm:$0xff]
    %v1164 = vld [vmem:[#allocation10 + $0x28] sm:$0xff]
    %v1165 = vld [vmem:[#allocation10 + $0x30] sm:$0xff]
    %v1166 = vld [vmem:[#allocation10 + $0x38] sm:$0xff]
    %v1167 = vld [vmem:[#allocation10 + $0x40] sm:$0xff]
    %v1168 = vld [vmem:[#allocation10 + $0x48] sm:$0xff]
    %v1169 = vld [vmem:[#allocation10 + $0x50] sm:$0xff]
    %v1170 = vld [vmem:[#allocation10 + $0x58] sm:$0xff]
    %v1171 = vld [vmem:[#allocation10 + $0x60] sm:$0xff]
    %v1172 = vld [vmem:[#allocation10 + $0x68] sm:$0xff]
    %v1173 = vld [vmem:[#allocation10 + $0x70] sm:$0xff]
    %v1174 = vld [vmem:[#allocation10 + $0x78] sm:$0xff]
    %v1175 = vld [vmem:[#allocation10 + $0x80] sm:$0xff]
    %v1176 = vld [vmem:[#allocation10 + $0x88] sm:$0xff]
    %v1177 = vld [vmem:[#allocation10 + $0x90] sm:$0xff]
    %v1178 = vld [vmem:[#allocation10 + $0x98] sm:$0xff]
    %v1179 = vld [vmem:[#allocation10 + $0xa0] sm:$0xff]
    %v1180 = vld [vmem:[#allocation10 + $0xa8] sm:$0xff]
    %v1181 = vld [vmem:[#allocation10 + $0xb0] sm:$0xff]
    %v1182 = vld [vmem:[#allocation10 + $0xb8] sm:$0xff]
    %v1183 = vld [vmem:[#allocation10 + $0xc0] sm:$0xff]
    %v1184 = vld [vmem:[#allocation10 + $0xc8] sm:$0xff]
    %v1185 = vld [vmem:[#allocation10 + $0xd0] sm:$0xff]
    %v1186 = vld [vmem:[#allocation10 + $0xd8] sm:$0xff]
    %v1187 = vld [vmem:[#allocation10 + $0xe0] sm:$0xff]
    %v1188 = vld [vmem:[#allocation10 + $0xe8] sm:$0xff]
    %v1189 = vld [vmem:[#allocation10 + $0xf0] sm:$0xff]
    %v1190 = vld [vmem:[#allocation10 + $0xf8] sm:$0xff]
    %v1191 = vld [vmem:[#allocation10 + $0x100] sm:$0xff]
    %v1192 = vld [vmem:[#allocation10 + $0x108] sm:$0xff]
    %v1193 = vld [vmem:[#allocation10 + $0x110] sm:$0xff]
    %v1194 = vld [vmem:[#allocation10 + $0x118] sm:$0xff]
    %v1195 = vld [vmem:[#allocation10 + $0x120] sm:$0xff]
    %v1196 = vld [vmem:[#allocation10 + $0x128] sm:$0xff]
    %v1197 = vld [vmem:[#allocation10 + $0x130] sm:$0xff]
    %v1198 = vld [vmem:[#allocation10 + $0x138] sm:$0xff]
    %v1199 = vld [vmem:[#allocation10 + $0x140] sm:$0xff]
    %v1200 = vld [vmem:[#allocation10 + $0x148] sm:$0xff]
    %v1201 = vld [vmem:[#allocation10 + $0x150] sm:$0xff]
    %v1202 = vld [vmem:[#allocation10 + $0x158] sm:$0xff]
    %v1203 = vld [vmem:[#allocation10 + $0x160] sm:$0xff]
    %v1204 = vld [vmem:[#allocation10 + $0x168] sm:$0xff]
    %v1205 = vld [vmem:[#allocation10 + $0x170] sm:$0xff]
    %v1206 = vld [vmem:[#allocation10 + $0x178] sm:$0xff]
    %v1207 = vld [vmem:[#allocation10 + $0x180] sm:$0xff]
    %v1208 = vld [vmem:[#allocation10 + $0x188] sm:$0xff]
    %v1209 = vld [vmem:[#allocation10 + $0x190] sm:$0xff]
    %v1210 = vld [vmem:[#allocation10 + $0x198] sm:$0xff]
    %v1211 = vld [vmem:[#allocation10 + $0x1a0] sm:$0xff]
    %v1212 = vld [vmem:[#allocation10 + $0x1a8] sm:$0xff]
    %v1213 = vld [vmem:[#allocation10 + $0x1b0] sm:$0xff]
    %v1214 = vld [vmem:[#allocation10 + $0x1b8] sm:$0xff]
    %v1215 = vld [vmem:[#allocation10 + $0x1c0] sm:$0xff]
    %v1216 = vld [vmem:[#allocation10 + $0x1c8] sm:$0xff]
    %v1217 = vld [vmem:[#allocation10 + $0x1d0] sm:$0xff]
    %v1218 = vld [vmem:[#allocation10 + $0x1d8] sm:$0xff]
    %v1219 = vld [vmem:[#allocation10 + $0x1e0] sm:$0xff]
    %v1220 = vld [vmem:[#allocation10 + $0x1e8] sm:$0xff]
    %v1221 = vld [vmem:[#allocation10 + $0x1f0] sm:$0xff]
    %v1222 = vld [vmem:[#allocation10 + $0x1f8] sm:$0xff]
    %v1223 = vld [vmem:[#allocation10 + $0x200] sm:$0xff]
    %v1224 = vld [vmem:[#allocation10 + $0x208] sm:$0xff]
    %v1225 = vld [vmem:[#allocation10 + $0x210] sm:$0xff]
    %v1226 = vld [vmem:[#allocation10 + $0x218] sm:$0xff]
    %v1227 = vld [vmem:[#allocation10 + $0x220] sm:$0xff]
    %v1228 = vld [vmem:[#allocation10 + $0x228] sm:$0xff]
    %v1229 = vld [vmem:[#allocation10 + $0x230] sm:$0xff]
    %v1230 = vld [vmem:[#allocation10 + $0x238] sm:$0xff]
    %v1231 = vld [vmem:[#allocation10 + $0x240] sm:$0xff]
    %v1232 = vld [vmem:[#allocation10 + $0x248] sm:$0xff]
    %v1233 = vld [vmem:[#allocation10 + $0x250] sm:$0xff]
    %v1234 = vld [vmem:[#allocation10 + $0x258] sm:$0xff]
    %v1235 = vld [vmem:[#allocation10 + $0x260] sm:$0xff]
    %v1236 = vld [vmem:[#allocation10 + $0x268] sm:$0xff]
    %v1237 = vld [vmem:[#allocation10 + $0x270] sm:$0xff]
    %v1238 = vld [vmem:[#allocation10 + $0x278] sm:$0xff]
    %v1239 = vld [vmem:[#allocation10 + $0x280] sm:$0xff]
    %v1240 = vld [vmem:[#allocation10 + $0x288] sm:$0xff]
    %v1241 = vld [vmem:[#allocation10 + $0x290] sm:$0xff]
    %v1242 = vld [vmem:[#allocation10 + $0x298] sm:$0xff]
    %v1243 = vld [vmem:[#allocation10 + $0x2a0] sm:$0xff]
    %v1244 = vld [vmem:[#allocation10 + $0x2a8] sm:$0xff]
    %v1245 = vld [vmem:[#allocation10 + $0x2b0] sm:$0xff]
    %v1246 = vld [vmem:[#allocation10 + $0x2b8] sm:$0xff]
    %v1247 = vld [vmem:[#allocation10 + $0x2c0] sm:$0xff]
    %v1248 = vld [vmem:[#allocation10 + $0x2c8] sm:$0xff]
    %v1249 = vld [vmem:[#allocation10 + $0x2d0] sm:$0xff]
    %v1250 = vld [vmem:[#allocation10 + $0x2d8] sm:$0xff]
    %v1251 = vld [vmem:[#allocation10 + $0x2e0] sm:$0xff]
    %v1252 = vld [vmem:[#allocation10 + $0x2e8] sm:$0xff]
    %v1253 = vld [vmem:[#allocation10 + $0x2f0] sm:$0xff]
    %v1254 = vld [vmem:[#allocation10 + $0x2f8] sm:$0xff]
    %v1255 = vld [vmem:[#allocation10 + $0x300] sm:$0xff]
    %v1256 = vld [vmem:[#allocation10 + $0x308] sm:$0xff]
    %v1257 = vld [vmem:[#allocation10 + $0x310] sm:$0xff]
    %v1258 = vld [vmem:[#allocation10 + $0x318] sm:$0xff]
    %v1259 = vld [vmem:[#allocation10 + $0x320] sm:$0xff]
    %v1260 = vld [vmem:[#allocation10 + $0x328] sm:$0xff]
    %v1261 = vld [vmem:[#allocation10 + $0x330] sm:$0xff]
    %v1262 = vld [vmem:[#allocation10 + $0x338] sm:$0xff]
    %v1263 = vld [vmem:[#allocation10 + $0x340] sm:$0xff]
    %v1264 = vld [vmem:[#allocation10 + $0x348] sm:$0xff]
    %v1265 = vld [vmem:[#allocation10 + $0x350] sm:$0xff]
    %v1266 = vld [vmem:[#allocation10 + $0x358] sm:$0xff]
    %v1267 = vld [vmem:[#allocation10 + $0x360] sm:$0xff]
    %v1268 = vld [vmem:[#allocation10 + $0x368] sm:$0xff]
    %v1269 = vld [vmem:[#allocation10 + $0x370] sm:$0xff]
    %v1270 = vld [vmem:[#allocation10 + $0x378] sm:$0xff]
    %v1271 = vld [vmem:[#allocation10 + $0x380] sm:$0xff]
    %v1272 = vld [vmem:[#allocation10 + $0x388] sm:$0xff]
    %v1273 = vld [vmem:[#allocation10 + $0x390] sm:$0xff]
    %v1274 = vld [vmem:[#allocation10 + $0x398] sm:$0xff]
    %v1275 = vld [vmem:[#allocation10 + $0x3a0] sm:$0xff]
    %v1276 = vld [vmem:[#allocation10 + $0x3a8] sm:$0xff]
    %v1277 = vld [vmem:[#allocation10 + $0x3b0] sm:$0xff]
    %v1278 = vld [vmem:[#allocation10 + $0x3b8] sm:$0xff]
    %v1279 = vld [vmem:[#allocation10 + $0x3c0] sm:$0xff]
    %v1280 = vld [vmem:[#allocation10 + $0x3c8] sm:$0xff]
    %v1281 = vld [vmem:[#allocation10 + $0x3d0] sm:$0xff]
    %v1282 = vld [vmem:[#allocation10 + $0x3d8] sm:$0xff]
    %v1283 = vld [vmem:[#allocation10 + $0x3e0] sm:$0xff]
    %v1284 = vld [vmem:[#allocation10 + $0x3e8] sm:$0xff]
    %v1285 = vld [vmem:[#allocation10 + $0x3f0] sm:$0xff]
    %v1286 = vld [vmem:[#allocation10 + $0x3f8] sm:$0xff]
    %v1287 = vld [vmem:[#allocation10 + $0x400] sm:$0xff]
    %v1288 = vld [vmem:[#allocation10 + $0x408] sm:$0xff]
    %v1289 = vld [vmem:[#allocation10 + $0x410] sm:$0xff]
    %v1290 = vld [vmem:[#allocation10 + $0x418] sm:$0xff]
    %v1291 = vld [vmem:[#allocation10 + $0x420] sm:$0xff]
    %v1292 = vld [vmem:[#allocation10 + $0x428] sm:$0xff]
    %v1293 = vld [vmem:[#allocation10 + $0x430] sm:$0xff]
    %v1294 = vld [vmem:[#allocation10 + $0x438] sm:$0xff]
    %v1295 = vld [vmem:[#allocation10 + $0x440] sm:$0xff]
    %v1296 = vld [vmem:[#allocation10 + $0x448] sm:$0xff]
    %v1297 = vld [vmem:[#allocation10 + $0x450] sm:$0xff]
    %v1298 = vld [vmem:[#allocation10 + $0x458] sm:$0xff]
    %v1299 = vld [vmem:[#allocation10 + $0x460] sm:$0xff]
    %v1300 = vld [vmem:[#allocation10 + $0x468] sm:$0xff]
    %v1301 = vld [vmem:[#allocation10 + $0x470] sm:$0xff]
    %v1302 = vld [vmem:[#allocation10 + $0x478] sm:$0xff]
    %v1303 = vld [vmem:[#allocation10 + $0x480] sm:$0xff]
    %v1304 = vld [vmem:[#allocation10 + $0x488] sm:$0xff]
    %v1305 = vld [vmem:[#allocation10 + $0x490] sm:$0xff]
    %v1306 = vld [vmem:[#allocation10 + $0x498] sm:$0xff]
    %v1307 = vld [vmem:[#allocation10 + $0x4a0] sm:$0xff]
    %v1308 = vld [vmem:[#allocation10 + $0x4a8] sm:$0xff]
    %v1309 = vld [vmem:[#allocation10 + $0x4b0] sm:$0xff]
    %v1310 = vld [vmem:[#allocation10 + $0x4b8] sm:$0xff]
    %v1311 = vld [vmem:[#allocation10 + $0x4c0] sm:$0xff]
    %v1312 = vld [vmem:[#allocation10 + $0x4c8] sm:$0xff]
    %v1313 = vld [vmem:[#allocation10 + $0x4d0] sm:$0xff]
    %v1314 = vld [vmem:[#allocation10 + $0x4d8] sm:$0xff]
    %v1315 = vld [vmem:[#allocation10 + $0x4e0] sm:$0xff]
    %v1316 = vld [vmem:[#allocation10 + $0x4e8] sm:$0xff]
    %v1317 = vld [vmem:[#allocation10 + $0x4f0] sm:$0xff]
    %v1318 = vld [vmem:[#allocation10 + $0x4f8] sm:$0xff]
    %v1319 = vld [vmem:[#allocation10 + $0x500] sm:$0xff]
    %v1320 = vld [vmem:[#allocation10 + $0x508] sm:$0xff]
    %v1321 = vld [vmem:[#allocation10 + $0x510] sm:$0xff]
    %v1322 = vld [vmem:[#allocation10 + $0x518] sm:$0xff]
    %v1323 = vld [vmem:[#allocation10 + $0x520] sm:$0xff]
    %v1324 = vld [vmem:[#allocation10 + $0x528] sm:$0xff]
    %v1325 = vld [vmem:[#allocation10 + $0x530] sm:$0xff]
    %v1326 = vld [vmem:[#allocation10 + $0x538] sm:$0xff]
    %v1327 = vld [vmem:[#allocation10 + $0x540] sm:$0xff]
    %v1328 = vld [vmem:[#allocation10 + $0x548] sm:$0xff]
    %v1329 = vld [vmem:[#allocation10 + $0x550] sm:$0xff]
    %v1330 = vld [vmem:[#allocation10 + $0x558] sm:$0xff]
    %v1331 = vld [vmem:[#allocation10 + $0x560] sm:$0xff]
    %v1332 = vld [vmem:[#allocation10 + $0x568] sm:$0xff]
    %v1333 = vld [vmem:[#allocation10 + $0x570] sm:$0xff]
    %v1334 = vld [vmem:[#allocation10 + $0x578] sm:$0xff]
    %v1335 = vld [vmem:[#allocation10 + $0x580] sm:$0xff]
    %v1336 = vld [vmem:[#allocation10 + $0x588] sm:$0xff]
    %v1337 = vld [vmem:[#allocation10 + $0x590] sm:$0xff]
    %v1338 = vld [vmem:[#allocation10 + $0x598] sm:$0xff]
    %v1339 = vld [vmem:[#allocation10 + $0x5a0] sm:$0xff]
    %v1340 = vld [vmem:[#allocation10 + $0x5a8] sm:$0xff]
    %v1341 = vld [vmem:[#allocation10 + $0x5b0] sm:$0xff]
    %v1342 = vld [vmem:[#allocation10 + $0x5b8] sm:$0xff]
    %v1343 = vld [vmem:[#allocation10 + $0x5c0] sm:$0xff]
    %v1344 = vld [vmem:[#allocation10 + $0x5c8] sm:$0xff]
    %v1345 = vld [vmem:[#allocation10 + $0x5d0] sm:$0xff]
    %v1346 = vld [vmem:[#allocation10 + $0x5d8] sm:$0xff]
    %v1347 = vld [vmem:[#allocation10 + $0x5e0] sm:$0xff]
    %v1348 = vld [vmem:[#allocation10 + $0x5e8] sm:$0xff]
    %v1349 = vld [vmem:[#allocation10 + $0x5f0] sm:$0xff]
    %v1350 = vld [vmem:[#allocation10 + $0x5f8] sm:$0xff]
    %v1351 = vld [vmem:[#allocation12] sm:$0x3f]
    %v1353 = vlaneseq
    %v1354 = vshrl.u32 %v1353, 7
    %v1355 = vsub.s32 0, %v1354
    %v1356 = vrot.slane %v1152, %v1355
    %v1357 = vlaneseq
    %v1358 = vshrl.u32 %v1357, 7
    %v1359 = vsub.s32 1, %v1358
    %v1360 = vrot.slane %v1152, %v1359
    %v1364 = vlaneseq
    %v1365 = vshrl.u32 %v1364, 7
    %v1366 = vsub.s32 0, %v1365
    %v1367 = vrot.slane %v1351, %v1366
    %v1368 = vlaneseq
    %v1369 = vshrl.u32 %v1368, 7
    %v1370 = vsub.s32 1, %v1369
    %v1371 = vrot.slane %v1351, %v1370
    %v1372 = vlaneseq
    %v1373 = vshrl.u32 %v1372, 7
    %v1374 = vsub.s32 2, %v1373
    %v1375 = vrot.slane %v1351, %v1374
    %v1376 = vlaneseq
    %v1377 = vshrl.u32 %v1376, 7
    %v1378 = vsub.s32 3, %v1377
    %v1379 = vrot.slane %v1351, %v1378
    %v1380 = vlaneseq
    %v1381 = vshrl.u32 %v1380, 7
    %v1382 = vsub.s32 4, %v1381
    %v1383 = vrot.slane %v1351, %v1382
    %v1384 = vlaneseq
    %v1385 = vshrl.u32 %v1384, 7
    %v1386 = vsub.s32 5, %v1385
    %v1387 = vrot.slane %v1351, %v1386
    %1394 = vmatprep.subr.mxu0 %v1250
    %1395 = vmatpush1.msra.mxu0 %v1249
    %1396 = vmatprep.subr.mxu0 %v1244
    %1397 = vmatpush1.msra.mxu0 %v1243
    %1398 = vmatprep.subr.mxu0 %v1238
    %1399 = vmatpush1.msra.mxu0 %v1237
    %1400 = vmatprep.subr.mxu0 %v1232
    %1401 = vmatpush1.msra.mxu0 %v1231
    %1402 = vmatprep.subr.mxu0 %v1226
    %1403 = vmatpush1.msra.mxu0 %v1225
    %1404 = vmatprep.subr.mxu0 %v1220
    %1405 = vmatpush1.msra.mxu0 %v1219
    %1406 = vmatprep.subr.mxu0 %v1214
    %1407 = vmatpush1.msra.mxu0 %v1213
    %1408 = vmatprep.subr.mxu0 %v1208
    %1409 = vmatpush1.msra.mxu0 %v1207
    %1410 = vmatprep.subr.mxu0 %v1202
    %1411 = vmatpush1.msra.mxu0 %v1201
    %1412 = vmatprep.subr.mxu0 %v1196
    %1413 = vmatpush1.msra.mxu0 %v1195
    %1414 = vmatprep.subr.mxu0 %v1190
    %1415 = vmatpush1.msra.mxu0 %v1189
    %1416 = vmatprep.subr.mxu0 %v1184
    %1417 = vmatpush1.msra.mxu0 %v1183
    %1418 = vmatprep.subr.mxu0 %v1178
    %1419 = vmatpush1.msra.mxu0 %v1177
    %1420 = vmatprep.subr.mxu0 %v1172
    %1421 = vmatpush1.msra.mxu0 %v1171
    %1422 = vmatprep.subr.mxu0 %v1166
    %1423 = vmatpush1.msra.mxu0 %v1165
    %1424 = vmatprep.subr.mxu0 %v1160
    %1425 = vmatpush1.msra.mxu0 %v1159
    %1426 = vmatprep.subr.mxu0 %v1346
    %1427 = vmatpush2.msra.mxu0 %v1345
    %1428 = vmatprep.subr.mxu0 %v1340
    %1429 = vmatpush2.msra.mxu0 %v1339
    %1430 = vmatprep.subr.mxu0 %v1334
    %1431 = vmatpush2.msra.mxu0 %v1333
    %1432 = vmatprep.subr.mxu0 %v1328
    %1433 = vmatpush2.msra.mxu0 %v1327
    %1434 = vmatprep.subr.mxu0 %v1322
    %1435 = vmatpush2.msra.mxu0 %v1321
    %1436 = vmatprep.subr.mxu0 %v1316
    %1437 = vmatpush2.msra.mxu0 %v1315
    %1438 = vmatprep.subr.mxu0 %v1310
    %1439 = vmatpush2.msra.mxu0 %v1309
    %1440 = vmatprep.subr.mxu0 %v1304
    %1441 = vmatpush2.msra.mxu0 %v1303
    %1442 = vmatprep.subr.mxu0 %v1298
    %1443 = vmatpush2.msra.mxu0 %v1297
    %1444 = vmatprep.subr.mxu0 %v1292
    %1445 = vmatpush2.msra.mxu0 %v1291
    %1446 = vmatprep.subr.mxu0 %v1286
    %1447 = vmatpush2.msra.mxu0 %v1285
    %1448 = vmatprep.subr.mxu0 %v1280
    %1449 = vmatpush2.msra.mxu0 %v1279
    %1450 = vmatprep.subr.mxu0 %v1274
    %1451 = vmatpush2.msra.mxu0 %v1273
    %1452 = vmatprep.subr.mxu0 %v1268
    %1453 = vmatpush2.msra.mxu0 %v1267
    %1454 = vmatprep.subr.mxu0 %v1262
    %1455 = vmatpush2.msra.mxu0 %v1261
    %1456 = vmatprep.subr.mxu0 %v1256
    %1457 = vmatpush2.msra.mxu0 %v1255
    %1458 = vmatprep.mubr.f32.mxu0 %v1360
    %1459 = vmatmul.mubr.f32.gmra.mxu0 %v1356
    %v1460 = vpop.f32.mrf.mxu0
    %v1461 = vadd.f32 %v1367, %v1460
    %v1462 = vpop.f32.mrf.mxu0
    %v1463 = vadd.f32 %v1371, %v1462
    %1464 = vdwg.mxu0
    %1465 = vmatprep.subr.mxu0 %v1252
    %1466 = vmatpush1.msra.mxu0 %v1251
    %1467 = vmatprep.subr.mxu0 %v1246
    %1468 = vmatpush1.msra.mxu0 %v1245
    %1469 = vmatprep.subr.mxu0 %v1240
    %1470 = vmatpush1.msra.mxu0 %v1239
    %1471 = vmatprep.subr.mxu0 %v1234
    %1472 = vmatpush1.msra.mxu0 %v1233
    %1473 = vmatprep.subr.mxu0 %v1228
    %1474 = vmatpush1.msra.mxu0 %v1227
    %1475 = vmatprep.subr.mxu0 %v1222
    %1476 = vmatpush1.msra.mxu0 %v1221
    %1477 = vmatprep.subr.mxu0 %v1216
    %1478 = vmatpush1.msra.mxu0 %v1215
    %1479 = vmatprep.subr.mxu0 %v1210
    %1480 = vmatpush1.msra.mxu0 %v1209
    %1481 = vmatprep.subr.mxu0 %v1204
    %1482 = vmatpush1.msra.mxu0 %v1203
    %1483 = vmatprep.subr.mxu0 %v1198
    %1484 = vmatpush1.msra.mxu0 %v1197
    %1485 = vmatprep.subr.mxu0 %v1192
    %1486 = vmatpush1.msra.mxu0 %v1191
    %1487 = vmatprep.subr.mxu0 %v1186
    %1488 = vmatpush1.msra.mxu0 %v1185
    %1489 = vmatprep.subr.mxu0 %v1180
    %1490 = vmatpush1.msra.mxu0 %v1179
    %1491 = vmatprep.subr.mxu0 %v1174
    %1492 = vmatpush1.msra.mxu0 %v1173
    %1493 = vmatprep.subr.mxu0 %v1168
    %1494 = vmatpush1.msra.mxu0 %v1167
    %1495 = vmatprep.subr.mxu0 %v1162
    %1496 = vmatpush1.msra.mxu0 %v1161
    %1497 = vmatprep.subr.mxu0 %v1348
    %1498 = vmatpush2.msra.mxu0 %v1347
    %1499 = vmatprep.subr.mxu0 %v1342
    %1500 = vmatpush2.msra.mxu0 %v1341
    %1501 = vmatprep.subr.mxu0 %v1336
    %1502 = vmatpush2.msra.mxu0 %v1335
    %1503 = vmatprep.subr.mxu0 %v1330
    %1504 = vmatpush2.msra.mxu0 %v1329
    %1505 = vmatprep.subr.mxu0 %v1324
    %1506 = vmatpush2.msra.mxu0 %v1323
    %1507 = vmatprep.subr.mxu0 %v1318
    %1508 = vmatpush2.msra.mxu0 %v1317
    %1509 = vmatprep.subr.mxu0 %v1312
    %1510 = vmatpush2.msra.mxu0 %v1311
    %1511 = vmatprep.subr.mxu0 %v1306
    %1512 = vmatpush2.msra.mxu0 %v1305
    %1513 = vmatprep.subr.mxu0 %v1300
    %1514 = vmatpush2.msra.mxu0 %v1299
    %1515 = vmatprep.subr.mxu0 %v1294
    %1516 = vmatpush2.msra.mxu0 %v1293
    %1517 = vmatprep.subr.mxu0 %v1288
    %1518 = vmatpush2.msra.mxu0 %v1287
    %1519 = vmatprep.subr.mxu0 %v1282
    %1520 = vmatpush2.msra.mxu0 %v1281
    %1521 = vmatprep.subr.mxu0 %v1276
    %1522 = vmatpush2.msra.mxu0 %v1275
    %1523 = vmatprep.subr.mxu0 %v1270
    %1524 = vmatpush2.msra.mxu0 %v1269
    %1525 = vmatprep.subr.mxu0 %v1264
    %1526 = vmatpush2.msra.mxu0 %v1263
    %1527 = vmatprep.subr.mxu0 %v1258
    %1528 = vmatpush2.msra.mxu0 %v1257
    %1529 = vmatprep.mubr.f32.mxu0 %v1360
    %1530 = vmatmul.mubr.f32.gmra.mxu0 %v1356
    %v1531 = vpop.f32.mrf.mxu0
    %v1532 = vadd.f32 %v1375, %v1531
    %v1533 = vpop.f32.mrf.mxu0
    %v1534 = vadd.f32 %v1379, %v1533
    %1535 = vdwg.mxu0
    %1536 = vmatprep.subr.mxu0 %v1254
    %1537 = vmatpush1.msra.mxu0 %v1253
    %1538 = vmatprep.subr.mxu0 %v1248
    %1539 = vmatpush1.msra.mxu0 %v1247
    %1540 = vmatprep.subr.mxu0 %v1242
    %1541 = vmatpush1.msra.mxu0 %v1241
    %1542 = vmatprep.subr.mxu0 %v1236
    %1543 = vmatpush1.msra.mxu0 %v1235
    %1544 = vmatprep.subr.mxu0 %v1230
    %1545 = vmatpush1.msra.mxu0 %v1229
    %1546 = vmatprep.subr.mxu0 %v1224
    %1547 = vmatpush1.msra.mxu0 %v1223
    %1548 = vmatprep.subr.mxu0 %v1218
    %1549 = vmatpush1.msra.mxu0 %v1217
    %1550 = vmatprep.subr.mxu0 %v1212
    %1551 = vmatpush1.msra.mxu0 %v1211
    %1552 = vmatprep.subr.mxu0 %v1206
    %1553 = vmatpush1.msra.mxu0 %v1205
    %1554 = vmatprep.subr.mxu0 %v1200
    %1555 = vmatpush1.msra.mxu0 %v1199
    %1556 = vmatprep.subr.mxu0 %v1194
    %1557 = vmatpush1.msra.mxu0 %v1193
    %1558 = vmatprep.subr.mxu0 %v1188
    %1559 = vmatpush1.msra.mxu0 %v1187
    %1560 = vmatprep.subr.mxu0 %v1182
    %1561 = vmatpush1.msra.mxu0 %v1181
    %1562 = vmatprep.subr.mxu0 %v1176
    %1563 = vmatpush1.msra.mxu0 %v1175
    %1564 = vmatprep.subr.mxu0 %v1170
    %1565 = vmatpush1.msra.mxu0 %v1169
    %1566 = vmatprep.subr.mxu0 %v1164
    %1567 = vmatpush1.msra.mxu0 %v1163
    %1568 = vmatprep.subr.mxu0 %v1350
    %1569 = vmatpush2.msra.mxu0 %v1349
    %1570 = vmatprep.subr.mxu0 %v1344
    %1571 = vmatpush2.msra.mxu0 %v1343
    %1572 = vmatprep.subr.mxu0 %v1338
    %1573 = vmatpush2.msra.mxu0 %v1337
    %1574 = vmatprep.subr.mxu0 %v1332
    %1575 = vmatpush2.msra.mxu0 %v1331
    %1576 = vmatprep.subr.mxu0 %v1326
    %1577 = vmatpush2.msra.mxu0 %v1325
    %1578 = vmatprep.subr.mxu0 %v1320
    %1579 = vmatpush2.msra.mxu0 %v1319
    %1580 = vmatprep.subr.mxu0 %v1314
    %1581 = vmatpush2.msra.mxu0 %v1313
    %1582 = vmatprep.subr.mxu0 %v1308
    %1583 = vmatpush2.msra.mxu0 %v1307
    %1584 = vmatprep.subr.mxu0 %v1302
    %1585 = vmatpush2.msra.mxu0 %v1301
    %1586 = vmatprep.subr.mxu0 %v1296
    %1587 = vmatpush2.msra.mxu0 %v1295
    %1588 = vmatprep.subr.mxu0 %v1290
    %1589 = vmatpush2.msra.mxu0 %v1289
    %1590 = vmatprep.subr.mxu0 %v1284
    %1591 = vmatpush2.msra.mxu0 %v1283
    %1592 = vmatprep.subr.mxu0 %v1278
    %1593 = vmatpush2.msra.mxu0 %v1277
    %1594 = vmatprep.subr.mxu0 %v1272
    %1595 = vmatpush2.msra.mxu0 %v1271
    %1596 = vmatprep.subr.mxu0 %v1266
    %1597 = vmatpush2.msra.mxu0 %v1265
    %1598 = vmatprep.subr.mxu0 %v1260
    %1599 = vmatpush2.msra.mxu0 %v1259
    %1600 = vmatprep.mubr.f32.mxu0 %v1360
    %1601 = vmatmul.mubr.f32.gmra.mxu0 %v1356
    %v1602 = vpop.f32.mrf.mxu0
    %v1603 = vadd.f32 %v1383, %v1602
    %v1604 = vpop.f32.mrf.mxu0
    %v1605 = vadd.f32 %v1387, %v1604
    %1606 = vdwg.mxu0
    %s1607 = scalar_lea.vmem [#allocation3], 1
    %v1608 = vld [vmem:[%s1607] ss:$8 sm:$0xf]
    %v1609 = vld [vmem:[%s1607] ss:$8 sm:$0x30]
    %v1610 = vor.u32 %v1608, %v1609
    %v1613 = vcombine.low %v1461, %v1463
    %v1615 = vunpack.c.l.s4 1966171168
    %v1616 = vunpack.c.0.s8 %v1615
    %v1617 = vlaneseq
    %v1618 = vshrl.u32 %v1617, 7
    %v1619 = vsub.s32 %v1616, %v1618
    %v1620 = vrot.slane %v1613, %v1619
    %v1622 = vunpack.c.l.s4 1966171168
    %v1623 = vunpack.c.0.s8 %v1622
    %v1624 = vlaneseq
    %v1625 = vshrl.u32 %v1624, 7
    %v1626 = vsub.s32 %v1623, %v1625
    %v1627 = vrot.slane %v1620, %v1626
    %v1629 = vadd.f32 %v1610, %v1627
    %v1630 = vxor.u32 %v1629, 2147483648
    %v1631 = vmul.f32 %v1630, 1.442695
    %v1632 = vpow.pop %v1631
    %v1633 = vadd.f32 %v1632, 1.0
    %v1634 = vrcp.pop %v1633
    %v1635 = vmul.f32 1.0, %v1634
    %v1637 = vrot.slane %v1610, 2
    %v1641 = vcombine.low %v1532, %v1534
    %v1643 = vunpack.c.l.s4 1966171168
    %v1644 = vunpack.c.0.s8 %v1643
    %v1645 = vlaneseq
    %v1646 = vshrl.u32 %v1645, 7
    %v1647 = vsub.s32 %v1644, %v1646
    %v1648 = vrot.slane %v1641, %v1647
    %v1650 = vunpack.c.l.s4 1966171168
    %v1651 = vunpack.c.0.s8 %v1650
    %v1652 = vlaneseq
    %v1653 = vshrl.u32 %v1652, 7
    %v1654 = vsub.s32 %v1651, %v1653
    %v1655 = vrot.slane %v1648, %v1654
    %v1657 = vadd.f32 %v1637, %v1655
    %v1658 = vxor.u32 %v1657, 2147483648
    %v1659 = vmul.f32 %v1658, 1.442695
    %v1660 = vpow.pop %v1659
    %v1661 = vadd.f32 %v1660, 1.0
    %v1662 = vrcp.pop %v1661
    %v1663 = vmul.f32 1.0, %v1662
    %v1666 = vcombine.low %v1603, %v1605
    %v1668 = vunpack.c.l.s4 1966171168
    %v1669 = vunpack.c.0.s8 %v1668
    %v1670 = vlaneseq
    %v1671 = vshrl.u32 %v1670, 7
    %v1672 = vsub.s32 %v1669, %v1671
    %v1673 = vrot.slane %v1666, %v1672
    %v1675 = vunpack.c.l.s4 1966171168
    %v1676 = vunpack.c.0.s8 %v1675
    %v1677 = vlaneseq
    %v1678 = vshrl.u32 %v1677, 7
    %v1679 = vsub.s32 %v1676, %v1678
    %v1680 = vrot.slane %v1673, %v1679
    %v1682 = vmul.f32 %v1635, %v1680
    %v1683 = vrot.slane %v1610, 4
    %v1685 = vadd.f32 %v1683, %v1682
    %v1686 = vtanh.pop %v1685
    %v1687 = vsub.f32 1.0, %v1663
    %v1688 = vmul.f32 %v1687, %v1686
    %v1689 = vmul.f32 %v1663, %v1152
    %v1690 = vadd.f32 %v1688, %v1689
    %s1691 = scalar_lea.vmem [#allocation13], 1
    %1692 = vst.msk [vmem:[%s1691] ss:$8 sm:$0x3] %vm1156, %v1690
    %1693 = vst.msk [vmem:[%s1691] ss:$8 sm:$0x0] %vm1156, %v1690
    %v1694 = vld [vmem:[#allocation10] sm:$0xff]
    %v1695 = vld [vmem:[#allocation10 + $0x8] sm:$0xff]
    %v1696 = vld [vmem:[#allocation10 + $0x10] sm:$0xff]
    %v1697 = vld [vmem:[#allocation10 + $0x18] sm:$0xff]
    %v1698 = vld [vmem:[#allocation10 + $0x20] sm:$0xff]
    %v1699 = vld [vmem:[#allocation10 + $0x28] sm:$0xff]
    %v1700 = vld [vmem:[#allocation10 + $0x30] sm:$0xff]
    %v1701 = vld [vmem:[#allocation10 + $0x38] sm:$0xff]
    %v1702 = vld [vmem:[#allocation10 + $0x40] sm:$0xff]
    %v1703 = vld [vmem:[#allocation10 + $0x48] sm:$0xff]
    %v1704 = vld [vmem:[#allocation10 + $0x50] sm:$0xff]
    %v1705 = vld [vmem:[#allocation10 + $0x58] sm:$0xff]
    %v1706 = vld [vmem:[#allocation10 + $0x60] sm:$0xff]
    %v1707 = vld [vmem:[#allocation10 + $0x68] sm:$0xff]
    %v1708 = vld [vmem:[#allocation10 + $0x70] sm:$0xff]
    %v1709 = vld [vmem:[#allocation10 + $0x78] sm:$0xff]
    %v1710 = vld [vmem:[#allocation10 + $0x80] sm:$0xff]
    %v1711 = vld [vmem:[#allocation10 + $0x88] sm:$0xff]
    %v1712 = vld [vmem:[#allocation10 + $0x90] sm:$0xff]
    %v1713 = vld [vmem:[#allocation10 + $0x98] sm:$0xff]
    %v1714 = vld [vmem:[#allocation10 + $0xa0] sm:$0xff]
    %v1715 = vld [vmem:[#allocation10 + $0xa8] sm:$0xff]
    %v1716 = vld [vmem:[#allocation10 + $0xb0] sm:$0xff]
    %v1717 = vld [vmem:[#allocation10 + $0xb8] sm:$0xff]
    %v1718 = vld [vmem:[#allocation10 + $0xc0] sm:$0xff]
    %v1719 = vld [vmem:[#allocation10 + $0xc8] sm:$0xff]
    %v1720 = vld [vmem:[#allocation10 + $0xd0] sm:$0xff]
    %v1721 = vld [vmem:[#allocation10 + $0xd8] sm:$0xff]
    %v1722 = vld [vmem:[#allocation10 + $0xe0] sm:$0xff]
    %v1723 = vld [vmem:[#allocation10 + $0xe8] sm:$0xff]
    %v1724 = vld [vmem:[#allocation10 + $0xf0] sm:$0xff]
    %v1725 = vld [vmem:[#allocation10 + $0xf8] sm:$0xff]
    %v1726 = vld [vmem:[#allocation10 + $0x100] sm:$0xff]
    %v1727 = vld [vmem:[#allocation10 + $0x108] sm:$0xff]
    %v1728 = vld [vmem:[#allocation10 + $0x110] sm:$0xff]
    %v1729 = vld [vmem:[#allocation10 + $0x118] sm:$0xff]
    %v1730 = vld [vmem:[#allocation10 + $0x120] sm:$0xff]
    %v1731 = vld [vmem:[#allocation10 + $0x128] sm:$0xff]
    %v1732 = vld [vmem:[#allocation10 + $0x130] sm:$0xff]
    %v1733 = vld [vmem:[#allocation10 + $0x138] sm:$0xff]
    %v1734 = vld [vmem:[#allocation10 + $0x140] sm:$0xff]
    %v1735 = vld [vmem:[#allocation10 + $0x148] sm:$0xff]
    %v1736 = vld [vmem:[#allocation10 + $0x150] sm:$0xff]
    %v1737 = vld [vmem:[#allocation10 + $0x158] sm:$0xff]
    %v1738 = vld [vmem:[#allocation10 + $0x160] sm:$0xff]
    %v1739 = vld [vmem:[#allocation10 + $0x168] sm:$0xff]
    %v1740 = vld [vmem:[#allocation10 + $0x170] sm:$0xff]
    %v1741 = vld [vmem:[#allocation10 + $0x178] sm:$0xff]
    %v1742 = vld [vmem:[#allocation10 + $0x180] sm:$0xff]
    %v1743 = vld [vmem:[#allocation10 + $0x188] sm:$0xff]
    %v1744 = vld [vmem:[#allocation10 + $0x190] sm:$0xff]
    %v1745 = vld [vmem:[#allocation10 + $0x198] sm:$0xff]
    %v1746 = vld [vmem:[#allocation10 + $0x1a0] sm:$0xff]
    %v1747 = vld [vmem:[#allocation10 + $0x1a8] sm:$0xff]
    %v1748 = vld [vmem:[#allocation10 + $0x1b0] sm:$0xff]
    %v1749 = vld [vmem:[#allocation10 + $0x1b8] sm:$0xff]
    %v1750 = vld [vmem:[#allocation10 + $0x1c0] sm:$0xff]
    %v1751 = vld [vmem:[#allocation10 + $0x1c8] sm:$0xff]
    %v1752 = vld [vmem:[#allocation10 + $0x1d0] sm:$0xff]
    %v1753 = vld [vmem:[#allocation10 + $0x1d8] sm:$0xff]
    %v1754 = vld [vmem:[#allocation10 + $0x1e0] sm:$0xff]
    %v1755 = vld [vmem:[#allocation10 + $0x1e8] sm:$0xff]
    %v1756 = vld [vmem:[#allocation10 + $0x1f0] sm:$0xff]
    %v1757 = vld [vmem:[#allocation10 + $0x1f8] sm:$0xff]
    %v1758 = vld [vmem:[#allocation10 + $0x200] sm:$0xff]
    %v1759 = vld [vmem:[#allocation10 + $0x208] sm:$0xff]
    %v1760 = vld [vmem:[#allocation10 + $0x210] sm:$0xff]
    %v1761 = vld [vmem:[#allocation10 + $0x218] sm:$0xff]
    %v1762 = vld [vmem:[#allocation10 + $0x220] sm:$0xff]
    %v1763 = vld [vmem:[#allocation10 + $0x228] sm:$0xff]
    %v1764 = vld [vmem:[#allocation10 + $0x230] sm:$0xff]
    %v1765 = vld [vmem:[#allocation10 + $0x238] sm:$0xff]
    %v1766 = vld [vmem:[#allocation10 + $0x240] sm:$0xff]
    %v1767 = vld [vmem:[#allocation10 + $0x248] sm:$0xff]
    %v1768 = vld [vmem:[#allocation10 + $0x250] sm:$0xff]
    %v1769 = vld [vmem:[#allocation10 + $0x258] sm:$0xff]
    %v1770 = vld [vmem:[#allocation10 + $0x260] sm:$0xff]
    %v1771 = vld [vmem:[#allocation10 + $0x268] sm:$0xff]
    %v1772 = vld [vmem:[#allocation10 + $0x270] sm:$0xff]
    %v1773 = vld [vmem:[#allocation10 + $0x278] sm:$0xff]
    %v1774 = vld [vmem:[#allocation10 + $0x280] sm:$0xff]
    %v1775 = vld [vmem:[#allocation10 + $0x288] sm:$0xff]
    %v1776 = vld [vmem:[#allocation10 + $0x290] sm:$0xff]
    %v1777 = vld [vmem:[#allocation10 + $0x298] sm:$0xff]
    %v1778 = vld [vmem:[#allocation10 + $0x2a0] sm:$0xff]
    %v1779 = vld [vmem:[#allocation10 + $0x2a8] sm:$0xff]
    %v1780 = vld [vmem:[#allocation10 + $0x2b0] sm:$0xff]
    %v1781 = vld [vmem:[#allocation10 + $0x2b8] sm:$0xff]
    %v1782 = vld [vmem:[#allocation10 + $0x2c0] sm:$0xff]
    %v1783 = vld [vmem:[#allocation10 + $0x2c8] sm:$0xff]
    %v1784 = vld [vmem:[#allocation10 + $0x2d0] sm:$0xff]
    %v1785 = vld [vmem:[#allocation10 + $0x2d8] sm:$0xff]
    %v1786 = vld [vmem:[#allocation10 + $0x2e0] sm:$0xff]
    %v1787 = vld [vmem:[#allocation10 + $0x2e8] sm:$0xff]
    %v1788 = vld [vmem:[#allocation10 + $0x2f0] sm:$0xff]
    %v1789 = vld [vmem:[#allocation10 + $0x2f8] sm:$0xff]
    %v1790 = vld [vmem:[#allocation10 + $0x300] sm:$0xff]
    %v1791 = vld [vmem:[#allocation10 + $0x308] sm:$0xff]
    %v1792 = vld [vmem:[#allocation10 + $0x310] sm:$0xff]
    %v1793 = vld [vmem:[#allocation10 + $0x318] sm:$0xff]
    %v1794 = vld [vmem:[#allocation10 + $0x320] sm:$0xff]
    %v1795 = vld [vmem:[#allocation10 + $0x328] sm:$0xff]
    %v1796 = vld [vmem:[#allocation10 + $0x330] sm:$0xff]
    %v1797 = vld [vmem:[#allocation10 + $0x338] sm:$0xff]
    %v1798 = vld [vmem:[#allocation10 + $0x340] sm:$0xff]
    %v1799 = vld [vmem:[#allocation10 + $0x348] sm:$0xff]
    %v1800 = vld [vmem:[#allocation10 + $0x350] sm:$0xff]
    %v1801 = vld [vmem:[#allocation10 + $0x358] sm:$0xff]
    %v1802 = vld [vmem:[#allocation10 + $0x360] sm:$0xff]
    %v1803 = vld [vmem:[#allocation10 + $0x368] sm:$0xff]
    %v1804 = vld [vmem:[#allocation10 + $0x370] sm:$0xff]
    %v1805 = vld [vmem:[#allocation10 + $0x378] sm:$0xff]
    %v1806 = vld [vmem:[#allocation10 + $0x380] sm:$0xff]
    %v1807 = vld [vmem:[#allocation10 + $0x388] sm:$0xff]
    %v1808 = vld [vmem:[#allocation10 + $0x390] sm:$0xff]
    %v1809 = vld [vmem:[#allocation10 + $0x398] sm:$0xff]
    %v1810 = vld [vmem:[#allocation10 + $0x3a0] sm:$0xff]
    %v1811 = vld [vmem:[#allocation10 + $0x3a8] sm:$0xff]
    %v1812 = vld [vmem:[#allocation10 + $0x3b0] sm:$0xff]
    %v1813 = vld [vmem:[#allocation10 + $0x3b8] sm:$0xff]
    %v1814 = vld [vmem:[#allocation10 + $0x3c0] sm:$0xff]
    %v1815 = vld [vmem:[#allocation10 + $0x3c8] sm:$0xff]
    %v1816 = vld [vmem:[#allocation10 + $0x3d0] sm:$0xff]
    %v1817 = vld [vmem:[#allocation10 + $0x3d8] sm:$0xff]
    %v1818 = vld [vmem:[#allocation10 + $0x3e0] sm:$0xff]
    %v1819 = vld [vmem:[#allocation10 + $0x3e8] sm:$0xff]
    %v1820 = vld [vmem:[#allocation10 + $0x3f0] sm:$0xff]
    %v1821 = vld [vmem:[#allocation10 + $0x3f8] sm:$0xff]
    %v1822 = vld [vmem:[#allocation10 + $0x400] sm:$0xff]
    %v1823 = vld [vmem:[#allocation10 + $0x408] sm:$0xff]
    %v1824 = vld [vmem:[#allocation10 + $0x410] sm:$0xff]
    %v1825 = vld [vmem:[#allocation10 + $0x418] sm:$0xff]
    %v1826 = vld [vmem:[#allocation10 + $0x420] sm:$0xff]
    %v1827 = vld [vmem:[#allocation10 + $0x428] sm:$0xff]
    %v1828 = vld [vmem:[#allocation10 + $0x430] sm:$0xff]
    %v1829 = vld [vmem:[#allocation10 + $0x438] sm:$0xff]
    %v1830 = vld [vmem:[#allocation10 + $0x440] sm:$0xff]
    %v1831 = vld [vmem:[#allocation10 + $0x448] sm:$0xff]
    %v1832 = vld [vmem:[#allocation10 + $0x450] sm:$0xff]
    %v1833 = vld [vmem:[#allocation10 + $0x458] sm:$0xff]
    %v1834 = vld [vmem:[#allocation10 + $0x460] sm:$0xff]
    %v1835 = vld [vmem:[#allocation10 + $0x468] sm:$0xff]
    %v1836 = vld [vmem:[#allocation10 + $0x470] sm:$0xff]
    %v1837 = vld [vmem:[#allocation10 + $0x478] sm:$0xff]
    %v1838 = vld [vmem:[#allocation10 + $0x480] sm:$0xff]
    %v1839 = vld [vmem:[#allocation10 + $0x488] sm:$0xff]
    %v1840 = vld [vmem:[#allocation10 + $0x490] sm:$0xff]
    %v1841 = vld [vmem:[#allocation10 + $0x498] sm:$0xff]
    %v1842 = vld [vmem:[#allocation10 + $0x4a0] sm:$0xff]
    %v1843 = vld [vmem:[#allocation10 + $0x4a8] sm:$0xff]
    %v1844 = vld [vmem:[#allocation10 + $0x4b0] sm:$0xff]
    %v1845 = vld [vmem:[#allocation10 + $0x4b8] sm:$0xff]
    %v1846 = vld [vmem:[#allocation10 + $0x4c0] sm:$0xff]
    %v1847 = vld [vmem:[#allocation10 + $0x4c8] sm:$0xff]
    %v1848 = vld [vmem:[#allocation10 + $0x4d0] sm:$0xff]
    %v1849 = vld [vmem:[#allocation10 + $0x4d8] sm:$0xff]
    %v1850 = vld [vmem:[#allocation10 + $0x4e0] sm:$0xff]
    %v1851 = vld [vmem:[#allocation10 + $0x4e8] sm:$0xff]
    %v1852 = vld [vmem:[#allocation10 + $0x4f0] sm:$0xff]
    %v1853 = vld [vmem:[#allocation10 + $0x4f8] sm:$0xff]
    %v1854 = vld [vmem:[#allocation10 + $0x500] sm:$0xff]
    %v1855 = vld [vmem:[#allocation10 + $0x508] sm:$0xff]
    %v1856 = vld [vmem:[#allocation10 + $0x510] sm:$0xff]
    %v1857 = vld [vmem:[#allocation10 + $0x518] sm:$0xff]
    %v1858 = vld [vmem:[#allocation10 + $0x520] sm:$0xff]
    %v1859 = vld [vmem:[#allocation10 + $0x528] sm:$0xff]
    %v1860 = vld [vmem:[#allocation10 + $0x530] sm:$0xff]
    %v1861 = vld [vmem:[#allocation10 + $0x538] sm:$0xff]
    %v1862 = vld [vmem:[#allocation10 + $0x540] sm:$0xff]
    %v1863 = vld [vmem:[#allocation10 + $0x548] sm:$0xff]
    %v1864 = vld [vmem:[#allocation10 + $0x550] sm:$0xff]
    %v1865 = vld [vmem:[#allocation10 + $0x558] sm:$0xff]
    %v1866 = vld [vmem:[#allocation10 + $0x560] sm:$0xff]
    %v1867 = vld [vmem:[#allocation10 + $0x568] sm:$0xff]
    %v1868 = vld [vmem:[#allocation10 + $0x570] sm:$0xff]
    %v1869 = vld [vmem:[#allocation10 + $0x578] sm:$0xff]
    %v1870 = vld [vmem:[#allocation10 + $0x580] sm:$0xff]
    %v1871 = vld [vmem:[#allocation10 + $0x588] sm:$0xff]
    %v1872 = vld [vmem:[#allocation10 + $0x590] sm:$0xff]
    %v1873 = vld [vmem:[#allocation10 + $0x598] sm:$0xff]
    %v1874 = vld [vmem:[#allocation10 + $0x5a0] sm:$0xff]
    %v1875 = vld [vmem:[#allocation10 + $0x5a8] sm:$0xff]
    %v1876 = vld [vmem:[#allocation10 + $0x5b0] sm:$0xff]
    %v1877 = vld [vmem:[#allocation10 + $0x5b8] sm:$0xff]
    %v1878 = vld [vmem:[#allocation10 + $0x5c0] sm:$0xff]
    %v1879 = vld [vmem:[#allocation10 + $0x5c8] sm:$0xff]
    %v1880 = vld [vmem:[#allocation10 + $0x5d0] sm:$0xff]
    %v1881 = vld [vmem:[#allocation10 + $0x5d8] sm:$0xff]
    %v1882 = vld [vmem:[#allocation10 + $0x5e0] sm:$0xff]
    %v1883 = vld [vmem:[#allocation10 + $0x5e8] sm:$0xff]
    %v1884 = vld [vmem:[#allocation10 + $0x5f0] sm:$0xff]
    %v1885 = vld [vmem:[#allocation10 + $0x5f8] sm:$0xff]
    %v1886 = vld [vmem:[#allocation12] sm:$0x3f]
    %v1888 = vlaneseq
    %v1889 = vshrl.u32 %v1888, 7
    %v1890 = vsub.s32 0, %v1889
    %v1891 = vrot.slane %v1690, %v1890
    %v1892 = vlaneseq
    %v1893 = vshrl.u32 %v1892, 7
    %v1894 = vsub.s32 1, %v1893
    %v1895 = vrot.slane %v1690, %v1894
    %v1899 = vlaneseq
    %v1900 = vshrl.u32 %v1899, 7
    %v1901 = vsub.s32 0, %v1900
    %v1902 = vrot.slane %v1886, %v1901
    %v1903 = vlaneseq
    %v1904 = vshrl.u32 %v1903, 7
    %v1905 = vsub.s32 1, %v1904
    %v1906 = vrot.slane %v1886, %v1905
    %v1907 = vlaneseq
    %v1908 = vshrl.u32 %v1907, 7
    %v1909 = vsub.s32 2, %v1908
    %v1910 = vrot.slane %v1886, %v1909
    %v1911 = vlaneseq
    %v1912 = vshrl.u32 %v1911, 7
    %v1913 = vsub.s32 3, %v1912
    %v1914 = vrot.slane %v1886, %v1913
    %v1915 = vlaneseq
    %v1916 = vshrl.u32 %v1915, 7
    %v1917 = vsub.s32 4, %v1916
    %v1918 = vrot.slane %v1886, %v1917
    %v1919 = vlaneseq
    %v1920 = vshrl.u32 %v1919, 7
    %v1921 = vsub.s32 5, %v1920
    %v1922 = vrot.slane %v1886, %v1921
    %1929 = vmatprep.subr.mxu0 %v1785
    %1930 = vmatpush1.msra.mxu0 %v1784
    %1931 = vmatprep.subr.mxu0 %v1779
    %1932 = vmatpush1.msra.mxu0 %v1778
    %1933 = vmatprep.subr.mxu0 %v1773
    %1934 = vmatpush1.msra.mxu0 %v1772
    %1935 = vmatprep.subr.mxu0 %v1767
    %1936 = vmatpush1.msra.mxu0 %v1766
    %1937 = vmatprep.subr.mxu0 %v1761
    %1938 = vmatpush1.msra.mxu0 %v1760
    %1939 = vmatprep.subr.mxu0 %v1755
    %1940 = vmatpush1.msra.mxu0 %v1754
    %1941 = vmatprep.subr.mxu0 %v1749
    %1942 = vmatpush1.msra.mxu0 %v1748
    %1943 = vmatprep.subr.mxu0 %v1743
    %1944 = vmatpush1.msra.mxu0 %v1742
    %1945 = vmatprep.subr.mxu0 %v1737
    %1946 = vmatpush1.msra.mxu0 %v1736
    %1947 = vmatprep.subr.mxu0 %v1731
    %1948 = vmatpush1.msra.mxu0 %v1730
    %1949 = vmatprep.subr.mxu0 %v1725
    %1950 = vmatpush1.msra.mxu0 %v1724
    %1951 = vmatprep.subr.mxu0 %v1719
    %1952 = vmatpush1.msra.mxu0 %v1718
    %1953 = vmatprep.subr.mxu0 %v1713
    %1954 = vmatpush1.msra.mxu0 %v1712
    %1955 = vmatprep.subr.mxu0 %v1707
    %1956 = vmatpush1.msra.mxu0 %v1706
    %1957 = vmatprep.subr.mxu0 %v1701
    %1958 = vmatpush1.msra.mxu0 %v1700
    %1959 = vmatprep.subr.mxu0 %v1695
    %1960 = vmatpush1.msra.mxu0 %v1694
    %1961 = vmatprep.subr.mxu0 %v1881
    %1962 = vmatpush2.msra.mxu0 %v1880
    %1963 = vmatprep.subr.mxu0 %v1875
    %1964 = vmatpush2.msra.mxu0 %v1874
    %1965 = vmatprep.subr.mxu0 %v1869
    %1966 = vmatpush2.msra.mxu0 %v1868
    %1967 = vmatprep.subr.mxu0 %v1863
    %1968 = vmatpush2.msra.mxu0 %v1862
    %1969 = vmatprep.subr.mxu0 %v1857
    %1970 = vmatpush2.msra.mxu0 %v1856
    %1971 = vmatprep.subr.mxu0 %v1851
    %1972 = vmatpush2.msra.mxu0 %v1850
    %1973 = vmatprep.subr.mxu0 %v1845
    %1974 = vmatpush2.msra.mxu0 %v1844
    %1975 = vmatprep.subr.mxu0 %v1839
    %1976 = vmatpush2.msra.mxu0 %v1838
    %1977 = vmatprep.subr.mxu0 %v1833
    %1978 = vmatpush2.msra.mxu0 %v1832
    %1979 = vmatprep.subr.mxu0 %v1827
    %1980 = vmatpush2.msra.mxu0 %v1826
    %1981 = vmatprep.subr.mxu0 %v1821
    %1982 = vmatpush2.msra.mxu0 %v1820
    %1983 = vmatprep.subr.mxu0 %v1815
    %1984 = vmatpush2.msra.mxu0 %v1814
    %1985 = vmatprep.subr.mxu0 %v1809
    %1986 = vmatpush2.msra.mxu0 %v1808
    %1987 = vmatprep.subr.mxu0 %v1803
    %1988 = vmatpush2.msra.mxu0 %v1802
    %1989 = vmatprep.subr.mxu0 %v1797
    %1990 = vmatpush2.msra.mxu0 %v1796
    %1991 = vmatprep.subr.mxu0 %v1791
    %1992 = vmatpush2.msra.mxu0 %v1790
    %1993 = vmatprep.mubr.f32.mxu0 %v1895
    %1994 = vmatmul.mubr.f32.gmra.mxu0 %v1891
    %v1995 = vpop.f32.mrf.mxu0
    %v1996 = vadd.f32 %v1902, %v1995
    %v1997 = vpop.f32.mrf.mxu0
    %v1998 = vadd.f32 %v1906, %v1997
    %1999 = vdwg.mxu0
    %2000 = vmatprep.subr.mxu0 %v1787
    %2001 = vmatpush1.msra.mxu0 %v1786
    %2002 = vmatprep.subr.mxu0 %v1781
    %2003 = vmatpush1.msra.mxu0 %v1780
    %2004 = vmatprep.subr.mxu0 %v1775
    %2005 = vmatpush1.msra.mxu0 %v1774
    %2006 = vmatprep.subr.mxu0 %v1769
    %2007 = vmatpush1.msra.mxu0 %v1768
    %2008 = vmatprep.subr.mxu0 %v1763
    %2009 = vmatpush1.msra.mxu0 %v1762
    %2010 = vmatprep.subr.mxu0 %v1757
    %2011 = vmatpush1.msra.mxu0 %v1756
    %2012 = vmatprep.subr.mxu0 %v1751
    %2013 = vmatpush1.msra.mxu0 %v1750
    %2014 = vmatprep.subr.mxu0 %v1745
    %2015 = vmatpush1.msra.mxu0 %v1744
    %2016 = vmatprep.subr.mxu0 %v1739
    %2017 = vmatpush1.msra.mxu0 %v1738
    %2018 = vmatprep.subr.mxu0 %v1733
    %2019 = vmatpush1.msra.mxu0 %v1732
    %2020 = vmatprep.subr.mxu0 %v1727
    %2021 = vmatpush1.msra.mxu0 %v1726
    %2022 = vmatprep.subr.mxu0 %v1721
    %2023 = vmatpush1.msra.mxu0 %v1720
    %2024 = vmatprep.subr.mxu0 %v1715
    %2025 = vmatpush1.msra.mxu0 %v1714
    %2026 = vmatprep.subr.mxu0 %v1709
    %2027 = vmatpush1.msra.mxu0 %v1708
    %2028 = vmatprep.subr.mxu0 %v1703
    %2029 = vmatpush1.msra.mxu0 %v1702
    %2030 = vmatprep.subr.mxu0 %v1697
    %2031 = vmatpush1.msra.mxu0 %v1696
    %2032 = vmatprep.subr.mxu0 %v1883
    %2033 = vmatpush2.msra.mxu0 %v1882
    %2034 = vmatprep.subr.mxu0 %v1877
    %2035 = vmatpush2.msra.mxu0 %v1876
    %2036 = vmatprep.subr.mxu0 %v1871
    %2037 = vmatpush2.msra.mxu0 %v1870
    %2038 = vmatprep.subr.mxu0 %v1865
    %2039 = vmatpush2.msra.mxu0 %v1864
    %2040 = vmatprep.subr.mxu0 %v1859
    %2041 = vmatpush2.msra.mxu0 %v1858
    %2042 = vmatprep.subr.mxu0 %v1853
    %2043 = vmatpush2.msra.mxu0 %v1852
    %2044 = vmatprep.subr.mxu0 %v1847
    %2045 = vmatpush2.msra.mxu0 %v1846
    %2046 = vmatprep.subr.mxu0 %v1841
    %2047 = vmatpush2.msra.mxu0 %v1840
    %2048 = vmatprep.subr.mxu0 %v1835
    %2049 = vmatpush2.msra.mxu0 %v1834
    %2050 = vmatprep.subr.mxu0 %v1829
    %2051 = vmatpush2.msra.mxu0 %v1828
    %2052 = vmatprep.subr.mxu0 %v1823
    %2053 = vmatpush2.msra.mxu0 %v1822
    %2054 = vmatprep.subr.mxu0 %v1817
    %2055 = vmatpush2.msra.mxu0 %v1816
    %2056 = vmatprep.subr.mxu0 %v1811
    %2057 = vmatpush2.msra.mxu0 %v1810
    %2058 = vmatprep.subr.mxu0 %v1805
    %2059 = vmatpush2.msra.mxu0 %v1804
    %2060 = vmatprep.subr.mxu0 %v1799
    %2061 = vmatpush2.msra.mxu0 %v1798
    %2062 = vmatprep.subr.mxu0 %v1793
    %2063 = vmatpush2.msra.mxu0 %v1792
    %2064 = vmatprep.mubr.f32.mxu0 %v1895
    %2065 = vmatmul.mubr.f32.gmra.mxu0 %v1891
    %v2066 = vpop.f32.mrf.mxu0
    %v2067 = vadd.f32 %v1910, %v2066
    %v2068 = vpop.f32.mrf.mxu0
    %v2069 = vadd.f32 %v1914, %v2068
    %2070 = vdwg.mxu0
    %2071 = vmatprep.subr.mxu0 %v1789
    %2072 = vmatpush1.msra.mxu0 %v1788
    %2073 = vmatprep.subr.mxu0 %v1783
    %2074 = vmatpush1.msra.mxu0 %v1782
    %2075 = vmatprep.subr.mxu0 %v1777
    %2076 = vmatpush1.msra.mxu0 %v1776
    %2077 = vmatprep.subr.mxu0 %v1771
    %2078 = vmatpush1.msra.mxu0 %v1770
    %2079 = vmatprep.subr.mxu0 %v1765
    %2080 = vmatpush1.msra.mxu0 %v1764
    %2081 = vmatprep.subr.mxu0 %v1759
    %2082 = vmatpush1.msra.mxu0 %v1758
    %2083 = vmatprep.subr.mxu0 %v1753
    %2084 = vmatpush1.msra.mxu0 %v1752
    %2085 = vmatprep.subr.mxu0 %v1747
    %2086 = vmatpush1.msra.mxu0 %v1746
    %2087 = vmatprep.subr.mxu0 %v1741
    %2088 = vmatpush1.msra.mxu0 %v1740
    %2089 = vmatprep.subr.mxu0 %v1735
    %2090 = vmatpush1.msra.mxu0 %v1734
    %2091 = vmatprep.subr.mxu0 %v1729
    %2092 = vmatpush1.msra.mxu0 %v1728
    %2093 = vmatprep.subr.mxu0 %v1723
    %2094 = vmatpush1.msra.mxu0 %v1722
    %2095 = vmatprep.subr.mxu0 %v1717
    %2096 = vmatpush1.msra.mxu0 %v1716
    %2097 = vmatprep.subr.mxu0 %v1711
    %2098 = vmatpush1.msra.mxu0 %v1710
    %2099 = vmatprep.subr.mxu0 %v1705
    %2100 = vmatpush1.msra.mxu0 %v1704
    %2101 = vmatprep.subr.mxu0 %v1699
    %2102 = vmatpush1.msra.mxu0 %v1698
    %2103 = vmatprep.subr.mxu0 %v1885
    %2104 = vmatpush2.msra.mxu0 %v1884
    %2105 = vmatprep.subr.mxu0 %v1879
    %2106 = vmatpush2.msra.mxu0 %v1878
    %2107 = vmatprep.subr.mxu0 %v1873
    %2108 = vmatpush2.msra.mxu0 %v1872
    %2109 = vmatprep.subr.mxu0 %v1867
    %2110 = vmatpush2.msra.mxu0 %v1866
    %2111 = vmatprep.subr.mxu0 %v1861
    %2112 = vmatpush2.msra.mxu0 %v1860
    %2113 = vmatprep.subr.mxu0 %v1855
    %2114 = vmatpush2.msra.mxu0 %v1854
    %2115 = vmatprep.subr.mxu0 %v1849
    %2116 = vmatpush2.msra.mxu0 %v1848
    %2117 = vmatprep.subr.mxu0 %v1843
    %2118 = vmatpush2.msra.mxu0 %v1842
    %2119 = vmatprep.subr.mxu0 %v1837
    %2120 = vmatpush2.msra.mxu0 %v1836
    %2121 = vmatprep.subr.mxu0 %v1831
    %2122 = vmatpush2.msra.mxu0 %v1830
    %2123 = vmatprep.subr.mxu0 %v1825
    %2124 = vmatpush2.msra.mxu0 %v1824
    %2125 = vmatprep.subr.mxu0 %v1819
    %2126 = vmatpush2.msra.mxu0 %v1818
    %2127 = vmatprep.subr.mxu0 %v1813
    %2128 = vmatpush2.msra.mxu0 %v1812
    %2129 = vmatprep.subr.mxu0 %v1807
    %2130 = vmatpush2.msra.mxu0 %v1806
    %2131 = vmatprep.subr.mxu0 %v1801
    %2132 = vmatpush2.msra.mxu0 %v1800
    %2133 = vmatprep.subr.mxu0 %v1795
    %2134 = vmatpush2.msra.mxu0 %v1794
    %2135 = vmatprep.mubr.f32.mxu0 %v1895
    %2136 = vmatmul.mubr.f32.gmra.mxu0 %v1891
    %v2137 = vpop.f32.mrf.mxu0
    %v2138 = vadd.f32 %v1918, %v2137
    %v2139 = vpop.f32.mrf.mxu0
    %v2140 = vadd.f32 %v1922, %v2139
    %2141 = vdwg.mxu0
    %s2142 = scalar_lea.vmem [#allocation3], 2
    %v2143 = vld [vmem:[%s2142] ss:$8 sm:$0xf]
    %v2144 = vld [vmem:[%s2142] ss:$8 sm:$0x30]
    %v2145 = vor.u32 %v2143, %v2144
    %v2148 = vcombine.low %v1996, %v1998
    %v2150 = vunpack.c.l.s4 1966171168
    %v2151 = vunpack.c.0.s8 %v2150
    %v2152 = vlaneseq
    %v2153 = vshrl.u32 %v2152, 7
    %v2154 = vsub.s32 %v2151, %v2153
    %v2155 = vrot.slane %v2148, %v2154
    %v2157 = vunpack.c.l.s4 1966171168
    %v2158 = vunpack.c.0.s8 %v2157
    %v2159 = vlaneseq
    %v2160 = vshrl.u32 %v2159, 7
    %v2161 = vsub.s32 %v2158, %v2160
    %v2162 = vrot.slane %v2155, %v2161
    %v2164 = vadd.f32 %v2145, %v2162
    %v2165 = vxor.u32 %v2164, 2147483648
    %v2166 = vmul.f32 %v2165, 1.442695
    %v2167 = vpow.pop %v2166
    %v2168 = vadd.f32 %v2167, 1.0
    %v2169 = vrcp.pop %v2168
    %v2170 = vmul.f32 1.0, %v2169
    %v2172 = vrot.slane %v2145, 2
    %v2176 = vcombine.low %v2067, %v2069
    %v2178 = vunpack.c.l.s4 1966171168
    %v2179 = vunpack.c.0.s8 %v2178
    %v2180 = vlaneseq
    %v2181 = vshrl.u32 %v2180, 7
    %v2182 = vsub.s32 %v2179, %v2181
    %v2183 = vrot.slane %v2176, %v2182
    %v2185 = vunpack.c.l.s4 1966171168
    %v2186 = vunpack.c.0.s8 %v2185
    %v2187 = vlaneseq
    %v2188 = vshrl.u32 %v2187, 7
    %v2189 = vsub.s32 %v2186, %v2188
    %v2190 = vrot.slane %v2183, %v2189
    %v2192 = vadd.f32 %v2172, %v2190
    %v2193 = vxor.u32 %v2192, 2147483648
    %v2194 = vmul.f32 %v2193, 1.442695
    %v2195 = vpow.pop %v2194
    %v2196 = vadd.f32 %v2195, 1.0
    %v2197 = vrcp.pop %v2196
    %v2198 = vmul.f32 1.0, %v2197
    %v2201 = vcombine.low %v2138, %v2140
    %v2203 = vunpack.c.l.s4 1966171168
    %v2204 = vunpack.c.0.s8 %v2203
    %v2205 = vlaneseq
    %v2206 = vshrl.u32 %v2205, 7
    %v2207 = vsub.s32 %v2204, %v2206
    %v2208 = vrot.slane %v2201, %v2207
    %v2210 = vunpack.c.l.s4 1966171168
    %v2211 = vunpack.c.0.s8 %v2210
    %v2212 = vlaneseq
    %v2213 = vshrl.u32 %v2212, 7
    %v2214 = vsub.s32 %v2211, %v2213
    %v2215 = vrot.slane %v2208, %v2214
    %v2217 = vmul.f32 %v2170, %v2215
    %v2218 = vrot.slane %v2145, 4
    %v2220 = vadd.f32 %v2218, %v2217
    %v2221 = vtanh.pop %v2220
    %v2222 = vsub.f32 1.0, %v2198
    %v2223 = vmul.f32 %v2222, %v2221
    %v2224 = vmul.f32 %v2198, %v1690
    %v2225 = vadd.f32 %v2223, %v2224
    %s2226 = scalar_lea.vmem [#allocation13], 2
    %2227 = vst.msk [vmem:[%s2226] ss:$8 sm:$0x3] %vm1156, %v2225
    %2228 = vst.msk [vmem:[%s2226] ss:$8 sm:$0x0] %vm1156, %v2225
    %v2229 = vld [vmem:[#allocation10] sm:$0xff]
    %v2230 = vld [vmem:[#allocation10 + $0x8] sm:$0xff]
    %v2231 = vld [vmem:[#allocation10 + $0x10] sm:$0xff]
    %v2232 = vld [vmem:[#allocation10 + $0x18] sm:$0xff]
    %v2233 = vld [vmem:[#allocation10 + $0x20] sm:$0xff]
    %v2234 = vld [vmem:[#allocation10 + $0x28] sm:$0xff]
    %v2235 = vld [vmem:[#allocation10 + $0x30] sm:$0xff]
    %v2236 = vld [vmem:[#allocation10 + $0x38] sm:$0xff]
    %v2237 = vld [vmem:[#allocation10 + $0x40] sm:$0xff]
    %v2238 = vld [vmem:[#allocation10 + $0x48] sm:$0xff]
    %v2239 = vld [vmem:[#allocation10 + $0x50] sm:$0xff]
    %v2240 = vld [vmem:[#allocation10 + $0x58] sm:$0xff]
    %v2241 = vld [vmem:[#allocation10 + $0x60] sm:$0xff]
    %v2242 = vld [vmem:[#allocation10 + $0x68] sm:$0xff]
    %v2243 = vld [vmem:[#allocation10 + $0x70] sm:$0xff]
    %v2244 = vld [vmem:[#allocation10 + $0x78] sm:$0xff]
    %v2245 = vld [vmem:[#allocation10 + $0x80] sm:$0xff]
    %v2246 = vld [vmem:[#allocation10 + $0x88] sm:$0xff]
    %v2247 = vld [vmem:[#allocation10 + $0x90] sm:$0xff]
    %v2248 = vld [vmem:[#allocation10 + $0x98] sm:$0xff]
    %v2249 = vld [vmem:[#allocation10 + $0xa0] sm:$0xff]
    %v2250 = vld [vmem:[#allocation10 + $0xa8] sm:$0xff]
    %v2251 = vld [vmem:[#allocation10 + $0xb0] sm:$0xff]
    %v2252 = vld [vmem:[#allocation10 + $0xb8] sm:$0xff]
    %v2253 = vld [vmem:[#allocation10 + $0xc0] sm:$0xff]
    %v2254 = vld [vmem:[#allocation10 + $0xc8] sm:$0xff]
    %v2255 = vld [vmem:[#allocation10 + $0xd0] sm:$0xff]
    %v2256 = vld [vmem:[#allocation10 + $0xd8] sm:$0xff]
    %v2257 = vld [vmem:[#allocation10 + $0xe0] sm:$0xff]
    %v2258 = vld [vmem:[#allocation10 + $0xe8] sm:$0xff]
    %v2259 = vld [vmem:[#allocation10 + $0xf0] sm:$0xff]
    %v2260 = vld [vmem:[#allocation10 + $0xf8] sm:$0xff]
    %v2261 = vld [vmem:[#allocation10 + $0x100] sm:$0xff]
    %v2262 = vld [vmem:[#allocation10 + $0x108] sm:$0xff]
    %v2263 = vld [vmem:[#allocation10 + $0x110] sm:$0xff]
    %v2264 = vld [vmem:[#allocation10 + $0x118] sm:$0xff]
    %v2265 = vld [vmem:[#allocation10 + $0x120] sm:$0xff]
    %v2266 = vld [vmem:[#allocation10 + $0x128] sm:$0xff]
    %v2267 = vld [vmem:[#allocation10 + $0x130] sm:$0xff]
    %v2268 = vld [vmem:[#allocation10 + $0x138] sm:$0xff]
    %v2269 = vld [vmem:[#allocation10 + $0x140] sm:$0xff]
    %v2270 = vld [vmem:[#allocation10 + $0x148] sm:$0xff]
    %v2271 = vld [vmem:[#allocation10 + $0x150] sm:$0xff]
    %v2272 = vld [vmem:[#allocation10 + $0x158] sm:$0xff]
    %v2273 = vld [vmem:[#allocation10 + $0x160] sm:$0xff]
    %v2274 = vld [vmem:[#allocation10 + $0x168] sm:$0xff]
    %v2275 = vld [vmem:[#allocation10 + $0x170] sm:$0xff]
    %v2276 = vld [vmem:[#allocation10 + $0x178] sm:$0xff]
    %v2277 = vld [vmem:[#allocation10 + $0x180] sm:$0xff]
    %v2278 = vld [vmem:[#allocation10 + $0x188] sm:$0xff]
    %v2279 = vld [vmem:[#allocation10 + $0x190] sm:$0xff]
    %v2280 = vld [vmem:[#allocation10 + $0x198] sm:$0xff]
    %v2281 = vld [vmem:[#allocation10 + $0x1a0] sm:$0xff]
    %v2282 = vld [vmem:[#allocation10 + $0x1a8] sm:$0xff]
    %v2283 = vld [vmem:[#allocation10 + $0x1b0] sm:$0xff]
    %v2284 = vld [vmem:[#allocation10 + $0x1b8] sm:$0xff]
    %v2285 = vld [vmem:[#allocation10 + $0x1c0] sm:$0xff]
    %v2286 = vld [vmem:[#allocation10 + $0x1c8] sm:$0xff]
    %v2287 = vld [vmem:[#allocation10 + $0x1d0] sm:$0xff]
    %v2288 = vld [vmem:[#allocation10 + $0x1d8] sm:$0xff]
    %v2289 = vld [vmem:[#allocation10 + $0x1e0] sm:$0xff]
    %v2290 = vld [vmem:[#allocation10 + $0x1e8] sm:$0xff]
    %v2291 = vld [vmem:[#allocation10 + $0x1f0] sm:$0xff]
    %v2292 = vld [vmem:[#allocation10 + $0x1f8] sm:$0xff]
    %v2293 = vld [vmem:[#allocation10 + $0x200] sm:$0xff]
    %v2294 = vld [vmem:[#allocation10 + $0x208] sm:$0xff]
    %v2295 = vld [vmem:[#allocation10 + $0x210] sm:$0xff]
    %v2296 = vld [vmem:[#allocation10 + $0x218] sm:$0xff]
    %v2297 = vld [vmem:[#allocation10 + $0x220] sm:$0xff]
    %v2298 = vld [vmem:[#allocation10 + $0x228] sm:$0xff]
    %v2299 = vld [vmem:[#allocation10 + $0x230] sm:$0xff]
    %v2300 = vld [vmem:[#allocation10 + $0x238] sm:$0xff]
    %v2301 = vld [vmem:[#allocation10 + $0x240] sm:$0xff]
    %v2302 = vld [vmem:[#allocation10 + $0x248] sm:$0xff]
    %v2303 = vld [vmem:[#allocation10 + $0x250] sm:$0xff]
    %v2304 = vld [vmem:[#allocation10 + $0x258] sm:$0xff]
    %v2305 = vld [vmem:[#allocation10 + $0x260] sm:$0xff]
    %v2306 = vld [vmem:[#allocation10 + $0x268] sm:$0xff]
    %v2307 = vld [vmem:[#allocation10 + $0x270] sm:$0xff]
    %v2308 = vld [vmem:[#allocation10 + $0x278] sm:$0xff]
    %v2309 = vld [vmem:[#allocation10 + $0x280] sm:$0xff]
    %v2310 = vld [vmem:[#allocation10 + $0x288] sm:$0xff]
    %v2311 = vld [vmem:[#allocation10 + $0x290] sm:$0xff]
    %v2312 = vld [vmem:[#allocation10 + $0x298] sm:$0xff]
    %v2313 = vld [vmem:[#allocation10 + $0x2a0] sm:$0xff]
    %v2314 = vld [vmem:[#allocation10 + $0x2a8] sm:$0xff]
    %v2315 = vld [vmem:[#allocation10 + $0x2b0] sm:$0xff]
    %v2316 = vld [vmem:[#allocation10 + $0x2b8] sm:$0xff]
    %v2317 = vld [vmem:[#allocation10 + $0x2c0] sm:$0xff]
    %v2318 = vld [vmem:[#allocation10 + $0x2c8] sm:$0xff]
    %v2319 = vld [vmem:[#allocation10 + $0x2d0] sm:$0xff]
    %v2320 = vld [vmem:[#allocation10 + $0x2d8] sm:$0xff]
    %v2321 = vld [vmem:[#allocation10 + $0x2e0] sm:$0xff]
    %v2322 = vld [vmem:[#allocation10 + $0x2e8] sm:$0xff]
    %v2323 = vld [vmem:[#allocation10 + $0x2f0] sm:$0xff]
    %v2324 = vld [vmem:[#allocation10 + $0x2f8] sm:$0xff]
    %v2325 = vld [vmem:[#allocation10 + $0x300] sm:$0xff]
    %v2326 = vld [vmem:[#allocation10 + $0x308] sm:$0xff]
    %v2327 = vld [vmem:[#allocation10 + $0x310] sm:$0xff]
    %v2328 = vld [vmem:[#allocation10 + $0x318] sm:$0xff]
    %v2329 = vld [vmem:[#allocation10 + $0x320] sm:$0xff]
    %v2330 = vld [vmem:[#allocation10 + $0x328] sm:$0xff]
    %v2331 = vld [vmem:[#allocation10 + $0x330] sm:$0xff]
    %v2332 = vld [vmem:[#allocation10 + $0x338] sm:$0xff]
    %v2333 = vld [vmem:[#allocation10 + $0x340] sm:$0xff]
    %v2334 = vld [vmem:[#allocation10 + $0x348] sm:$0xff]
    %v2335 = vld [vmem:[#allocation10 + $0x350] sm:$0xff]
    %v2336 = vld [vmem:[#allocation10 + $0x358] sm:$0xff]
    %v2337 = vld [vmem:[#allocation10 + $0x360] sm:$0xff]
    %v2338 = vld [vmem:[#allocation10 + $0x368] sm:$0xff]
    %v2339 = vld [vmem:[#allocation10 + $0x370] sm:$0xff]
    %v2340 = vld [vmem:[#allocation10 + $0x378] sm:$0xff]
    %v2341 = vld [vmem:[#allocation10 + $0x380] sm:$0xff]
    %v2342 = vld [vmem:[#allocation10 + $0x388] sm:$0xff]
    %v2343 = vld [vmem:[#allocation10 + $0x390] sm:$0xff]
    %v2344 = vld [vmem:[#allocation10 + $0x398] sm:$0xff]
    %v2345 = vld [vmem:[#allocation10 + $0x3a0] sm:$0xff]
    %v2346 = vld [vmem:[#allocation10 + $0x3a8] sm:$0xff]
    %v2347 = vld [vmem:[#allocation10 + $0x3b0] sm:$0xff]
    %v2348 = vld [vmem:[#allocation10 + $0x3b8] sm:$0xff]
    %v2349 = vld [vmem:[#allocation10 + $0x3c0] sm:$0xff]
    %v2350 = vld [vmem:[#allocation10 + $0x3c8] sm:$0xff]
    %v2351 = vld [vmem:[#allocation10 + $0x3d0] sm:$0xff]
    %v2352 = vld [vmem:[#allocation10 + $0x3d8] sm:$0xff]
    %v2353 = vld [vmem:[#allocation10 + $0x3e0] sm:$0xff]
    %v2354 = vld [vmem:[#allocation10 + $0x3e8] sm:$0xff]
    %v2355 = vld [vmem:[#allocation10 + $0x3f0] sm:$0xff]
    %v2356 = vld [vmem:[#allocation10 + $0x3f8] sm:$0xff]
    %v2357 = vld [vmem:[#allocation10 + $0x400] sm:$0xff]
    %v2358 = vld [vmem:[#allocation10 + $0x408] sm:$0xff]
    %v2359 = vld [vmem:[#allocation10 + $0x410] sm:$0xff]
    %v2360 = vld [vmem:[#allocation10 + $0x418] sm:$0xff]
    %v2361 = vld [vmem:[#allocation10 + $0x420] sm:$0xff]
    %v2362 = vld [vmem:[#allocation10 + $0x428] sm:$0xff]
    %v2363 = vld [vmem:[#allocation10 + $0x430] sm:$0xff]
    %v2364 = vld [vmem:[#allocation10 + $0x438] sm:$0xff]
    %v2365 = vld [vmem:[#allocation10 + $0x440] sm:$0xff]
    %v2366 = vld [vmem:[#allocation10 + $0x448] sm:$0xff]
    %v2367 = vld [vmem:[#allocation10 + $0x450] sm:$0xff]
    %v2368 = vld [vmem:[#allocation10 + $0x458] sm:$0xff]
    %v2369 = vld [vmem:[#allocation10 + $0x460] sm:$0xff]
    %v2370 = vld [vmem:[#allocation10 + $0x468] sm:$0xff]
    %v2371 = vld [vmem:[#allocation10 + $0x470] sm:$0xff]
    %v2372 = vld [vmem:[#allocation10 + $0x478] sm:$0xff]
    %v2373 = vld [vmem:[#allocation10 + $0x480] sm:$0xff]
    %v2374 = vld [vmem:[#allocation10 + $0x488] sm:$0xff]
    %v2375 = vld [vmem:[#allocation10 + $0x490] sm:$0xff]
    %v2376 = vld [vmem:[#allocation10 + $0x498] sm:$0xff]
    %v2377 = vld [vmem:[#allocation10 + $0x4a0] sm:$0xff]
    %v2378 = vld [vmem:[#allocation10 + $0x4a8] sm:$0xff]
    %v2379 = vld [vmem:[#allocation10 + $0x4b0] sm:$0xff]
    %v2380 = vld [vmem:[#allocation10 + $0x4b8] sm:$0xff]
    %v2381 = vld [vmem:[#allocation10 + $0x4c0] sm:$0xff]
    %v2382 = vld [vmem:[#allocation10 + $0x4c8] sm:$0xff]
    %v2383 = vld [vmem:[#allocation10 + $0x4d0] sm:$0xff]
    %v2384 = vld [vmem:[#allocation10 + $0x4d8] sm:$0xff]
    %v2385 = vld [vmem:[#allocation10 + $0x4e0] sm:$0xff]
    %v2386 = vld [vmem:[#allocation10 + $0x4e8] sm:$0xff]
    %v2387 = vld [vmem:[#allocation10 + $0x4f0] sm:$0xff]
    %v2388 = vld [vmem:[#allocation10 + $0x4f8] sm:$0xff]
    %v2389 = vld [vmem:[#allocation10 + $0x500] sm:$0xff]
    %v2390 = vld [vmem:[#allocation10 + $0x508] sm:$0xff]
    %v2391 = vld [vmem:[#allocation10 + $0x510] sm:$0xff]
    %v2392 = vld [vmem:[#allocation10 + $0x518] sm:$0xff]
    %v2393 = vld [vmem:[#allocation10 + $0x520] sm:$0xff]
    %v2394 = vld [vmem:[#allocation10 + $0x528] sm:$0xff]
    %v2395 = vld [vmem:[#allocation10 + $0x530] sm:$0xff]
    %v2396 = vld [vmem:[#allocation10 + $0x538] sm:$0xff]
    %v2397 = vld [vmem:[#allocation10 + $0x540] sm:$0xff]
    %v2398 = vld [vmem:[#allocation10 + $0x548] sm:$0xff]
    %v2399 = vld [vmem:[#allocation10 + $0x550] sm:$0xff]
    %v2400 = vld [vmem:[#allocation10 + $0x558] sm:$0xff]
    %v2401 = vld [vmem:[#allocation10 + $0x560] sm:$0xff]
    %v2402 = vld [vmem:[#allocation10 + $0x568] sm:$0xff]
    %v2403 = vld [vmem:[#allocation10 + $0x570] sm:$0xff]
    %v2404 = vld [vmem:[#allocation10 + $0x578] sm:$0xff]
    %v2405 = vld [vmem:[#allocation10 + $0x580] sm:$0xff]
    %v2406 = vld [vmem:[#allocation10 + $0x588] sm:$0xff]
    %v2407 = vld [vmem:[#allocation10 + $0x590] sm:$0xff]
    %v2408 = vld [vmem:[#allocation10 + $0x598] sm:$0xff]
    %v2409 = vld [vmem:[#allocation10 + $0x5a0] sm:$0xff]
    %v2410 = vld [vmem:[#allocation10 + $0x5a8] sm:$0xff]
    %v2411 = vld [vmem:[#allocation10 + $0x5b0] sm:$0xff]
    %v2412 = vld [vmem:[#allocation10 + $0x5b8] sm:$0xff]
    %v2413 = vld [vmem:[#allocation10 + $0x5c0] sm:$0xff]
    %v2414 = vld [vmem:[#allocation10 + $0x5c8] sm:$0xff]
    %v2415 = vld [vmem:[#allocation10 + $0x5d0] sm:$0xff]
    %v2416 = vld [vmem:[#allocation10 + $0x5d8] sm:$0xff]
    %v2417 = vld [vmem:[#allocation10 + $0x5e0] sm:$0xff]
    %v2418 = vld [vmem:[#allocation10 + $0x5e8] sm:$0xff]
    %v2419 = vld [vmem:[#allocation10 + $0x5f0] sm:$0xff]
    %v2420 = vld [vmem:[#allocation10 + $0x5f8] sm:$0xff]
    %v2421 = vld [vmem:[#allocation12] sm:$0x3f]
    %v2423 = vlaneseq
    %v2424 = vshrl.u32 %v2423, 7
    %v2425 = vsub.s32 0, %v2424
    %v2426 = vrot.slane %v2225, %v2425
    %v2427 = vlaneseq
    %v2428 = vshrl.u32 %v2427, 7
    %v2429 = vsub.s32 1, %v2428
    %v2430 = vrot.slane %v2225, %v2429
    %v2434 = vlaneseq
    %v2435 = vshrl.u32 %v2434, 7
    %v2436 = vsub.s32 0, %v2435
    %v2437 = vrot.slane %v2421, %v2436
    %v2438 = vlaneseq
    %v2439 = vshrl.u32 %v2438, 7
    %v2440 = vsub.s32 1, %v2439
    %v2441 = vrot.slane %v2421, %v2440
    %v2442 = vlaneseq
    %v2443 = vshrl.u32 %v2442, 7
    %v2444 = vsub.s32 2, %v2443
    %v2445 = vrot.slane %v2421, %v2444
    %v2446 = vlaneseq
    %v2447 = vshrl.u32 %v2446, 7
    %v2448 = vsub.s32 3, %v2447
    %v2449 = vrot.slane %v2421, %v2448
    %v2450 = vlaneseq
    %v2451 = vshrl.u32 %v2450, 7
    %v2452 = vsub.s32 4, %v2451
    %v2453 = vrot.slane %v2421, %v2452
    %v2454 = vlaneseq
    %v2455 = vshrl.u32 %v2454, 7
    %v2456 = vsub.s32 5, %v2455
    %v2457 = vrot.slane %v2421, %v2456
    %2464 = vmatprep.subr.mxu0 %v2320
    %2465 = vmatpush1.msra.mxu0 %v2319
    %2466 = vmatprep.subr.mxu0 %v2314
    %2467 = vmatpush1.msra.mxu0 %v2313
    %2468 = vmatprep.subr.mxu0 %v2308
    %2469 = vmatpush1.msra.mxu0 %v2307
    %2470 = vmatprep.subr.mxu0 %v2302
    %2471 = vmatpush1.msra.mxu0 %v2301
    %2472 = vmatprep.subr.mxu0 %v2296
    %2473 = vmatpush1.msra.mxu0 %v2295
    %2474 = vmatprep.subr.mxu0 %v2290
    %2475 = vmatpush1.msra.mxu0 %v2289
    %2476 = vmatprep.subr.mxu0 %v2284
    %2477 = vmatpush1.msra.mxu0 %v2283
    %2478 = vmatprep.subr.mxu0 %v2278
    %2479 = vmatpush1.msra.mxu0 %v2277
    %2480 = vmatprep.subr.mxu0 %v2272
    %2481 = vmatpush1.msra.mxu0 %v2271
    %2482 = vmatprep.subr.mxu0 %v2266
    %2483 = vmatpush1.msra.mxu0 %v2265
    %2484 = vmatprep.subr.mxu0 %v2260
    %2485 = vmatpush1.msra.mxu0 %v2259
    %2486 = vmatprep.subr.mxu0 %v2254
    %2487 = vmatpush1.msra.mxu0 %v2253
    %2488 = vmatprep.subr.mxu0 %v2248
    %2489 = vmatpush1.msra.mxu0 %v2247
    %2490 = vmatprep.subr.mxu0 %v2242
    %2491 = vmatpush1.msra.mxu0 %v2241
    %2492 = vmatprep.subr.mxu0 %v2236
    %2493 = vmatpush1.msra.mxu0 %v2235
    %2494 = vmatprep.subr.mxu0 %v2230
    %2495 = vmatpush1.msra.mxu0 %v2229
    %2496 = vmatprep.subr.mxu0 %v2416
    %2497 = vmatpush2.msra.mxu0 %v2415
    %2498 = vmatprep.subr.mxu0 %v2410
    %2499 = vmatpush2.msra.mxu0 %v2409
    %2500 = vmatprep.subr.mxu0 %v2404
    %2501 = vmatpush2.msra.mxu0 %v2403
    %2502 = vmatprep.subr.mxu0 %v2398
    %2503 = vmatpush2.msra.mxu0 %v2397
    %2504 = vmatprep.subr.mxu0 %v2392
    %2505 = vmatpush2.msra.mxu0 %v2391
    %2506 = vmatprep.subr.mxu0 %v2386
    %2507 = vmatpush2.msra.mxu0 %v2385
    %2508 = vmatprep.subr.mxu0 %v2380
    %2509 = vmatpush2.msra.mxu0 %v2379
    %2510 = vmatprep.subr.mxu0 %v2374
    %2511 = vmatpush2.msra.mxu0 %v2373
    %2512 = vmatprep.subr.mxu0 %v2368
    %2513 = vmatpush2.msra.mxu0 %v2367
    %2514 = vmatprep.subr.mxu0 %v2362
    %2515 = vmatpush2.msra.mxu0 %v2361
    %2516 = vmatprep.subr.mxu0 %v2356
    %2517 = vmatpush2.msra.mxu0 %v2355
    %2518 = vmatprep.subr.mxu0 %v2350
    %2519 = vmatpush2.msra.mxu0 %v2349
    %2520 = vmatprep.subr.mxu0 %v2344
    %2521 = vmatpush2.msra.mxu0 %v2343
    %2522 = vmatprep.subr.mxu0 %v2338
    %2523 = vmatpush2.msra.mxu0 %v2337
    %2524 = vmatprep.subr.mxu0 %v2332
    %2525 = vmatpush2.msra.mxu0 %v2331
    %2526 = vmatprep.subr.mxu0 %v2326
    %2527 = vmatpush2.msra.mxu0 %v2325
    %2528 = vmatprep.mubr.f32.mxu0 %v2430
    %2529 = vmatmul.mubr.f32.gmra.mxu0 %v2426
    %v2530 = vpop.f32.mrf.mxu0
    %v2531 = vadd.f32 %v2437, %v2530
    %v2532 = vpop.f32.mrf.mxu0
    %v2533 = vadd.f32 %v2441, %v2532
    %2534 = vdwg.mxu0
    %2535 = vmatprep.subr.mxu0 %v2322
    %2536 = vmatpush1.msra.mxu0 %v2321
    %2537 = vmatprep.subr.mxu0 %v2316
    %2538 = vmatpush1.msra.mxu0 %v2315
    %2539 = vmatprep.subr.mxu0 %v2310
    %2540 = vmatpush1.msra.mxu0 %v2309
    %2541 = vmatprep.subr.mxu0 %v2304
    %2542 = vmatpush1.msra.mxu0 %v2303
    %2543 = vmatprep.subr.mxu0 %v2298
    %2544 = vmatpush1.msra.mxu0 %v2297
    %2545 = vmatprep.subr.mxu0 %v2292
    %2546 = vmatpush1.msra.mxu0 %v2291
    %2547 = vmatprep.subr.mxu0 %v2286
    %2548 = vmatpush1.msra.mxu0 %v2285
    %2549 = vmatprep.subr.mxu0 %v2280
    %2550 = vmatpush1.msra.mxu0 %v2279
    %2551 = vmatprep.subr.mxu0 %v2274
    %2552 = vmatpush1.msra.mxu0 %v2273
    %2553 = vmatprep.subr.mxu0 %v2268
    %2554 = vmatpush1.msra.mxu0 %v2267
    %2555 = vmatprep.subr.mxu0 %v2262
    %2556 = vmatpush1.msra.mxu0 %v2261
    %2557 = vmatprep.subr.mxu0 %v2256
    %2558 = vmatpush1.msra.mxu0 %v2255
    %2559 = vmatprep.subr.mxu0 %v2250
    %2560 = vmatpush1.msra.mxu0 %v2249
    %2561 = vmatprep.subr.mxu0 %v2244
    %2562 = vmatpush1.msra.mxu0 %v2243
    %2563 = vmatprep.subr.mxu0 %v2238
    %2564 = vmatpush1.msra.mxu0 %v2237
    %2565 = vmatprep.subr.mxu0 %v2232
    %2566 = vmatpush1.msra.mxu0 %v2231
    %2567 = vmatprep.subr.mxu0 %v2418
    %2568 = vmatpush2.msra.mxu0 %v2417
    %2569 = vmatprep.subr.mxu0 %v2412
    %2570 = vmatpush2.msra.mxu0 %v2411
    %2571 = vmatprep.subr.mxu0 %v2406
    %2572 = vmatpush2.msra.mxu0 %v2405
    %2573 = vmatprep.subr.mxu0 %v2400
    %2574 = vmatpush2.msra.mxu0 %v2399
    %2575 = vmatprep.subr.mxu0 %v2394
    %2576 = vmatpush2.msra.mxu0 %v2393
    %2577 = vmatprep.subr.mxu0 %v2388
    %2578 = vmatpush2.msra.mxu0 %v2387
    %2579 = vmatprep.subr.mxu0 %v2382
    %2580 = vmatpush2.msra.mxu0 %v2381
    %2581 = vmatprep.subr.mxu0 %v2376
    %2582 = vmatpush2.msra.mxu0 %v2375
    %2583 = vmatprep.subr.mxu0 %v2370
    %2584 = vmatpush2.msra.mxu0 %v2369
    %2585 = vmatprep.subr.mxu0 %v2364
    %2586 = vmatpush2.msra.mxu0 %v2363
    %2587 = vmatprep.subr.mxu0 %v2358
    %2588 = vmatpush2.msra.mxu0 %v2357
    %2589 = vmatprep.subr.mxu0 %v2352
    %2590 = vmatpush2.msra.mxu0 %v2351
    %2591 = vmatprep.subr.mxu0 %v2346
    %2592 = vmatpush2.msra.mxu0 %v2345
    %2593 = vmatprep.subr.mxu0 %v2340
    %2594 = vmatpush2.msra.mxu0 %v2339
    %2595 = vmatprep.subr.mxu0 %v2334
    %2596 = vmatpush2.msra.mxu0 %v2333
    %2597 = vmatprep.subr.mxu0 %v2328
    %2598 = vmatpush2.msra.mxu0 %v2327
    %2599 = vmatprep.mubr.f32.mxu0 %v2430
    %2600 = vmatmul.mubr.f32.gmra.mxu0 %v2426
    %v2601 = vpop.f32.mrf.mxu0
    %v2602 = vadd.f32 %v2445, %v2601
    %v2603 = vpop.f32.mrf.mxu0
    %v2604 = vadd.f32 %v2449, %v2603
    %2605 = vdwg.mxu0
    %2606 = vmatprep.subr.mxu0 %v2324
    %2607 = vmatpush1.msra.mxu0 %v2323
    %2608 = vmatprep.subr.mxu0 %v2318
    %2609 = vmatpush1.msra.mxu0 %v2317
    %2610 = vmatprep.subr.mxu0 %v2312
    %2611 = vmatpush1.msra.mxu0 %v2311
    %2612 = vmatprep.subr.mxu0 %v2306
    %2613 = vmatpush1.msra.mxu0 %v2305
    %2614 = vmatprep.subr.mxu0 %v2300
    %2615 = vmatpush1.msra.mxu0 %v2299
    %2616 = vmatprep.subr.mxu0 %v2294
    %2617 = vmatpush1.msra.mxu0 %v2293
    %2618 = vmatprep.subr.mxu0 %v2288
    %2619 = vmatpush1.msra.mxu0 %v2287
    %2620 = vmatprep.subr.mxu0 %v2282
    %2621 = vmatpush1.msra.mxu0 %v2281
    %2622 = vmatprep.subr.mxu0 %v2276
    %2623 = vmatpush1.msra.mxu0 %v2275
    %2624 = vmatprep.subr.mxu0 %v2270
    %2625 = vmatpush1.msra.mxu0 %v2269
    %2626 = vmatprep.subr.mxu0 %v2264
    %2627 = vmatpush1.msra.mxu0 %v2263
    %2628 = vmatprep.subr.mxu0 %v2258
    %2629 = vmatpush1.msra.mxu0 %v2257
    %2630 = vmatprep.subr.mxu0 %v2252
    %2631 = vmatpush1.msra.mxu0 %v2251
    %2632 = vmatprep.subr.mxu0 %v2246
    %2633 = vmatpush1.msra.mxu0 %v2245
    %2634 = vmatprep.subr.mxu0 %v2240
    %2635 = vmatpush1.msra.mxu0 %v2239
    %2636 = vmatprep.subr.mxu0 %v2234
    %2637 = vmatpush1.msra.mxu0 %v2233
    %2638 = vmatprep.subr.mxu0 %v2420
    %2639 = vmatpush2.msra.mxu0 %v2419
    %2640 = vmatprep.subr.mxu0 %v2414
    %2641 = vmatpush2.msra.mxu0 %v2413
    %2642 = vmatprep.subr.mxu0 %v2408
    %2643 = vmatpush2.msra.mxu0 %v2407
    %2644 = vmatprep.subr.mxu0 %v2402
    %2645 = vmatpush2.msra.mxu0 %v2401
    %2646 = vmatprep.subr.mxu0 %v2396
    %2647 = vmatpush2.msra.mxu0 %v2395
    %2648 = vmatprep.subr.mxu0 %v2390
    %2649 = vmatpush2.msra.mxu0 %v2389
    %2650 = vmatprep.subr.mxu0 %v2384
    %2651 = vmatpush2.msra.mxu0 %v2383
    %2652 = vmatprep.subr.mxu0 %v2378
    %2653 = vmatpush2.msra.mxu0 %v2377
    %2654 = vmatprep.subr.mxu0 %v2372
    %2655 = vmatpush2.msra.mxu0 %v2371
    %2656 = vmatprep.subr.mxu0 %v2366
    %2657 = vmatpush2.msra.mxu0 %v2365
    %2658 = vmatprep.subr.mxu0 %v2360
    %2659 = vmatpush2.msra.mxu0 %v2359
    %2660 = vmatprep.subr.mxu0 %v2354
    %2661 = vmatpush2.msra.mxu0 %v2353
    %2662 = vmatprep.subr.mxu0 %v2348
    %2663 = vmatpush2.msra.mxu0 %v2347
    %2664 = vmatprep.subr.mxu0 %v2342
    %2665 = vmatpush2.msra.mxu0 %v2341
    %2666 = vmatprep.subr.mxu0 %v2336
    %2667 = vmatpush2.msra.mxu0 %v2335
    %2668 = vmatprep.subr.mxu0 %v2330
    %2669 = vmatpush2.msra.mxu0 %v2329
    %2670 = vmatprep.mubr.f32.mxu0 %v2430
    %2671 = vmatmul.mubr.f32.gmra.mxu0 %v2426
    %v2672 = vpop.f32.mrf.mxu0
    %v2673 = vadd.f32 %v2453, %v2672
    %v2674 = vpop.f32.mrf.mxu0
    %v2675 = vadd.f32 %v2457, %v2674
    %2676 = vdwg.mxu0
    %s2677 = scalar_lea.vmem [#allocation3], 3
    %v2678 = vld [vmem:[%s2677] ss:$8 sm:$0xf]
    %v2679 = vld [vmem:[%s2677] ss:$8 sm:$0x30]
    %v2680 = vor.u32 %v2678, %v2679
    %v2683 = vcombine.low %v2531, %v2533
    %v2685 = vunpack.c.l.s4 1966171168
    %v2686 = vunpack.c.0.s8 %v2685
    %v2687 = vlaneseq
    %v2688 = vshrl.u32 %v2687, 7
    %v2689 = vsub.s32 %v2686, %v2688
    %v2690 = vrot.slane %v2683, %v2689
    %v2692 = vunpack.c.l.s4 1966171168
    %v2693 = vunpack.c.0.s8 %v2692
    %v2694 = vlaneseq
    %v2695 = vshrl.u32 %v2694, 7
    %v2696 = vsub.s32 %v2693, %v2695
    %v2697 = vrot.slane %v2690, %v2696
    %v2699 = vadd.f32 %v2680, %v2697
    %v2700 = vxor.u32 %v2699, 2147483648
    %v2701 = vmul.f32 %v2700, 1.442695
    %v2702 = vpow.pop %v2701
    %v2703 = vadd.f32 %v2702, 1.0
    %v2704 = vrcp.pop %v2703
    %v2705 = vmul.f32 1.0, %v2704
    %v2707 = vrot.slane %v2680, 2
    %v2711 = vcombine.low %v2602, %v2604
    %v2713 = vunpack.c.l.s4 1966171168
    %v2714 = vunpack.c.0.s8 %v2713
    %v2715 = vlaneseq
    %v2716 = vshrl.u32 %v2715, 7
    %v2717 = vsub.s32 %v2714, %v2716
    %v2718 = vrot.slane %v2711, %v2717
    %v2720 = vunpack.c.l.s4 1966171168
    %v2721 = vunpack.c.0.s8 %v2720
    %v2722 = vlaneseq
    %v2723 = vshrl.u32 %v2722, 7
    %v2724 = vsub.s32 %v2721, %v2723
    %v2725 = vrot.slane %v2718, %v2724
    %v2727 = vadd.f32 %v2707, %v2725
    %v2728 = vxor.u32 %v2727, 2147483648
    %v2729 = vmul.f32 %v2728, 1.442695
    %v2730 = vpow.pop %v2729
    %v2731 = vadd.f32 %v2730, 1.0
    %v2732 = vrcp.pop %v2731
    %v2733 = vmul.f32 1.0, %v2732
    %v2736 = vcombine.low %v2673, %v2675
    %v2738 = vunpack.c.l.s4 1966171168
    %v2739 = vunpack.c.0.s8 %v2738
    %v2740 = vlaneseq
    %v2741 = vshrl.u32 %v2740, 7
    %v2742 = vsub.s32 %v2739, %v2741
    %v2743 = vrot.slane %v2736, %v2742
    %v2745 = vunpack.c.l.s4 1966171168
    %v2746 = vunpack.c.0.s8 %v2745
    %v2747 = vlaneseq
    %v2748 = vshrl.u32 %v2747, 7
    %v2749 = vsub.s32 %v2746, %v2748
    %v2750 = vrot.slane %v2743, %v2749
    %v2752 = vmul.f32 %v2705, %v2750
    %v2753 = vrot.slane %v2680, 4
    %v2755 = vadd.f32 %v2753, %v2752
    %v2756 = vtanh.pop %v2755
    %v2757 = vsub.f32 1.0, %v2733
    %v2758 = vmul.f32 %v2757, %v2756
    %v2759 = vmul.f32 %v2733, %v2225
    %v2760 = vadd.f32 %v2758, %v2759
    %s2761 = scalar_lea.vmem [#allocation13], 3
    %2762 = vst.msk [vmem:[%s2761] ss:$8 sm:$0x3] %vm1156, %v2760
    %2763 = vst.msk [vmem:[%s2761] ss:$8 sm:$0x0] %vm1156, %v2760
    %v2764 = vld [vmem:[#allocation10] sm:$0xff]
    %v2765 = vld [vmem:[#allocation10 + $0x8] sm:$0xff]
    %v2766 = vld [vmem:[#allocation10 + $0x10] sm:$0xff]
    %v2767 = vld [vmem:[#allocation10 + $0x18] sm:$0xff]
    %v2768 = vld [vmem:[#allocation10 + $0x20] sm:$0xff]
    %v2769 = vld [vmem:[#allocation10 + $0x28] sm:$0xff]
    %v2770 = vld [vmem:[#allocation10 + $0x30] sm:$0xff]
    %v2771 = vld [vmem:[#allocation10 + $0x38] sm:$0xff]
    %v2772 = vld [vmem:[#allocation10 + $0x40] sm:$0xff]
    %v2773 = vld [vmem:[#allocation10 + $0x48] sm:$0xff]
    %v2774 = vld [vmem:[#allocation10 + $0x50] sm:$0xff]
    %v2775 = vld [vmem:[#allocation10 + $0x58] sm:$0xff]
    %v2776 = vld [vmem:[#allocation10 + $0x60] sm:$0xff]
    %v2777 = vld [vmem:[#allocation10 + $0x68] sm:$0xff]
    %v2778 = vld [vmem:[#allocation10 + $0x70] sm:$0xff]
    %v2779 = vld [vmem:[#allocation10 + $0x78] sm:$0xff]
    %v2780 = vld [vmem:[#allocation10 + $0x80] sm:$0xff]
    %v2781 = vld [vmem:[#allocation10 + $0x88] sm:$0xff]
    %v2782 = vld [vmem:[#allocation10 + $0x90] sm:$0xff]
    %v2783 = vld [vmem:[#allocation10 + $0x98] sm:$0xff]
    %v2784 = vld [vmem:[#allocation10 + $0xa0] sm:$0xff]
    %v2785 = vld [vmem:[#allocation10 + $0xa8] sm:$0xff]
    %v2786 = vld [vmem:[#allocation10 + $0xb0] sm:$0xff]
    %v2787 = vld [vmem:[#allocation10 + $0xb8] sm:$0xff]
    %v2788 = vld [vmem:[#allocation10 + $0xc0] sm:$0xff]
    %v2789 = vld [vmem:[#allocation10 + $0xc8] sm:$0xff]
    %v2790 = vld [vmem:[#allocation10 + $0xd0] sm:$0xff]
    %v2791 = vld [vmem:[#allocation10 + $0xd8] sm:$0xff]
    %v2792 = vld [vmem:[#allocation10 + $0xe0] sm:$0xff]
    %v2793 = vld [vmem:[#allocation10 + $0xe8] sm:$0xff]
    %v2794 = vld [vmem:[#allocation10 + $0xf0] sm:$0xff]
    %v2795 = vld [vmem:[#allocation10 + $0xf8] sm:$0xff]
    %v2796 = vld [vmem:[#allocation10 + $0x100] sm:$0xff]
    %v2797 = vld [vmem:[#allocation10 + $0x108] sm:$0xff]
    %v2798 = vld [vmem:[#allocation10 + $0x110] sm:$0xff]
    %v2799 = vld [vmem:[#allocation10 + $0x118] sm:$0xff]
    %v2800 = vld [vmem:[#allocation10 + $0x120] sm:$0xff]
    %v2801 = vld [vmem:[#allocation10 + $0x128] sm:$0xff]
    %v2802 = vld [vmem:[#allocation10 + $0x130] sm:$0xff]
    %v2803 = vld [vmem:[#allocation10 + $0x138] sm:$0xff]
    %v2804 = vld [vmem:[#allocation10 + $0x140] sm:$0xff]
    %v2805 = vld [vmem:[#allocation10 + $0x148] sm:$0xff]
    %v2806 = vld [vmem:[#allocation10 + $0x150] sm:$0xff]
    %v2807 = vld [vmem:[#allocation10 + $0x158] sm:$0xff]
    %v2808 = vld [vmem:[#allocation10 + $0x160] sm:$0xff]
    %v2809 = vld [vmem:[#allocation10 + $0x168] sm:$0xff]
    %v2810 = vld [vmem:[#allocation10 + $0x170] sm:$0xff]
    %v2811 = vld [vmem:[#allocation10 + $0x178] sm:$0xff]
    %v2812 = vld [vmem:[#allocation10 + $0x180] sm:$0xff]
    %v2813 = vld [vmem:[#allocation10 + $0x188] sm:$0xff]
    %v2814 = vld [vmem:[#allocation10 + $0x190] sm:$0xff]
    %v2815 = vld [vmem:[#allocation10 + $0x198] sm:$0xff]
    %v2816 = vld [vmem:[#allocation10 + $0x1a0] sm:$0xff]
    %v2817 = vld [vmem:[#allocation10 + $0x1a8] sm:$0xff]
    %v2818 = vld [vmem:[#allocation10 + $0x1b0] sm:$0xff]
    %v2819 = vld [vmem:[#allocation10 + $0x1b8] sm:$0xff]
    %v2820 = vld [vmem:[#allocation10 + $0x1c0] sm:$0xff]
    %v2821 = vld [vmem:[#allocation10 + $0x1c8] sm:$0xff]
    %v2822 = vld [vmem:[#allocation10 + $0x1d0] sm:$0xff]
    %v2823 = vld [vmem:[#allocation10 + $0x1d8] sm:$0xff]
    %v2824 = vld [vmem:[#allocation10 + $0x1e0] sm:$0xff]
    %v2825 = vld [vmem:[#allocation10 + $0x1e8] sm:$0xff]
    %v2826 = vld [vmem:[#allocation10 + $0x1f0] sm:$0xff]
    %v2827 = vld [vmem:[#allocation10 + $0x1f8] sm:$0xff]
    %v2828 = vld [vmem:[#allocation10 + $0x200] sm:$0xff]
    %v2829 = vld [vmem:[#allocation10 + $0x208] sm:$0xff]
    %v2830 = vld [vmem:[#allocation10 + $0x210] sm:$0xff]
    %v2831 = vld [vmem:[#allocation10 + $0x218] sm:$0xff]
    %v2832 = vld [vmem:[#allocation10 + $0x220] sm:$0xff]
    %v2833 = vld [vmem:[#allocation10 + $0x228] sm:$0xff]
    %v2834 = vld [vmem:[#allocation10 + $0x230] sm:$0xff]
    %v2835 = vld [vmem:[#allocation10 + $0x238] sm:$0xff]
    %v2836 = vld [vmem:[#allocation10 + $0x240] sm:$0xff]
    %v2837 = vld [vmem:[#allocation10 + $0x248] sm:$0xff]
    %v2838 = vld [vmem:[#allocation10 + $0x250] sm:$0xff]
    %v2839 = vld [vmem:[#allocation10 + $0x258] sm:$0xff]
    %v2840 = vld [vmem:[#allocation10 + $0x260] sm:$0xff]
    %v2841 = vld [vmem:[#allocation10 + $0x268] sm:$0xff]
    %v2842 = vld [vmem:[#allocation10 + $0x270] sm:$0xff]
    %v2843 = vld [vmem:[#allocation10 + $0x278] sm:$0xff]
    %v2844 = vld [vmem:[#allocation10 + $0x280] sm:$0xff]
    %v2845 = vld [vmem:[#allocation10 + $0x288] sm:$0xff]
    %v2846 = vld [vmem:[#allocation10 + $0x290] sm:$0xff]
    %v2847 = vld [vmem:[#allocation10 + $0x298] sm:$0xff]
    %v2848 = vld [vmem:[#allocation10 + $0x2a0] sm:$0xff]
    %v2849 = vld [vmem:[#allocation10 + $0x2a8] sm:$0xff]
    %v2850 = vld [vmem:[#allocation10 + $0x2b0] sm:$0xff]
    %v2851 = vld [vmem:[#allocation10 + $0x2b8] sm:$0xff]
    %v2852 = vld [vmem:[#allocation10 + $0x2c0] sm:$0xff]
    %v2853 = vld [vmem:[#allocation10 + $0x2c8] sm:$0xff]
    %v2854 = vld [vmem:[#allocation10 + $0x2d0] sm:$0xff]
    %v2855 = vld [vmem:[#allocation10 + $0x2d8] sm:$0xff]
    %v2856 = vld [vmem:[#allocation10 + $0x2e0] sm:$0xff]
    %v2857 = vld [vmem:[#allocation10 + $0x2e8] sm:$0xff]
    %v2858 = vld [vmem:[#allocation10 + $0x2f0] sm:$0xff]
    %v2859 = vld [vmem:[#allocation10 + $0x2f8] sm:$0xff]
    %v2860 = vld [vmem:[#allocation10 + $0x300] sm:$0xff]
    %v2861 = vld [vmem:[#allocation10 + $0x308] sm:$0xff]
    %v2862 = vld [vmem:[#allocation10 + $0x310] sm:$0xff]
    %v2863 = vld [vmem:[#allocation10 + $0x318] sm:$0xff]
    %v2864 = vld [vmem:[#allocation10 + $0x320] sm:$0xff]
    %v2865 = vld [vmem:[#allocation10 + $0x328] sm:$0xff]
    %v2866 = vld [vmem:[#allocation10 + $0x330] sm:$0xff]
    %v2867 = vld [vmem:[#allocation10 + $0x338] sm:$0xff]
    %v2868 = vld [vmem:[#allocation10 + $0x340] sm:$0xff]
    %v2869 = vld [vmem:[#allocation10 + $0x348] sm:$0xff]
    %v2870 = vld [vmem:[#allocation10 + $0x350] sm:$0xff]
    %v2871 = vld [vmem:[#allocation10 + $0x358] sm:$0xff]
    %v2872 = vld [vmem:[#allocation10 + $0x360] sm:$0xff]
    %v2873 = vld [vmem:[#allocation10 + $0x368] sm:$0xff]
    %v2874 = vld [vmem:[#allocation10 + $0x370] sm:$0xff]
    %v2875 = vld [vmem:[#allocation10 + $0x378] sm:$0xff]
    %v2876 = vld [vmem:[#allocation10 + $0x380] sm:$0xff]
    %v2877 = vld [vmem:[#allocation10 + $0x388] sm:$0xff]
    %v2878 = vld [vmem:[#allocation10 + $0x390] sm:$0xff]
    %v2879 = vld [vmem:[#allocation10 + $0x398] sm:$0xff]
    %v2880 = vld [vmem:[#allocation10 + $0x3a0] sm:$0xff]
    %v2881 = vld [vmem:[#allocation10 + $0x3a8] sm:$0xff]
    %v2882 = vld [vmem:[#allocation10 + $0x3b0] sm:$0xff]
    %v2883 = vld [vmem:[#allocation10 + $0x3b8] sm:$0xff]
    %v2884 = vld [vmem:[#allocation10 + $0x3c0] sm:$0xff]
    %v2885 = vld [vmem:[#allocation10 + $0x3c8] sm:$0xff]
    %v2886 = vld [vmem:[#allocation10 + $0x3d0] sm:$0xff]
    %v2887 = vld [vmem:[#allocation10 + $0x3d8] sm:$0xff]
    %v2888 = vld [vmem:[#allocation10 + $0x3e0] sm:$0xff]
    %v2889 = vld [vmem:[#allocation10 + $0x3e8] sm:$0xff]
    %v2890 = vld [vmem:[#allocation10 + $0x3f0] sm:$0xff]
    %v2891 = vld [vmem:[#allocation10 + $0x3f8] sm:$0xff]
    %v2892 = vld [vmem:[#allocation10 + $0x400] sm:$0xff]
    %v2893 = vld [vmem:[#allocation10 + $0x408] sm:$0xff]
    %v2894 = vld [vmem:[#allocation10 + $0x410] sm:$0xff]
    %v2895 = vld [vmem:[#allocation10 + $0x418] sm:$0xff]
    %v2896 = vld [vmem:[#allocation10 + $0x420] sm:$0xff]
    %v2897 = vld [vmem:[#allocation10 + $0x428] sm:$0xff]
    %v2898 = vld [vmem:[#allocation10 + $0x430] sm:$0xff]
    %v2899 = vld [vmem:[#allocation10 + $0x438] sm:$0xff]
    %v2900 = vld [vmem:[#allocation10 + $0x440] sm:$0xff]
    %v2901 = vld [vmem:[#allocation10 + $0x448] sm:$0xff]
    %v2902 = vld [vmem:[#allocation10 + $0x450] sm:$0xff]
    %v2903 = vld [vmem:[#allocation10 + $0x458] sm:$0xff]
    %v2904 = vld [vmem:[#allocation10 + $0x460] sm:$0xff]
    %v2905 = vld [vmem:[#allocation10 + $0x468] sm:$0xff]
    %v2906 = vld [vmem:[#allocation10 + $0x470] sm:$0xff]
    %v2907 = vld [vmem:[#allocation10 + $0x478] sm:$0xff]
    %v2908 = vld [vmem:[#allocation10 + $0x480] sm:$0xff]
    %v2909 = vld [vmem:[#allocation10 + $0x488] sm:$0xff]
    %v2910 = vld [vmem:[#allocation10 + $0x490] sm:$0xff]
    %v2911 = vld [vmem:[#allocation10 + $0x498] sm:$0xff]
    %v2912 = vld [vmem:[#allocation10 + $0x4a0] sm:$0xff]
    %v2913 = vld [vmem:[#allocation10 + $0x4a8] sm:$0xff]
    %v2914 = vld [vmem:[#allocation10 + $0x4b0] sm:$0xff]
    %v2915 = vld [vmem:[#allocation10 + $0x4b8] sm:$0xff]
    %v2916 = vld [vmem:[#allocation10 + $0x4c0] sm:$0xff]
    %v2917 = vld [vmem:[#allocation10 + $0x4c8] sm:$0xff]
    %v2918 = vld [vmem:[#allocation10 + $0x4d0] sm:$0xff]
    %v2919 = vld [vmem:[#allocation10 + $0x4d8] sm:$0xff]
    %v2920 = vld [vmem:[#allocation10 + $0x4e0] sm:$0xff]
    %v2921 = vld [vmem:[#allocation10 + $0x4e8] sm:$0xff]
    %v2922 = vld [vmem:[#allocation10 + $0x4f0] sm:$0xff]
    %v2923 = vld [vmem:[#allocation10 + $0x4f8] sm:$0xff]
    %v2924 = vld [vmem:[#allocation10 + $0x500] sm:$0xff]
    %v2925 = vld [vmem:[#allocation10 + $0x508] sm:$0xff]
    %v2926 = vld [vmem:[#allocation10 + $0x510] sm:$0xff]
    %v2927 = vld [vmem:[#allocation10 + $0x518] sm:$0xff]
    %v2928 = vld [vmem:[#allocation10 + $0x520] sm:$0xff]
    %v2929 = vld [vmem:[#allocation10 + $0x528] sm:$0xff]
    %v2930 = vld [vmem:[#allocation10 + $0x530] sm:$0xff]
    %v2931 = vld [vmem:[#allocation10 + $0x538] sm:$0xff]
    %v2932 = vld [vmem:[#allocation10 + $0x540] sm:$0xff]
    %v2933 = vld [vmem:[#allocation10 + $0x548] sm:$0xff]
    %v2934 = vld [vmem:[#allocation10 + $0x550] sm:$0xff]
    %v2935 = vld [vmem:[#allocation10 + $0x558] sm:$0xff]
    %v2936 = vld [vmem:[#allocation10 + $0x560] sm:$0xff]
    %v2937 = vld [vmem:[#allocation10 + $0x568] sm:$0xff]
    %v2938 = vld [vmem:[#allocation10 + $0x570] sm:$0xff]
    %v2939 = vld [vmem:[#allocation10 + $0x578] sm:$0xff]
    %v2940 = vld [vmem:[#allocation10 + $0x580] sm:$0xff]
    %v2941 = vld [vmem:[#allocation10 + $0x588] sm:$0xff]
    %v2942 = vld [vmem:[#allocation10 + $0x590] sm:$0xff]
    %v2943 = vld [vmem:[#allocation10 + $0x598] sm:$0xff]
    %v2944 = vld [vmem:[#allocation10 + $0x5a0] sm:$0xff]
    %v2945 = vld [vmem:[#allocation10 + $0x5a8] sm:$0xff]
    %v2946 = vld [vmem:[#allocation10 + $0x5b0] sm:$0xff]
    %v2947 = vld [vmem:[#allocation10 + $0x5b8] sm:$0xff]
    %v2948 = vld [vmem:[#allocation10 + $0x5c0] sm:$0xff]
    %v2949 = vld [vmem:[#allocation10 + $0x5c8] sm:$0xff]
    %v2950 = vld [vmem:[#allocation10 + $0x5d0] sm:$0xff]
    %v2951 = vld [vmem:[#allocation10 + $0x5d8] sm:$0xff]
    %v2952 = vld [vmem:[#allocation10 + $0x5e0] sm:$0xff]
    %v2953 = vld [vmem:[#allocation10 + $0x5e8] sm:$0xff]
    %v2954 = vld [vmem:[#allocation10 + $0x5f0] sm:$0xff]
    %v2955 = vld [vmem:[#allocation10 + $0x5f8] sm:$0xff]
    %v2956 = vld [vmem:[#allocation12] sm:$0x3f]
    %v2958 = vlaneseq
    %v2959 = vshrl.u32 %v2958, 7
    %v2960 = vsub.s32 0, %v2959
    %v2961 = vrot.slane %v2760, %v2960
    %v2962 = vlaneseq
    %v2963 = vshrl.u32 %v2962, 7
    %v2964 = vsub.s32 1, %v2963
    %v2965 = vrot.slane %v2760, %v2964
    %v2969 = vlaneseq
    %v2970 = vshrl.u32 %v2969, 7
    %v2971 = vsub.s32 0, %v2970
    %v2972 = vrot.slane %v2956, %v2971
    %v2973 = vlaneseq
    %v2974 = vshrl.u32 %v2973, 7
    %v2975 = vsub.s32 1, %v2974
    %v2976 = vrot.slane %v2956, %v2975
    %v2977 = vlaneseq
    %v2978 = vshrl.u32 %v2977, 7
    %v2979 = vsub.s32 2, %v2978
    %v2980 = vrot.slane %v2956, %v2979
    %v2981 = vlaneseq
    %v2982 = vshrl.u32 %v2981, 7
    %v2983 = vsub.s32 3, %v2982
    %v2984 = vrot.slane %v2956, %v2983
    %v2985 = vlaneseq
    %v2986 = vshrl.u32 %v2985, 7
    %v2987 = vsub.s32 4, %v2986
    %v2988 = vrot.slane %v2956, %v2987
    %v2989 = vlaneseq
    %v2990 = vshrl.u32 %v2989, 7
    %v2991 = vsub.s32 5, %v2990
    %v2992 = vrot.slane %v2956, %v2991
    %2999 = vmatprep.subr.mxu0 %v2855
    %3000 = vmatpush1.msra.mxu0 %v2854
    %3001 = vmatprep.subr.mxu0 %v2849
    %3002 = vmatpush1.msra.mxu0 %v2848
    %3003 = vmatprep.subr.mxu0 %v2843
    %3004 = vmatpush1.msra.mxu0 %v2842
    %3005 = vmatprep.subr.mxu0 %v2837
    %3006 = vmatpush1.msra.mxu0 %v2836
    %3007 = vmatprep.subr.mxu0 %v2831
    %3008 = vmatpush1.msra.mxu0 %v2830
    %3009 = vmatprep.subr.mxu0 %v2825
    %3010 = vmatpush1.msra.mxu0 %v2824
    %3011 = vmatprep.subr.mxu0 %v2819
    %3012 = vmatpush1.msra.mxu0 %v2818
    %3013 = vmatprep.subr.mxu0 %v2813
    %3014 = vmatpush1.msra.mxu0 %v2812
    %3015 = vmatprep.subr.mxu0 %v2807
    %3016 = vmatpush1.msra.mxu0 %v2806
    %3017 = vmatprep.subr.mxu0 %v2801
    %3018 = vmatpush1.msra.mxu0 %v2800
    %3019 = vmatprep.subr.mxu0 %v2795
    %3020 = vmatpush1.msra.mxu0 %v2794
    %3021 = vmatprep.subr.mxu0 %v2789
    %3022 = vmatpush1.msra.mxu0 %v2788
    %3023 = vmatprep.subr.mxu0 %v2783
    %3024 = vmatpush1.msra.mxu0 %v2782
    %3025 = vmatprep.subr.mxu0 %v2777
    %3026 = vmatpush1.msra.mxu0 %v2776
    %3027 = vmatprep.subr.mxu0 %v2771
    %3028 = vmatpush1.msra.mxu0 %v2770
    %3029 = vmatprep.subr.mxu0 %v2765
    %3030 = vmatpush1.msra.mxu0 %v2764
    %3031 = vmatprep.subr.mxu0 %v2951
    %3032 = vmatpush2.msra.mxu0 %v2950
    %3033 = vmatprep.subr.mxu0 %v2945
    %3034 = vmatpush2.msra.mxu0 %v2944
    %3035 = vmatprep.subr.mxu0 %v2939
    %3036 = vmatpush2.msra.mxu0 %v2938
    %3037 = vmatprep.subr.mxu0 %v2933
    %3038 = vmatpush2.msra.mxu0 %v2932
    %3039 = vmatprep.subr.mxu0 %v2927
    %3040 = vmatpush2.msra.mxu0 %v2926
    %3041 = vmatprep.subr.mxu0 %v2921
    %3042 = vmatpush2.msra.mxu0 %v2920
    %3043 = vmatprep.subr.mxu0 %v2915
    %3044 = vmatpush2.msra.mxu0 %v2914
    %3045 = vmatprep.subr.mxu0 %v2909
    %3046 = vmatpush2.msra.mxu0 %v2908
    %3047 = vmatprep.subr.mxu0 %v2903
    %3048 = vmatpush2.msra.mxu0 %v2902
    %3049 = vmatprep.subr.mxu0 %v2897
    %3050 = vmatpush2.msra.mxu0 %v2896
    %3051 = vmatprep.subr.mxu0 %v2891
    %3052 = vmatpush2.msra.mxu0 %v2890
    %3053 = vmatprep.subr.mxu0 %v2885
    %3054 = vmatpush2.msra.mxu0 %v2884
    %3055 = vmatprep.subr.mxu0 %v2879
    %3056 = vmatpush2.msra.mxu0 %v2878
    %3057 = vmatprep.subr.mxu0 %v2873
    %3058 = vmatpush2.msra.mxu0 %v2872
    %3059 = vmatprep.subr.mxu0 %v2867
    %3060 = vmatpush2.msra.mxu0 %v2866
    %3061 = vmatprep.subr.mxu0 %v2861
    %3062 = vmatpush2.msra.mxu0 %v2860
    %3063 = vmatprep.mubr.f32.mxu0 %v2965
    %3064 = vmatmul.mubr.f32.gmra.mxu0 %v2961
    %v3065 = vpop.f32.mrf.mxu0
    %v3066 = vadd.f32 %v2972, %v3065
    %v3067 = vpop.f32.mrf.mxu0
    %v3068 = vadd.f32 %v2976, %v3067
    %3069 = vdwg.mxu0
    %3070 = vmatprep.subr.mxu0 %v2857
    %3071 = vmatpush1.msra.mxu0 %v2856
    %3072 = vmatprep.subr.mxu0 %v2851
    %3073 = vmatpush1.msra.mxu0 %v2850
    %3074 = vmatprep.subr.mxu0 %v2845
    %3075 = vmatpush1.msra.mxu0 %v2844
    %3076 = vmatprep.subr.mxu0 %v2839
    %3077 = vmatpush1.msra.mxu0 %v2838
    %3078 = vmatprep.subr.mxu0 %v2833
    %3079 = vmatpush1.msra.mxu0 %v2832
    %3080 = vmatprep.subr.mxu0 %v2827
    %3081 = vmatpush1.msra.mxu0 %v2826
    %3082 = vmatprep.subr.mxu0 %v2821
    %3083 = vmatpush1.msra.mxu0 %v2820
    %3084 = vmatprep.subr.mxu0 %v2815
    %3085 = vmatpush1.msra.mxu0 %v2814
    %3086 = vmatprep.subr.mxu0 %v2809
    %3087 = vmatpush1.msra.mxu0 %v2808
    %3088 = vmatprep.subr.mxu0 %v2803
    %3089 = vmatpush1.msra.mxu0 %v2802
    %3090 = vmatprep.subr.mxu0 %v2797
    %3091 = vmatpush1.msra.mxu0 %v2796
    %3092 = vmatprep.subr.mxu0 %v2791
    %3093 = vmatpush1.msra.mxu0 %v2790
    %3094 = vmatprep.subr.mxu0 %v2785
    %3095 = vmatpush1.msra.mxu0 %v2784
    %3096 = vmatprep.subr.mxu0 %v2779
    %3097 = vmatpush1.msra.mxu0 %v2778
    %3098 = vmatprep.subr.mxu0 %v2773
    %3099 = vmatpush1.msra.mxu0 %v2772
    %3100 = vmatprep.subr.mxu0 %v2767
    %3101 = vmatpush1.msra.mxu0 %v2766
    %3102 = vmatprep.subr.mxu0 %v2953
    %3103 = vmatpush2.msra.mxu0 %v2952
    %3104 = vmatprep.subr.mxu0 %v2947
    %3105 = vmatpush2.msra.mxu0 %v2946
    %3106 = vmatprep.subr.mxu0 %v2941
    %3107 = vmatpush2.msra.mxu0 %v2940
    %3108 = vmatprep.subr.mxu0 %v2935
    %3109 = vmatpush2.msra.mxu0 %v2934
    %3110 = vmatprep.subr.mxu0 %v2929
    %3111 = vmatpush2.msra.mxu0 %v2928
    %3112 = vmatprep.subr.mxu0 %v2923
    %3113 = vmatpush2.msra.mxu0 %v2922
    %3114 = vmatprep.subr.mxu0 %v2917
    %3115 = vmatpush2.msra.mxu0 %v2916
    %3116 = vmatprep.subr.mxu0 %v2911
    %3117 = vmatpush2.msra.mxu0 %v2910
    %3118 = vmatprep.subr.mxu0 %v2905
    %3119 = vmatpush2.msra.mxu0 %v2904
    %3120 = vmatprep.subr.mxu0 %v2899
    %3121 = vmatpush2.msra.mxu0 %v2898
    %3122 = vmatprep.subr.mxu0 %v2893
    %3123 = vmatpush2.msra.mxu0 %v2892
    %3124 = vmatprep.subr.mxu0 %v2887
    %3125 = vmatpush2.msra.mxu0 %v2886
    %3126 = vmatprep.subr.mxu0 %v2881
    %3127 = vmatpush2.msra.mxu0 %v2880
    %3128 = vmatprep.subr.mxu0 %v2875
    %3129 = vmatpush2.msra.mxu0 %v2874
    %3130 = vmatprep.subr.mxu0 %v2869
    %3131 = vmatpush2.msra.mxu0 %v2868
    %3132 = vmatprep.subr.mxu0 %v2863
    %3133 = vmatpush2.msra.mxu0 %v2862
    %3134 = vmatprep.mubr.f32.mxu0 %v2965
    %3135 = vmatmul.mubr.f32.gmra.mxu0 %v2961
    %v3136 = vpop.f32.mrf.mxu0
    %v3137 = vadd.f32 %v2980, %v3136
    %v3138 = vpop.f32.mrf.mxu0
    %v3139 = vadd.f32 %v2984, %v3138
    %3140 = vdwg.mxu0
    %3141 = vmatprep.subr.mxu0 %v2859
    %3142 = vmatpush1.msra.mxu0 %v2858
    %3143 = vmatprep.subr.mxu0 %v2853
    %3144 = vmatpush1.msra.mxu0 %v2852
    %3145 = vmatprep.subr.mxu0 %v2847
    %3146 = vmatpush1.msra.mxu0 %v2846
    %3147 = vmatprep.subr.mxu0 %v2841
    %3148 = vmatpush1.msra.mxu0 %v2840
    %3149 = vmatprep.subr.mxu0 %v2835
    %3150 = vmatpush1.msra.mxu0 %v2834
    %3151 = vmatprep.subr.mxu0 %v2829
    %3152 = vmatpush1.msra.mxu0 %v2828
    %3153 = vmatprep.subr.mxu0 %v2823
    %3154 = vmatpush1.msra.mxu0 %v2822
    %3155 = vmatprep.subr.mxu0 %v2817
    %3156 = vmatpush1.msra.mxu0 %v2816
    %3157 = vmatprep.subr.mxu0 %v2811
    %3158 = vmatpush1.msra.mxu0 %v2810
    %3159 = vmatprep.subr.mxu0 %v2805
    %3160 = vmatpush1.msra.mxu0 %v2804
    %3161 = vmatprep.subr.mxu0 %v2799
    %3162 = vmatpush1.msra.mxu0 %v2798
    %3163 = vmatprep.subr.mxu0 %v2793
    %3164 = vmatpush1.msra.mxu0 %v2792
    %3165 = vmatprep.subr.mxu0 %v2787
    %3166 = vmatpush1.msra.mxu0 %v2786
    %3167 = vmatprep.subr.mxu0 %v2781
    %3168 = vmatpush1.msra.mxu0 %v2780
    %3169 = vmatprep.subr.mxu0 %v2775
    %3170 = vmatpush1.msra.mxu0 %v2774
    %3171 = vmatprep.subr.mxu0 %v2769
    %3172 = vmatpush1.msra.mxu0 %v2768
    %3173 = vmatprep.subr.mxu0 %v2955
    %3174 = vmatpush2.msra.mxu0 %v2954
    %3175 = vmatprep.subr.mxu0 %v2949
    %3176 = vmatpush2.msra.mxu0 %v2948
    %3177 = vmatprep.subr.mxu0 %v2943
    %3178 = vmatpush2.msra.mxu0 %v2942
    %3179 = vmatprep.subr.mxu0 %v2937
    %3180 = vmatpush2.msra.mxu0 %v2936
    %3181 = vmatprep.subr.mxu0 %v2931
    %3182 = vmatpush2.msra.mxu0 %v2930
    %3183 = vmatprep.subr.mxu0 %v2925
    %3184 = vmatpush2.msra.mxu0 %v2924
    %3185 = vmatprep.subr.mxu0 %v2919
    %3186 = vmatpush2.msra.mxu0 %v2918
    %3187 = vmatprep.subr.mxu0 %v2913
    %3188 = vmatpush2.msra.mxu0 %v2912
    %3189 = vmatprep.subr.mxu0 %v2907
    %3190 = vmatpush2.msra.mxu0 %v2906
    %3191 = vmatprep.subr.mxu0 %v2901
    %3192 = vmatpush2.msra.mxu0 %v2900
    %3193 = vmatprep.subr.mxu0 %v2895
    %3194 = vmatpush2.msra.mxu0 %v2894
    %3195 = vmatprep.subr.mxu0 %v2889
    %3196 = vmatpush2.msra.mxu0 %v2888
    %3197 = vmatprep.subr.mxu0 %v2883
    %3198 = vmatpush2.msra.mxu0 %v2882
    %3199 = vmatprep.subr.mxu0 %v2877
    %3200 = vmatpush2.msra.mxu0 %v2876
    %3201 = vmatprep.subr.mxu0 %v2871
    %3202 = vmatpush2.msra.mxu0 %v2870
    %3203 = vmatprep.subr.mxu0 %v2865
    %3204 = vmatpush2.msra.mxu0 %v2864
    %3205 = vmatprep.mubr.f32.mxu0 %v2965
    %3206 = vmatmul.mubr.f32.gmra.mxu0 %v2961
    %v3207 = vpop.f32.mrf.mxu0
    %v3208 = vadd.f32 %v2988, %v3207
    %v3209 = vpop.f32.mrf.mxu0
    %v3210 = vadd.f32 %v2992, %v3209
    %3211 = vdwg.mxu0
    %s3212 = scalar_lea.vmem [#allocation3], 4
    %v3213 = vld [vmem:[%s3212] ss:$8 sm:$0xf]
    %v3214 = vld [vmem:[%s3212] ss:$8 sm:$0x30]
    %v3215 = vor.u32 %v3213, %v3214
    %v3218 = vcombine.low %v3066, %v3068
    %v3220 = vunpack.c.l.s4 1966171168
    %v3221 = vunpack.c.0.s8 %v3220
    %v3222 = vlaneseq
    %v3223 = vshrl.u32 %v3222, 7
    %v3224 = vsub.s32 %v3221, %v3223
    %v3225 = vrot.slane %v3218, %v3224
    %v3227 = vunpack.c.l.s4 1966171168
    %v3228 = vunpack.c.0.s8 %v3227
    %v3229 = vlaneseq
    %v3230 = vshrl.u32 %v3229, 7
    %v3231 = vsub.s32 %v3228, %v3230
    %v3232 = vrot.slane %v3225, %v3231
    %v3234 = vadd.f32 %v3215, %v3232
    %v3235 = vxor.u32 %v3234, 2147483648
    %v3236 = vmul.f32 %v3235, 1.442695
    %v3237 = vpow.pop %v3236
    %v3238 = vadd.f32 %v3237, 1.0
    %v3239 = vrcp.pop %v3238
    %v3240 = vmul.f32 1.0, %v3239
    %v3242 = vrot.slane %v3215, 2
    %v3246 = vcombine.low %v3137, %v3139
    %v3248 = vunpack.c.l.s4 1966171168
    %v3249 = vunpack.c.0.s8 %v3248
    %v3250 = vlaneseq
    %v3251 = vshrl.u32 %v3250, 7
    %v3252 = vsub.s32 %v3249, %v3251
    %v3253 = vrot.slane %v3246, %v3252
    %v3255 = vunpack.c.l.s4 1966171168
    %v3256 = vunpack.c.0.s8 %v3255
    %v3257 = vlaneseq
    %v3258 = vshrl.u32 %v3257, 7
    %v3259 = vsub.s32 %v3256, %v3258
    %v3260 = vrot.slane %v3253, %v3259
    %v3262 = vadd.f32 %v3242, %v3260
    %v3263 = vxor.u32 %v3262, 2147483648
    %v3264 = vmul.f32 %v3263, 1.442695
    %v3265 = vpow.pop %v3264
    %v3266 = vadd.f32 %v3265, 1.0
    %v3267 = vrcp.pop %v3266
    %v3268 = vmul.f32 1.0, %v3267
    %v3271 = vcombine.low %v3208, %v3210
    %v3273 = vunpack.c.l.s4 1966171168
    %v3274 = vunpack.c.0.s8 %v3273
    %v3275 = vlaneseq
    %v3276 = vshrl.u32 %v3275, 7
    %v3277 = vsub.s32 %v3274, %v3276
    %v3278 = vrot.slane %v3271, %v3277
    %v3280 = vunpack.c.l.s4 1966171168
    %v3281 = vunpack.c.0.s8 %v3280
    %v3282 = vlaneseq
    %v3283 = vshrl.u32 %v3282, 7
    %v3284 = vsub.s32 %v3281, %v3283
    %v3285 = vrot.slane %v3278, %v3284
    %v3287 = vmul.f32 %v3240, %v3285
    %v3288 = vrot.slane %v3215, 4
    %v3290 = vadd.f32 %v3288, %v3287
    %v3291 = vtanh.pop %v3290
    %v3292 = vsub.f32 1.0, %v3268
    %v3293 = vmul.f32 %v3292, %v3291
    %v3294 = vmul.f32 %v3268, %v2760
    %v3295 = vadd.f32 %v3293, %v3294
    %s3296 = scalar_lea.vmem [#allocation13], 4
    %3297 = vst.msk [vmem:[%s3296] ss:$8 sm:$0x3] %vm1156, %v3295
    %3298 = vst.msk [vmem:[%s3296] ss:$8 sm:$0x0] %vm1156, %v3295
    %v3299 = vld [vmem:[#allocation10] sm:$0xff]
    %v3300 = vld [vmem:[#allocation10 + $0x8] sm:$0xff]
    %v3301 = vld [vmem:[#allocation10 + $0x10] sm:$0xff]
    %v3302 = vld [vmem:[#allocation10 + $0x18] sm:$0xff]
    %v3303 = vld [vmem:[#allocation10 + $0x20] sm:$0xff]
    %v3304 = vld [vmem:[#allocation10 + $0x28] sm:$0xff]
    %v3305 = vld [vmem:[#allocation10 + $0x30] sm:$0xff]
    %v3306 = vld [vmem:[#allocation10 + $0x38] sm:$0xff]
    %v3307 = vld [vmem:[#allocation10 + $0x40] sm:$0xff]
    %v3308 = vld [vmem:[#allocation10 + $0x48] sm:$0xff]
    %v3309 = vld [vmem:[#allocation10 + $0x50] sm:$0xff]
    %v3310 = vld [vmem:[#allocation10 + $0x58] sm:$0xff]
    %v3311 = vld [vmem:[#allocation10 + $0x60] sm:$0xff]
    %v3312 = vld [vmem:[#allocation10 + $0x68] sm:$0xff]
    %v3313 = vld [vmem:[#allocation10 + $0x70] sm:$0xff]
    %v3314 = vld [vmem:[#allocation10 + $0x78] sm:$0xff]
    %v3315 = vld [vmem:[#allocation10 + $0x80] sm:$0xff]
    %v3316 = vld [vmem:[#allocation10 + $0x88] sm:$0xff]
    %v3317 = vld [vmem:[#allocation10 + $0x90] sm:$0xff]
    %v3318 = vld [vmem:[#allocation10 + $0x98] sm:$0xff]
    %v3319 = vld [vmem:[#allocation10 + $0xa0] sm:$0xff]
    %v3320 = vld [vmem:[#allocation10 + $0xa8] sm:$0xff]
    %v3321 = vld [vmem:[#allocation10 + $0xb0] sm:$0xff]
    %v3322 = vld [vmem:[#allocation10 + $0xb8] sm:$0xff]
    %v3323 = vld [vmem:[#allocation10 + $0xc0] sm:$0xff]
    %v3324 = vld [vmem:[#allocation10 + $0xc8] sm:$0xff]
    %v3325 = vld [vmem:[#allocation10 + $0xd0] sm:$0xff]
    %v3326 = vld [vmem:[#allocation10 + $0xd8] sm:$0xff]
    %v3327 = vld [vmem:[#allocation10 + $0xe0] sm:$0xff]
    %v3328 = vld [vmem:[#allocation10 + $0xe8] sm:$0xff]
    %v3329 = vld [vmem:[#allocation10 + $0xf0] sm:$0xff]
    %v3330 = vld [vmem:[#allocation10 + $0xf8] sm:$0xff]
    %v3331 = vld [vmem:[#allocation10 + $0x100] sm:$0xff]
    %v3332 = vld [vmem:[#allocation10 + $0x108] sm:$0xff]
    %v3333 = vld [vmem:[#allocation10 + $0x110] sm:$0xff]
    %v3334 = vld [vmem:[#allocation10 + $0x118] sm:$0xff]
    %v3335 = vld [vmem:[#allocation10 + $0x120] sm:$0xff]
    %v3336 = vld [vmem:[#allocation10 + $0x128] sm:$0xff]
    %v3337 = vld [vmem:[#allocation10 + $0x130] sm:$0xff]
    %v3338 = vld [vmem:[#allocation10 + $0x138] sm:$0xff]
    %v3339 = vld [vmem:[#allocation10 + $0x140] sm:$0xff]
    %v3340 = vld [vmem:[#allocation10 + $0x148] sm:$0xff]
    %v3341 = vld [vmem:[#allocation10 + $0x150] sm:$0xff]
    %v3342 = vld [vmem:[#allocation10 + $0x158] sm:$0xff]
    %v3343 = vld [vmem:[#allocation10 + $0x160] sm:$0xff]
    %v3344 = vld [vmem:[#allocation10 + $0x168] sm:$0xff]
    %v3345 = vld [vmem:[#allocation10 + $0x170] sm:$0xff]
    %v3346 = vld [vmem:[#allocation10 + $0x178] sm:$0xff]
    %v3347 = vld [vmem:[#allocation10 + $0x180] sm:$0xff]
    %v3348 = vld [vmem:[#allocation10 + $0x188] sm:$0xff]
    %v3349 = vld [vmem:[#allocation10 + $0x190] sm:$0xff]
    %v3350 = vld [vmem:[#allocation10 + $0x198] sm:$0xff]
    %v3351 = vld [vmem:[#allocation10 + $0x1a0] sm:$0xff]
    %v3352 = vld [vmem:[#allocation10 + $0x1a8] sm:$0xff]
    %v3353 = vld [vmem:[#allocation10 + $0x1b0] sm:$0xff]
    %v3354 = vld [vmem:[#allocation10 + $0x1b8] sm:$0xff]
    %v3355 = vld [vmem:[#allocation10 + $0x1c0] sm:$0xff]
    %v3356 = vld [vmem:[#allocation10 + $0x1c8] sm:$0xff]
    %v3357 = vld [vmem:[#allocation10 + $0x1d0] sm:$0xff]
    %v3358 = vld [vmem:[#allocation10 + $0x1d8] sm:$0xff]
    %v3359 = vld [vmem:[#allocation10 + $0x1e0] sm:$0xff]
    %v3360 = vld [vmem:[#allocation10 + $0x1e8] sm:$0xff]
    %v3361 = vld [vmem:[#allocation10 + $0x1f0] sm:$0xff]
    %v3362 = vld [vmem:[#allocation10 + $0x1f8] sm:$0xff]
    %v3363 = vld [vmem:[#allocation10 + $0x200] sm:$0xff]
    %v3364 = vld [vmem:[#allocation10 + $0x208] sm:$0xff]
    %v3365 = vld [vmem:[#allocation10 + $0x210] sm:$0xff]
    %v3366 = vld [vmem:[#allocation10 + $0x218] sm:$0xff]
    %v3367 = vld [vmem:[#allocation10 + $0x220] sm:$0xff]
    %v3368 = vld [vmem:[#allocation10 + $0x228] sm:$0xff]
    %v3369 = vld [vmem:[#allocation10 + $0x230] sm:$0xff]
    %v3370 = vld [vmem:[#allocation10 + $0x238] sm:$0xff]
    %v3371 = vld [vmem:[#allocation10 + $0x240] sm:$0xff]
    %v3372 = vld [vmem:[#allocation10 + $0x248] sm:$0xff]
    %v3373 = vld [vmem:[#allocation10 + $0x250] sm:$0xff]
    %v3374 = vld [vmem:[#allocation10 + $0x258] sm:$0xff]
    %v3375 = vld [vmem:[#allocation10 + $0x260] sm:$0xff]
    %v3376 = vld [vmem:[#allocation10 + $0x268] sm:$0xff]
    %v3377 = vld [vmem:[#allocation10 + $0x270] sm:$0xff]
    %v3378 = vld [vmem:[#allocation10 + $0x278] sm:$0xff]
    %v3379 = vld [vmem:[#allocation10 + $0x280] sm:$0xff]
    %v3380 = vld [vmem:[#allocation10 + $0x288] sm:$0xff]
    %v3381 = vld [vmem:[#allocation10 + $0x290] sm:$0xff]
    %v3382 = vld [vmem:[#allocation10 + $0x298] sm:$0xff]
    %v3383 = vld [vmem:[#allocation10 + $0x2a0] sm:$0xff]
    %v3384 = vld [vmem:[#allocation10 + $0x2a8] sm:$0xff]
    %v3385 = vld [vmem:[#allocation10 + $0x2b0] sm:$0xff]
    %v3386 = vld [vmem:[#allocation10 + $0x2b8] sm:$0xff]
    %v3387 = vld [vmem:[#allocation10 + $0x2c0] sm:$0xff]
    %v3388 = vld [vmem:[#allocation10 + $0x2c8] sm:$0xff]
    %v3389 = vld [vmem:[#allocation10 + $0x2d0] sm:$0xff]
    %v3390 = vld [vmem:[#allocation10 + $0x2d8] sm:$0xff]
    %v3391 = vld [vmem:[#allocation10 + $0x2e0] sm:$0xff]
    %v3392 = vld [vmem:[#allocation10 + $0x2e8] sm:$0xff]
    %v3393 = vld [vmem:[#allocation10 + $0x2f0] sm:$0xff]
    %v3394 = vld [vmem:[#allocation10 + $0x2f8] sm:$0xff]
    %v3395 = vld [vmem:[#allocation10 + $0x300] sm:$0xff]
    %v3396 = vld [vmem:[#allocation10 + $0x308] sm:$0xff]
    %v3397 = vld [vmem:[#allocation10 + $0x310] sm:$0xff]
    %v3398 = vld [vmem:[#allocation10 + $0x318] sm:$0xff]
    %v3399 = vld [vmem:[#allocation10 + $0x320] sm:$0xff]
    %v3400 = vld [vmem:[#allocation10 + $0x328] sm:$0xff]
    %v3401 = vld [vmem:[#allocation10 + $0x330] sm:$0xff]
    %v3402 = vld [vmem:[#allocation10 + $0x338] sm:$0xff]
    %v3403 = vld [vmem:[#allocation10 + $0x340] sm:$0xff]
    %v3404 = vld [vmem:[#allocation10 + $0x348] sm:$0xff]
    %v3405 = vld [vmem:[#allocation10 + $0x350] sm:$0xff]
    %v3406 = vld [vmem:[#allocation10 + $0x358] sm:$0xff]
    %v3407 = vld [vmem:[#allocation10 + $0x360] sm:$0xff]
    %v3408 = vld [vmem:[#allocation10 + $0x368] sm:$0xff]
    %v3409 = vld [vmem:[#allocation10 + $0x370] sm:$0xff]
    %v3410 = vld [vmem:[#allocation10 + $0x378] sm:$0xff]
    %v3411 = vld [vmem:[#allocation10 + $0x380] sm:$0xff]
    %v3412 = vld [vmem:[#allocation10 + $0x388] sm:$0xff]
    %v3413 = vld [vmem:[#allocation10 + $0x390] sm:$0xff]
    %v3414 = vld [vmem:[#allocation10 + $0x398] sm:$0xff]
    %v3415 = vld [vmem:[#allocation10 + $0x3a0] sm:$0xff]
    %v3416 = vld [vmem:[#allocation10 + $0x3a8] sm:$0xff]
    %v3417 = vld [vmem:[#allocation10 + $0x3b0] sm:$0xff]
    %v3418 = vld [vmem:[#allocation10 + $0x3b8] sm:$0xff]
    %v3419 = vld [vmem:[#allocation10 + $0x3c0] sm:$0xff]
    %v3420 = vld [vmem:[#allocation10 + $0x3c8] sm:$0xff]
    %v3421 = vld [vmem:[#allocation10 + $0x3d0] sm:$0xff]
    %v3422 = vld [vmem:[#allocation10 + $0x3d8] sm:$0xff]
    %v3423 = vld [vmem:[#allocation10 + $0x3e0] sm:$0xff]
    %v3424 = vld [vmem:[#allocation10 + $0x3e8] sm:$0xff]
    %v3425 = vld [vmem:[#allocation10 + $0x3f0] sm:$0xff]
    %v3426 = vld [vmem:[#allocation10 + $0x3f8] sm:$0xff]
    %v3427 = vld [vmem:[#allocation10 + $0x400] sm:$0xff]
    %v3428 = vld [vmem:[#allocation10 + $0x408] sm:$0xff]
    %v3429 = vld [vmem:[#allocation10 + $0x410] sm:$0xff]
    %v3430 = vld [vmem:[#allocation10 + $0x418] sm:$0xff]
    %v3431 = vld [vmem:[#allocation10 + $0x420] sm:$0xff]
    %v3432 = vld [vmem:[#allocation10 + $0x428] sm:$0xff]
    %v3433 = vld [vmem:[#allocation10 + $0x430] sm:$0xff]
    %v3434 = vld [vmem:[#allocation10 + $0x438] sm:$0xff]
    %v3435 = vld [vmem:[#allocation10 + $0x440] sm:$0xff]
    %v3436 = vld [vmem:[#allocation10 + $0x448] sm:$0xff]
    %v3437 = vld [vmem:[#allocation10 + $0x450] sm:$0xff]
    %v3438 = vld [vmem:[#allocation10 + $0x458] sm:$0xff]
    %v3439 = vld [vmem:[#allocation10 + $0x460] sm:$0xff]
    %v3440 = vld [vmem:[#allocation10 + $0x468] sm:$0xff]
    %v3441 = vld [vmem:[#allocation10 + $0x470] sm:$0xff]
    %v3442 = vld [vmem:[#allocation10 + $0x478] sm:$0xff]
    %v3443 = vld [vmem:[#allocation10 + $0x480] sm:$0xff]
    %v3444 = vld [vmem:[#allocation10 + $0x488] sm:$0xff]
    %v3445 = vld [vmem:[#allocation10 + $0x490] sm:$0xff]
    %v3446 = vld [vmem:[#allocation10 + $0x498] sm:$0xff]
    %v3447 = vld [vmem:[#allocation10 + $0x4a0] sm:$0xff]
    %v3448 = vld [vmem:[#allocation10 + $0x4a8] sm:$0xff]
    %v3449 = vld [vmem:[#allocation10 + $0x4b0] sm:$0xff]
    %v3450 = vld [vmem:[#allocation10 + $0x4b8] sm:$0xff]
    %v3451 = vld [vmem:[#allocation10 + $0x4c0] sm:$0xff]
    %v3452 = vld [vmem:[#allocation10 + $0x4c8] sm:$0xff]
    %v3453 = vld [vmem:[#allocation10 + $0x4d0] sm:$0xff]
    %v3454 = vld [vmem:[#allocation10 + $0x4d8] sm:$0xff]
    %v3455 = vld [vmem:[#allocation10 + $0x4e0] sm:$0xff]
    %v3456 = vld [vmem:[#allocation10 + $0x4e8] sm:$0xff]
    %v3457 = vld [vmem:[#allocation10 + $0x4f0] sm:$0xff]
    %v3458 = vld [vmem:[#allocation10 + $0x4f8] sm:$0xff]
    %v3459 = vld [vmem:[#allocation10 + $0x500] sm:$0xff]
    %v3460 = vld [vmem:[#allocation10 + $0x508] sm:$0xff]
    %v3461 = vld [vmem:[#allocation10 + $0x510] sm:$0xff]
    %v3462 = vld [vmem:[#allocation10 + $0x518] sm:$0xff]
    %v3463 = vld [vmem:[#allocation10 + $0x520] sm:$0xff]
    %v3464 = vld [vmem:[#allocation10 + $0x528] sm:$0xff]
    %v3465 = vld [vmem:[#allocation10 + $0x530] sm:$0xff]
    %v3466 = vld [vmem:[#allocation10 + $0x538] sm:$0xff]
    %v3467 = vld [vmem:[#allocation10 + $0x540] sm:$0xff]
    %v3468 = vld [vmem:[#allocation10 + $0x548] sm:$0xff]
    %v3469 = vld [vmem:[#allocation10 + $0x550] sm:$0xff]
    %v3470 = vld [vmem:[#allocation10 + $0x558] sm:$0xff]
    %v3471 = vld [vmem:[#allocation10 + $0x560] sm:$0xff]
    %v3472 = vld [vmem:[#allocation10 + $0x568] sm:$0xff]
    %v3473 = vld [vmem:[#allocation10 + $0x570] sm:$0xff]
    %v3474 = vld [vmem:[#allocation10 + $0x578] sm:$0xff]
    %v3475 = vld [vmem:[#allocation10 + $0x580] sm:$0xff]
    %v3476 = vld [vmem:[#allocation10 + $0x588] sm:$0xff]
    %v3477 = vld [vmem:[#allocation10 + $0x590] sm:$0xff]
    %v3478 = vld [vmem:[#allocation10 + $0x598] sm:$0xff]
    %v3479 = vld [vmem:[#allocation10 + $0x5a0] sm:$0xff]
    %v3480 = vld [vmem:[#allocation10 + $0x5a8] sm:$0xff]
    %v3481 = vld [vmem:[#allocation10 + $0x5b0] sm:$0xff]
    %v3482 = vld [vmem:[#allocation10 + $0x5b8] sm:$0xff]
    %v3483 = vld [vmem:[#allocation10 + $0x5c0] sm:$0xff]
    %v3484 = vld [vmem:[#allocation10 + $0x5c8] sm:$0xff]
    %v3485 = vld [vmem:[#allocation10 + $0x5d0] sm:$0xff]
    %v3486 = vld [vmem:[#allocation10 + $0x5d8] sm:$0xff]
    %v3487 = vld [vmem:[#allocation10 + $0x5e0] sm:$0xff]
    %v3488 = vld [vmem:[#allocation10 + $0x5e8] sm:$0xff]
    %v3489 = vld [vmem:[#allocation10 + $0x5f0] sm:$0xff]
    %v3490 = vld [vmem:[#allocation10 + $0x5f8] sm:$0xff]
    %v3491 = vld [vmem:[#allocation12] sm:$0x3f]
    %v3493 = vlaneseq
    %v3494 = vshrl.u32 %v3493, 7
    %v3495 = vsub.s32 0, %v3494
    %v3496 = vrot.slane %v3295, %v3495
    %v3497 = vlaneseq
    %v3498 = vshrl.u32 %v3497, 7
    %v3499 = vsub.s32 1, %v3498
    %v3500 = vrot.slane %v3295, %v3499
    %v3504 = vlaneseq
    %v3505 = vshrl.u32 %v3504, 7
    %v3506 = vsub.s32 0, %v3505
    %v3507 = vrot.slane %v3491, %v3506
    %v3508 = vlaneseq
    %v3509 = vshrl.u32 %v3508, 7
    %v3510 = vsub.s32 1, %v3509
    %v3511 = vrot.slane %v3491, %v3510
    %v3512 = vlaneseq
    %v3513 = vshrl.u32 %v3512, 7
    %v3514 = vsub.s32 2, %v3513
    %v3515 = vrot.slane %v3491, %v3514
    %v3516 = vlaneseq
    %v3517 = vshrl.u32 %v3516, 7
    %v3518 = vsub.s32 3, %v3517
    %v3519 = vrot.slane %v3491, %v3518
    %v3520 = vlaneseq
    %v3521 = vshrl.u32 %v3520, 7
    %v3522 = vsub.s32 4, %v3521
    %v3523 = vrot.slane %v3491, %v3522
    %v3524 = vlaneseq
    %v3525 = vshrl.u32 %v3524, 7
    %v3526 = vsub.s32 5, %v3525
    %v3527 = vrot.slane %v3491, %v3526
    %3534 = vmatprep.subr.mxu0 %v3390
    %3535 = vmatpush1.msra.mxu0 %v3389
    %3536 = vmatprep.subr.mxu0 %v3384
    %3537 = vmatpush1.msra.mxu0 %v3383
    %3538 = vmatprep.subr.mxu0 %v3378
    %3539 = vmatpush1.msra.mxu0 %v3377
    %3540 = vmatprep.subr.mxu0 %v3372
    %3541 = vmatpush1.msra.mxu0 %v3371
    %3542 = vmatprep.subr.mxu0 %v3366
    %3543 = vmatpush1.msra.mxu0 %v3365
    %3544 = vmatprep.subr.mxu0 %v3360
    %3545 = vmatpush1.msra.mxu0 %v3359
    %3546 = vmatprep.subr.mxu0 %v3354
    %3547 = vmatpush1.msra.mxu0 %v3353
    %3548 = vmatprep.subr.mxu0 %v3348
    %3549 = vmatpush1.msra.mxu0 %v3347
    %3550 = vmatprep.subr.mxu0 %v3342
    %3551 = vmatpush1.msra.mxu0 %v3341
    %3552 = vmatprep.subr.mxu0 %v3336
    %3553 = vmatpush1.msra.mxu0 %v3335
    %3554 = vmatprep.subr.mxu0 %v3330
    %3555 = vmatpush1.msra.mxu0 %v3329
    %3556 = vmatprep.subr.mxu0 %v3324
    %3557 = vmatpush1.msra.mxu0 %v3323
    %3558 = vmatprep.subr.mxu0 %v3318
    %3559 = vmatpush1.msra.mxu0 %v3317
    %3560 = vmatprep.subr.mxu0 %v3312
    %3561 = vmatpush1.msra.mxu0 %v3311
    %3562 = vmatprep.subr.mxu0 %v3306
    %3563 = vmatpush1.msra.mxu0 %v3305
    %3564 = vmatprep.subr.mxu0 %v3300
    %3565 = vmatpush1.msra.mxu0 %v3299
    %3566 = vmatprep.subr.mxu0 %v3486
    %3567 = vmatpush2.msra.mxu0 %v3485
    %3568 = vmatprep.subr.mxu0 %v3480
    %3569 = vmatpush2.msra.mxu0 %v3479
    %3570 = vmatprep.subr.mxu0 %v3474
    %3571 = vmatpush2.msra.mxu0 %v3473
    %3572 = vmatprep.subr.mxu0 %v3468
    %3573 = vmatpush2.msra.mxu0 %v3467
    %3574 = vmatprep.subr.mxu0 %v3462
    %3575 = vmatpush2.msra.mxu0 %v3461
    %3576 = vmatprep.subr.mxu0 %v3456
    %3577 = vmatpush2.msra.mxu0 %v3455
    %3578 = vmatprep.subr.mxu0 %v3450
    %3579 = vmatpush2.msra.mxu0 %v3449
    %3580 = vmatprep.subr.mxu0 %v3444
    %3581 = vmatpush2.msra.mxu0 %v3443
    %3582 = vmatprep.subr.mxu0 %v3438
    %3583 = vmatpush2.msra.mxu0 %v3437
    %3584 = vmatprep.subr.mxu0 %v3432
    %3585 = vmatpush2.msra.mxu0 %v3431
    %3586 = vmatprep.subr.mxu0 %v3426
    %3587 = vmatpush2.msra.mxu0 %v3425
    %3588 = vmatprep.subr.mxu0 %v3420
    %3589 = vmatpush2.msra.mxu0 %v3419
    %3590 = vmatprep.subr.mxu0 %v3414
    %3591 = vmatpush2.msra.mxu0 %v3413
    %3592 = vmatprep.subr.mxu0 %v3408
    %3593 = vmatpush2.msra.mxu0 %v3407
    %3594 = vmatprep.subr.mxu0 %v3402
    %3595 = vmatpush2.msra.mxu0 %v3401
    %3596 = vmatprep.subr.mxu0 %v3396
    %3597 = vmatpush2.msra.mxu0 %v3395
    %3598 = vmatprep.mubr.f32.mxu0 %v3500
    %3599 = vmatmul.mubr.f32.gmra.mxu0 %v3496
    %v3600 = vpop.f32.mrf.mxu0
    %v3601 = vadd.f32 %v3507, %v3600
    %v3602 = vpop.f32.mrf.mxu0
    %v3603 = vadd.f32 %v3511, %v3602
    %3604 = vdwg.mxu0
    %3605 = vmatprep.subr.mxu0 %v3392
    %3606 = vmatpush1.msra.mxu0 %v3391
    %3607 = vmatprep.subr.mxu0 %v3386
    %3608 = vmatpush1.msra.mxu0 %v3385
    %3609 = vmatprep.subr.mxu0 %v3380
    %3610 = vmatpush1.msra.mxu0 %v3379
    %3611 = vmatprep.subr.mxu0 %v3374
    %3612 = vmatpush1.msra.mxu0 %v3373
    %3613 = vmatprep.subr.mxu0 %v3368
    %3614 = vmatpush1.msra.mxu0 %v3367
    %3615 = vmatprep.subr.mxu0 %v3362
    %3616 = vmatpush1.msra.mxu0 %v3361
    %3617 = vmatprep.subr.mxu0 %v3356
    %3618 = vmatpush1.msra.mxu0 %v3355
    %3619 = vmatprep.subr.mxu0 %v3350
    %3620 = vmatpush1.msra.mxu0 %v3349
    %3621 = vmatprep.subr.mxu0 %v3344
    %3622 = vmatpush1.msra.mxu0 %v3343
    %3623 = vmatprep.subr.mxu0 %v3338
    %3624 = vmatpush1.msra.mxu0 %v3337
    %3625 = vmatprep.subr.mxu0 %v3332
    %3626 = vmatpush1.msra.mxu0 %v3331
    %3627 = vmatprep.subr.mxu0 %v3326
    %3628 = vmatpush1.msra.mxu0 %v3325
    %3629 = vmatprep.subr.mxu0 %v3320
    %3630 = vmatpush1.msra.mxu0 %v3319
    %3631 = vmatprep.subr.mxu0 %v3314
    %3632 = vmatpush1.msra.mxu0 %v3313
    %3633 = vmatprep.subr.mxu0 %v3308
    %3634 = vmatpush1.msra.mxu0 %v3307
    %3635 = vmatprep.subr.mxu0 %v3302
    %3636 = vmatpush1.msra.mxu0 %v3301
    %3637 = vmatprep.subr.mxu0 %v3488
    %3638 = vmatpush2.msra.mxu0 %v3487
    %3639 = vmatprep.subr.mxu0 %v3482
    %3640 = vmatpush2.msra.mxu0 %v3481
    %3641 = vmatprep.subr.mxu0 %v3476
    %3642 = vmatpush2.msra.mxu0 %v3475
    %3643 = vmatprep.subr.mxu0 %v3470
    %3644 = vmatpush2.msra.mxu0 %v3469
    %3645 = vmatprep.subr.mxu0 %v3464
    %3646 = vmatpush2.msra.mxu0 %v3463
    %3647 = vmatprep.subr.mxu0 %v3458
    %3648 = vmatpush2.msra.mxu0 %v3457
    %3649 = vmatprep.subr.mxu0 %v3452
    %3650 = vmatpush2.msra.mxu0 %v3451
    %3651 = vmatprep.subr.mxu0 %v3446
    %3652 = vmatpush2.msra.mxu0 %v3445
    %3653 = vmatprep.subr.mxu0 %v3440
    %3654 = vmatpush2.msra.mxu0 %v3439
    %3655 = vmatprep.subr.mxu0 %v3434
    %3656 = vmatpush2.msra.mxu0 %v3433
    %3657 = vmatprep.subr.mxu0 %v3428
    %3658 = vmatpush2.msra.mxu0 %v3427
    %3659 = vmatprep.subr.mxu0 %v3422
    %3660 = vmatpush2.msra.mxu0 %v3421
    %3661 = vmatprep.subr.mxu0 %v3416
    %3662 = vmatpush2.msra.mxu0 %v3415
    %3663 = vmatprep.subr.mxu0 %v3410
    %3664 = vmatpush2.msra.mxu0 %v3409
    %3665 = vmatprep.subr.mxu0 %v3404
    %3666 = vmatpush2.msra.mxu0 %v3403
    %3667 = vmatprep.subr.mxu0 %v3398
    %3668 = vmatpush2.msra.mxu0 %v3397
    %3669 = vmatprep.mubr.f32.mxu0 %v3500
    %3670 = vmatmul.mubr.f32.gmra.mxu0 %v3496
    %v3671 = vpop.f32.mrf.mxu0
    %v3672 = vadd.f32 %v3515, %v3671
    %v3673 = vpop.f32.mrf.mxu0
    %v3674 = vadd.f32 %v3519, %v3673
    %3675 = vdwg.mxu0
    %3676 = vmatprep.subr.mxu0 %v3394
    %3677 = vmatpush1.msra.mxu0 %v3393
    %3678 = vmatprep.subr.mxu0 %v3388
    %3679 = vmatpush1.msra.mxu0 %v3387
    %3680 = vmatprep.subr.mxu0 %v3382
    %3681 = vmatpush1.msra.mxu0 %v3381
    %3682 = vmatprep.subr.mxu0 %v3376
    %3683 = vmatpush1.msra.mxu0 %v3375
    %3684 = vmatprep.subr.mxu0 %v3370
    %3685 = vmatpush1.msra.mxu0 %v3369
    %3686 = vmatprep.subr.mxu0 %v3364
    %3687 = vmatpush1.msra.mxu0 %v3363
    %3688 = vmatprep.subr.mxu0 %v3358
    %3689 = vmatpush1.msra.mxu0 %v3357
    %3690 = vmatprep.subr.mxu0 %v3352
    %3691 = vmatpush1.msra.mxu0 %v3351
    %3692 = vmatprep.subr.mxu0 %v3346
    %3693 = vmatpush1.msra.mxu0 %v3345
    %3694 = vmatprep.subr.mxu0 %v3340
    %3695 = vmatpush1.msra.mxu0 %v3339
    %3696 = vmatprep.subr.mxu0 %v3334
    %3697 = vmatpush1.msra.mxu0 %v3333
    %3698 = vmatprep.subr.mxu0 %v3328
    %3699 = vmatpush1.msra.mxu0 %v3327
    %3700 = vmatprep.subr.mxu0 %v3322
    %3701 = vmatpush1.msra.mxu0 %v3321
    %3702 = vmatprep.subr.mxu0 %v3316
    %3703 = vmatpush1.msra.mxu0 %v3315
    %3704 = vmatprep.subr.mxu0 %v3310
    %3705 = vmatpush1.msra.mxu0 %v3309
    %3706 = vmatprep.subr.mxu0 %v3304
    %3707 = vmatpush1.msra.mxu0 %v3303
    %3708 = vmatprep.subr.mxu0 %v3490
    %3709 = vmatpush2.msra.mxu0 %v3489
    %3710 = vmatprep.subr.mxu0 %v3484
    %3711 = vmatpush2.msra.mxu0 %v3483
    %3712 = vmatprep.subr.mxu0 %v3478
    %3713 = vmatpush2.msra.mxu0 %v3477
    %3714 = vmatprep.subr.mxu0 %v3472
    %3715 = vmatpush2.msra.mxu0 %v3471
    %3716 = vmatprep.subr.mxu0 %v3466
    %3717 = vmatpush2.msra.mxu0 %v3465
    %3718 = vmatprep.subr.mxu0 %v3460
    %3719 = vmatpush2.msra.mxu0 %v3459
    %3720 = vmatprep.subr.mxu0 %v3454
    %3721 = vmatpush2.msra.mxu0 %v3453
    %3722 = vmatprep.subr.mxu0 %v3448
    %3723 = vmatpush2.msra.mxu0 %v3447
    %3724 = vmatprep.subr.mxu0 %v3442
    %3725 = vmatpush2.msra.mxu0 %v3441
    %3726 = vmatprep.subr.mxu0 %v3436
    %3727 = vmatpush2.msra.mxu0 %v3435
    %3728 = vmatprep.subr.mxu0 %v3430
    %3729 = vmatpush2.msra.mxu0 %v3429
    %3730 = vmatprep.subr.mxu0 %v3424
    %3731 = vmatpush2.msra.mxu0 %v3423
    %3732 = vmatprep.subr.mxu0 %v3418
    %3733 = vmatpush2.msra.mxu0 %v3417
    %3734 = vmatprep.subr.mxu0 %v3412
    %3735 = vmatpush2.msra.mxu0 %v3411
    %3736 = vmatprep.subr.mxu0 %v3406
    %3737 = vmatpush2.msra.mxu0 %v3405
    %3738 = vmatprep.subr.mxu0 %v3400
    %3739 = vmatpush2.msra.mxu0 %v3399
    %3740 = vmatprep.mubr.f32.mxu0 %v3500
    %3741 = vmatmul.mubr.f32.gmra.mxu0 %v3496
    %v3742 = vpop.f32.mrf.mxu0
    %v3743 = vadd.f32 %v3523, %v3742
    %v3744 = vpop.f32.mrf.mxu0
    %v3745 = vadd.f32 %v3527, %v3744
    %3746 = vdwg.mxu0
    %s3747 = scalar_lea.vmem [#allocation3], 5
    %v3748 = vld [vmem:[%s3747] ss:$8 sm:$0xf]
    %v3749 = vld [vmem:[%s3747] ss:$8 sm:$0x30]
    %v3750 = vor.u32 %v3748, %v3749
    %v3753 = vcombine.low %v3601, %v3603
    %v3755 = vunpack.c.l.s4 1966171168
    %v3756 = vunpack.c.0.s8 %v3755
    %v3757 = vlaneseq
    %v3758 = vshrl.u32 %v3757, 7
    %v3759 = vsub.s32 %v3756, %v3758
    %v3760 = vrot.slane %v3753, %v3759
    %v3762 = vunpack.c.l.s4 1966171168
    %v3763 = vunpack.c.0.s8 %v3762
    %v3764 = vlaneseq
    %v3765 = vshrl.u32 %v3764, 7
    %v3766 = vsub.s32 %v3763, %v3765
    %v3767 = vrot.slane %v3760, %v3766
    %v3769 = vadd.f32 %v3750, %v3767
    %v3770 = vxor.u32 %v3769, 2147483648
    %v3771 = vmul.f32 %v3770, 1.442695
    %v3772 = vpow.pop %v3771
    %v3773 = vadd.f32 %v3772, 1.0
    %v3774 = vrcp.pop %v3773
    %v3775 = vmul.f32 1.0, %v3774
    %v3777 = vrot.slane %v3750, 2
    %v3781 = vcombine.low %v3672, %v3674
    %v3783 = vunpack.c.l.s4 1966171168
    %v3784 = vunpack.c.0.s8 %v3783
    %v3785 = vlaneseq
    %v3786 = vshrl.u32 %v3785, 7
    %v3787 = vsub.s32 %v3784, %v3786
    %v3788 = vrot.slane %v3781, %v3787
    %v3790 = vunpack.c.l.s4 1966171168
    %v3791 = vunpack.c.0.s8 %v3790
    %v3792 = vlaneseq
    %v3793 = vshrl.u32 %v3792, 7
    %v3794 = vsub.s32 %v3791, %v3793
    %v3795 = vrot.slane %v3788, %v3794
    %v3797 = vadd.f32 %v3777, %v3795
    %v3798 = vxor.u32 %v3797, 2147483648
    %v3799 = vmul.f32 %v3798, 1.442695
    %v3800 = vpow.pop %v3799
    %v3801 = vadd.f32 %v3800, 1.0
    %v3802 = vrcp.pop %v3801
    %v3803 = vmul.f32 1.0, %v3802
    %v3806 = vcombine.low %v3743, %v3745
    %v3808 = vunpack.c.l.s4 1966171168
    %v3809 = vunpack.c.0.s8 %v3808
    %v3810 = vlaneseq
    %v3811 = vshrl.u32 %v3810, 7
    %v3812 = vsub.s32 %v3809, %v3811
    %v3813 = vrot.slane %v3806, %v3812
    %v3815 = vunpack.c.l.s4 1966171168
    %v3816 = vunpack.c.0.s8 %v3815
    %v3817 = vlaneseq
    %v3818 = vshrl.u32 %v3817, 7
    %v3819 = vsub.s32 %v3816, %v3818
    %v3820 = vrot.slane %v3813, %v3819
    %v3822 = vmul.f32 %v3775, %v3820
    %v3823 = vrot.slane %v3750, 4
    %v3825 = vadd.f32 %v3823, %v3822
    %v3826 = vtanh.pop %v3825
    %v3827 = vsub.f32 1.0, %v3803
    %v3828 = vmul.f32 %v3827, %v3826
    %v3829 = vmul.f32 %v3803, %v3295
    %v3830 = vadd.f32 %v3828, %v3829
    %s3831 = scalar_lea.vmem [#allocation13], 5
    %3832 = vst.msk [vmem:[%s3831] ss:$8 sm:$0x3] %vm1156, %v3830
    %3833 = vst.msk [vmem:[%s3831] ss:$8 sm:$0x0] %vm1156, %v3830
    // Predicated region
    $region42: #{tpu_custom_call.1} parent=1 // pred_check
      _
    $region43: #{tpu_custom_call.1} parent=1 // pred_check_branch
      %3835 = sbr.rel (0) target = $region45
    $region44: #{tpu_custom_call.1} parent=1 // pred_region
      %s3837 = ssub.s32 256, 256
      %3838 = vsyncadd [#allocation7], %s3837
      %s3840 = sshll.u32 [#allocation13], 4
      %s3841 = int_to_ptr.vmem [resolvable:$true] %s3840
      %3843 = dma.vmem_to_hbm [thread:$0]  %s3841, 256, %s7, [#allocation7]
    $region45: #{tpu_custom_call.1} parent=1 // pred_fallthru
      _
    // Predicated region
    $region46: #{tpu_custom_call.1} parent=1 // pred_check
      _
    $region47: #{tpu_custom_call.1} parent=1 // pred_check_branch
      %3845 = sbr.rel (0) target = $region49
    $region48: #{tpu_custom_call.1} parent=1 // pred_region
      %3846 = dma.done [#allocation7], 256
    $region49: #{tpu_custom_call.1} parent=1 // pred_fallthru
      _
    %3847 = vsyncpa [#allocation6], 1
    %3848 = vsyncpa [#allocation11], 1
    %3849 = vsyncpa [#allocation7], 1
    %3850 = vsyncpa [#allocation8], 1
  %3851 = vsyncmov [#allocation4]
  %s3852 = vpop.sfrf %3851
  %p3853 = scmp.eq.s32.totalorder %s3852, 0
  %p3854 = pneg %p3853
  %3856 = shalt.err (%p3854)
  %s3857 = scalar_lea.sflag [#allocation4], 1
  %3858 = vsyncmov %s3857
  %s3859 = vpop.sfrf %3858
  %p3860 = scmp.eq.s32.totalorder %s3859, 0
  %p3861 = pneg %p3860
  %3863 = shalt.err (%p3861)
  %s3864 = scalar_lea.sflag [#allocation4], 2
  %3865 = vsyncmov %s3864
  %s3866 = vpop.sfrf %3865
  %p3867 = scmp.eq.s32.totalorder %s3866, 0
  %p3868 = pneg %p3867
  %3870 = shalt.err (%p3868)
  %s3871 = scalar_lea.sflag [#allocation4], 3
  %3872 = vsyncmov %s3871
  %s3873 = vpop.sfrf %3872
  %p3874 = scmp.eq.s32.totalorder %s3873, 0
  %p3875 = pneg %p3874
  %3877 = shalt.err (%p3875)
  %s3878 = scalar_lea.sflag [#allocation4], 4
  %3879 = vsyncmov %s3878
  %s3880 = vpop.sfrf %3879
  %p3881 = scmp.eq.s32.totalorder %s3880, 0
  %p3882 = pneg %p3881
  %3884 = shalt.err (%p3882)
  %s3885 = scalar_lea.sflag [#allocation4], 5
  %3886 = vsyncmov %s3885
  %s3887 = vpop.sfrf %3886
  %p3888 = scmp.eq.s32.totalorder %s3887, 0
  %p3889 = pneg %p3888
  %3891 = shalt.err (%p3889)
  %s3892 = scalar_lea.sflag [#allocation4], 6
  %3893 = vsyncmov %s3892
  %s3894 = vpop.sfrf %3893
  %p3895 = scmp.eq.s32.totalorder %s3894, 0
  %p3896 = pneg %p3895
  %3898 = shalt.err (%p3896)
  %s3899 = scalar_lea.sflag [#allocation4], 7
  %3900 = vsyncmov %s3899
  %s3901 = vpop.sfrf %3900
  %p3902 = scmp.eq.s32.totalorder %s3901, 0
  %p3903 = pneg %p3902
  %3905 = shalt.err (%p3903)

</llo_original>
